<compile_context>
chip_gen: v7x
topology: tpu7x:2x2x1
jax: 0.10.0
libtpu: 0.0.40
codegen_flags: <defaults>
</compile_context>

<pallas_src>
import functools

import jax
import jax.numpy as jnp
from jax.experimental import pallas as pl
from jax.experimental.pallas import tpu as pltpu

EPS = 1e-5
NEG_SLOPE = 0.01


# ---------------------------------------------------------------------------
# Conv kernel: [optional fused BN+LeakyReLU of the previous layer on the
# input] -> 3x3 same-conv as 9 accumulating MXU matmuls on lane-dense
# (H, W*C) slabs -> +bias -> merged per-batch-element channel-stat epilogue.
# ---------------------------------------------------------------------------
def _conv3x3_body(x, w_ref, b_ref, y_ref, stat_ref, xp_ref, *, H, W, cin, cout):
    WP = (W + 2) * cin                       # flattened width of halo'd input

    # Rebuild the tiny halo scratch in full every grid step (~(H+2)*WP*4 B),
    # so results are correct even when grid steps land on different cores.
    zrow = jnp.zeros((1, WP), jnp.float32)
    zcol = jnp.zeros((H, cin), jnp.float32)
    xp_ref[0:1, :] = zrow
    xp_ref[H + 1:H + 2, :] = zrow
    xp_ref[1:H + 1, :] = jnp.concatenate([zcol, x, zcol], axis=1)

    # 3x3 conv as 9 accumulating matmuls.  Tap (ky, kx) reads the 2-D window
    # xp[ky:ky+H, kx*cin : kx*cin + W*cin] (sublane/lane-offset slice, no
    # reshape) and multiplies the block-diagonal tap weight (W*cin, W*cout),
    # so acc is directly the lane-dense (H, W*cout) output slab.
    acc = jnp.zeros((H, W * cout), jnp.float32)
    for t in range(9):
        ky, kx = divmod(t, 3)
        lhs = xp_ref[ky:ky + H, kx * cin: kx * cin + W * cin]
        acc = acc + jnp.dot(lhs, w_ref[t], preferred_element_type=jnp.float32)
    acc = acc + b_ref[...]                   # (1, W*cout) broadcast over rows

    y_ref[0] = acc.astype(y_ref.dtype)

    # BN batch-stat partials (sum over H only); the wrapper reduces over the
    # batch and the W lane-groups, so this grid axis stays fully "parallel".
    stat_ref[0] = jnp.concatenate(
        [jnp.sum(acc, axis=0, keepdims=True),
         jnp.sum(acc * acc, axis=0, keepdims=True)], axis=0)


def conv3x3_kernel(x_ref, w_ref, b_ref, y_ref, stat_ref, xp_ref,
                   *, H, W, cin, cout):
    _conv3x3_body(x_ref[0], w_ref, b_ref, y_ref, stat_ref, xp_ref,
                  H=H, W=W, cin=cin, cout=cout)


def conv3x3_fused_act_kernel(x_ref, w_ref, b_ref, sc_ref, sh_ref,
                             y_ref, stat_ref, xp_ref, *, H, W, cin, cout):
    # Previous layer's BN affine + LeakyReLU fused into this conv's input.
    z = x_ref[0] * sc_ref[...] + sh_ref[...]
    x = jnp.where(z >= 0, z, NEG_SLOPE * z)
    _conv3x3_body(x, w_ref, b_ref, y_ref, stat_ref, xp_ref,
                  H=H, W=W, cin=cin, cout=cout)


def conv_bn_stats(x, wbd, bias_t, *, H, W, cin, cout,
                  scale_t=None, shift_t=None):
    """3x3 same-conv (+bias) with a BN batch-stat epilogue.

    x       : (N, H, W*cin)          NHWC flattened, lane-dense
    wbd     : (9, W*cin, W*cout)     block-diagonal per-tap weights
    bias_t  : (1, W*cout)            bias tiled over the W lane-groups
    scale_t / shift_t : optional (1, W*cin); previous layer's BN affine,
                        fused (with LeakyReLU) into this conv's input.
    Returns (y, stats): y (N, H, W*cout) pre-BN conv output and
                        stats (N, 2, W*cout) per-element [sum; sum_sq] over H.
    """
    N = x.shape[0]
    fused = scale_t is not None
    if fused:
        kern = functools.partial(conv3x3_fused_act_kernel,
                                 H=H, W=W, cin=cin, cout=cout)
        extra_args = (scale_t, shift_t)
        extra_specs = [pl.BlockSpec((1, W * cin), lambda n: (0, 0)),
                       pl.BlockSpec((1, W * cin), lambda n: (0, 0))]
    else:
        kern = functools.partial(conv3x3_kernel,
                                 H=H, W=W, cin=cin, cout=cout)
        extra_args = ()
        extra_specs = []

    return pl.pallas_call(
        kern,
        out_shape=(jax.ShapeDtypeStruct((N, H, W * cout), jnp.float32),
                   jax.ShapeDtypeStruct((N, 2, W * cout), jnp.float32)),
        grid_spec=pltpu.PrefetchScalarGridSpec(
            num_scalar_prefetch=0,
            grid=(N,),
            in_specs=[pl.BlockSpec((1, H, W * cin), lambda n: (n, 0, 0)),
                      pl.BlockSpec((9, W * cin, W * cout), lambda n: (0, 0, 0)),
                      pl.BlockSpec((1, W * cout), lambda n: (0, 0))]
                     + extra_specs,
            out_specs=(pl.BlockSpec((1, H, W * cout), lambda n: (n, 0, 0)),
                       pl.BlockSpec((1, 2, W * cout), lambda n: (n, 0, 0))),
            scratch_shapes=[pltpu.VMEM((H + 2, (W + 2) * cin), jnp.float32)],
        ),
        compiler_params=pltpu.CompilerParams(
            dimension_semantics=("parallel",)),
    )(x, wbd, bias_t, *extra_args)


# ---------------------------------------------------------------------------
# Final BatchNorm affine + LeakyReLU on lane-dense (1, H, W*C) blocks.
# ---------------------------------------------------------------------------
def bn_lrelu_kernel(y_ref, sc_ref, sh_ref, o_ref):
    z = y_ref[0] * sc_ref[...] + sh_ref[...]
    o_ref[0] = jnp.where(z >= 0, z, NEG_SLOPE * z).astype(o_ref.dtype)


def bn_lrelu(y, scale_t, shift_t, *, H, W, cout):
    N = y.shape[0]
    return pl.pallas_call(
        bn_lrelu_kernel,
        out_shape=jax.ShapeDtypeStruct((N, H, W * cout), jnp.float32),
        grid_spec=pltpu.PrefetchScalarGridSpec(
            num_scalar_prefetch=0,
            grid=(N,),
            in_specs=[pl.BlockSpec((1, H, W * cout), lambda n: (n, 0, 0)),
                      pl.BlockSpec((1, W * cout), lambda n: (0, 0)),
                      pl.BlockSpec((1, W * cout), lambda n: (0, 0))],
            out_specs=pl.BlockSpec((1, H, W * cout), lambda n: (n, 0, 0)),
        ),
        compiler_params=pltpu.CompilerParams(
            dimension_semantics=("parallel",)),
    )(y, scale_t, shift_t)


# ---------------------------------------------------------------------------
# Wrapper-side parameter prep & BN reductions
# ---------------------------------------------------------------------------
def _prep_layer(w_hwio, bias, W):
    kh, kw, ci, co = w_hwio.shape
    taps = w_hwio.reshape(kh * kw, ci, co).astype(jnp.float32)
    eye = jnp.eye(W, dtype=jnp.float32)
    # Block-diagonal per-tap weight: wbd[t, w*ci+i, v*co+o] = (w==v)*w[t,i,o]
    wbd = jnp.einsum("wv,tio->twivo", eye, taps).reshape(kh * kw, W * ci, W * co)
    bias_t = jnp.tile(bias.astype(jnp.float32), W).reshape(1, W * co)
    return wbd, bias_t


def _bn_scale_shift(stats, gamma, beta, *, N, H, W, C):
    # stats: (N, 2, W*C) -> per-channel training-mode BN mean/var.
    # NOTE: E[y^2]-E[y]^2 in f32 is fine at these sizes; for very large
    # N*H*W a centered second pass / Welford accumulation would be safer.
    s = jnp.sum(stats[:, 0, :].reshape(N, W, C), axis=(0, 1))
    q = jnp.sum(stats[:, 1, :].reshape(N, W, C), axis=(0, 1))
    cnt = float(N * H * W)
    mean = s / cnt
    var = jnp.maximum(q / cnt - mean * mean, 0.0)       # biased var (training BN)
    scale = gamma / jnp.sqrt(var + EPS)
    shift = beta - mean * scale
    return scale, shift


def _tile_lanes(v, W):
    # (C,) -> (1, W*C) matching the (w, c) lane flattening.
    return jnp.tile(v, W).reshape(1, W * v.shape[0])


# ---------------------------------------------------------------------------
# ConvBlock forward (NCHW in / NCHW out, matching the PyTorch module)
# ---------------------------------------------------------------------------
@jax.jit
def conv_block_forward(x_nchw, params):
    N, cin, H, W = x_nchw.shape
    cout = params["w1"].shape[-1]

    # NCHW -> lane-dense flattened NHWC (N, H, W*C)
    x = jnp.transpose(x_nchw, (0, 2, 3, 1)).reshape(N, H, W * cin)

    wbd1, b1t = _prep_layer(params["w1"], params["b1"], W)
    wbd2, b2t = _prep_layer(params["w2"], params["b2"], W)

    # layer 1: conv1 + BN1 batch stats (BN1+LeakyReLU fused into conv2)
    y1, st1 = conv_bn_stats(x, wbd1, b1t, H=H, W=W, cin=cin, cout=cout)
    sc1, sh1 = _bn_scale_shift(st1, params["gamma1"], params["beta1"],
                               N=N, H=H, W=W, C=cout)

    # layer 2: fused [BN1 + LeakyReLU] -> conv2 -> BN2 batch stats
    y2, st2 = conv_bn_stats(y1, wbd2, b2t, H=H, W=W, cin=cout, cout=cout,
                            scale_t=_tile_lanes(sc1, W),
                            shift_t=_tile_lanes(sh1, W))
    sc2, sh2 = _bn_scale_shift(st2, params["gamma2"], params["beta2"],
                               N=N, H=H, W=W, C=cout)

    # final BN2 + LeakyReLU (un-padded lane-dense output)
    out = bn_lrelu(y2, _tile_lanes(sc2, W), _tile_lanes(sh2, W),
                   H=H, W=W, cout=cout)
    out = out.reshape(N, H, W, cout)
    return jnp.transpose(out, (0, 3, 1, 2))             # NHWC -> NCHW (16 KB)


# ---------------------------------------------------------------------------
# Pure-JAX reference (mirrors PyTorch semantics) for the correctness check
# ---------------------------------------------------------------------------
def conv_block_reference(x_nchw, params):
    x = x_nchw
    for i in (1, 2):
        w_oihw = jnp.transpose(params[f"w{i}"], (3, 2, 0, 1))   # HWIO -> OIHW
        b = params[f"b{i}"]
        gamma = params[f"gamma{i}"]
        beta = params[f"beta{i}"]
        y = jax.lax.conv_general_dilated(
            x, w_oihw, window_strides=(1, 1), padding=((1, 1), (1, 1)),
            dimension_numbers=("NCHW", "OIHW", "NCHW"))
        y = y + b[None, :, None, None]
        mean = jnp.mean(y, axis=(0, 2, 3), keepdims=True)
        var = jnp.mean((y - mean) ** 2, axis=(0, 2, 3), keepdims=True)
        z = (y - mean) / jnp.sqrt(var + EPS)
        z = z * gamma[None, :, None, None] + beta[None, :, None, None]
        x = jnp.where(z >= 0, z, NEG_SLOPE * z)
    return x


# ---------------------------------------------------------------------------
def make_params(key, in_channels, out_channels):
    k = jax.random.split(key, 8)
    lim1 = 1.0 / jnp.sqrt(in_channels * 9)
    lim2 = 1.0 / jnp.sqrt(out_channels * 9)
    return {
        "w1": jax.random.uniform(k[0], (3, 3, in_channels, out_channels),
                                 jnp.float32, -lim1, lim1),
        "b1": jax.random.uniform(k[1], (out_channels,), jnp.float32, -lim1, lim1),
        "gamma1": 1.0 + 0.1 * jax.random.normal(k[2], (out_channels,), jnp.float32),
        "beta1": 0.1 * jax.random.normal(k[3], (out_channels,), jnp.float32),
        "w2": jax.random.uniform(k[4], (3, 3, out_channels, out_channels),
                                 jnp.float32, -lim2, lim2),
        "b2": jax.random.uniform(k[5], (out_channels,), jnp.float32, -lim2, lim2),
        "gamma2": 1.0 + 0.1 * jax.random.normal(k[6], (out_channels,), jnp.float32),
        "beta2": 0.1 * jax.random.normal(k[7], (out_channels,), jnp.float32),
    }


if __name__ == "__main__":
    key = jax.random.PRNGKey(0)
    k_inp, k_par = jax.random.split(key)

    N, Cin, Cout, H, W = 2, 4, 8, 16, 16
    x = jax.random.normal(k_inp, (N, Cin, H, W), jnp.float32)
    params = make_params(k_par, Cin, Cout)

    out = jax.block_until_ready(conv_block_forward(x, params))
    ref = conv_block_reference(x, params)

    assert out.shape == (N, Cout, H, W), out.shape
    max_err = float(jnp.max(jnp.abs(out - ref)))
    assert jnp.allclose(out, ref, rtol=2e-3, atol=2e-3), max_err

    print("KERNEL_OK")
</pallas_src>

<mosaic_0001>
module attributes {stable_mosaic.version = 11 : i64} {
  func.func @conv3x3_kernel(%arg0: i32, %arg1: memref<1x16x64xf32, #tpu.memory_space<vmem>>, %arg2: memref<9x64x128xf32, #tpu.memory_space<vmem>>, %arg3: memref<1x128xf32, #tpu.memory_space<vmem>>, %arg4: memref<1x16x128xf32, #tpu.memory_space<vmem>>, %arg5: memref<1x2x128xf32, #tpu.memory_space<vmem>>, %arg6: memref<18x72xf32, #tpu.memory_space<vmem>>) attributes {dimension_semantics = [#tpu.dimension_semantics<parallel>], iteration_bounds = array<i64: 2>, scalar_prefetch = 0 : i64, scratch_operands = 1 : i64, tpu.core_type = #tpu.core_type<tc>, window_params = [{transform_indices = @transform_0, window_bounds = array<i64: 1, 16, 64>}, {pipeline_mode = #tpu.pipeline_mode<synchronous>, transform_indices = @transform_1, window_bounds = array<i64: 9, 64, 128>}, {pipeline_mode = #tpu.pipeline_mode<synchronous>, transform_indices = @transform_2, window_bounds = array<i64: 1, 128>}, {transform_indices = @transform_3, window_bounds = array<i64: 1, 16, 128>}, {transform_indices = @transform_4, window_bounds = array<i64: 1, 2, 128>}]} {
    %c0 = arith.constant 0 : index
    %c0_0 = arith.constant 0 : index
    %c0_1 = arith.constant 0 : index
    %0 = vector.load %arg1[%c0, %c0_0, %c0_1] : memref<1x16x64xf32, #tpu.memory_space<vmem>>, vector<1x16x64xf32>
    %1 = vector.shape_cast %0 : vector<1x16x64xf32> to vector<16x64xf32>
    %cst = arith.constant 0.000000e+00 : f32
    %2 = vector.broadcast %cst : f32 to vector<1x72xf32>
    %cst_2 = arith.constant 0.000000e+00 : f32
    %3 = vector.broadcast %cst_2 : f32 to vector<16x4xf32>
    %c0_3 = arith.constant 0 : index
    %c0_4 = arith.constant 0 : index
    %4 = vector.load %arg6[%c0_3, %c0_4] : memref<18x72xf32, #tpu.memory_space<vmem>>, vector<1x72xf32>
    tpu.vector_store %arg6[%c0_3, %c0_4], %2 {strides = array<i32>} : memref<18x72xf32, #tpu.memory_space<vmem>>, vector<1x72xf32>,
    %c17 = arith.constant 17 : index
    %c0_5 = arith.constant 0 : index
    %5 = vector.load %arg6[%c17, %c0_5] : memref<18x72xf32, #tpu.memory_space<vmem>>, vector<1x72xf32>
    tpu.vector_store %arg6[%c17, %c0_5], %2 {strides = array<i32>} : memref<18x72xf32, #tpu.memory_space<vmem>>, vector<1x72xf32>,
    %6 = tpu.concatenate %3, %1, %3 in 1 : vector<16x4xf32>, vector<16x64xf32>, vector<16x4xf32> -> vector<16x72xf32>
    %c1 = arith.constant 1 : index
    %c0_6 = arith.constant 0 : index
    %7 = vector.load %arg6[%c1, %c0_6] : memref<18x72xf32, #tpu.memory_space<vmem>>, vector<16x72xf32>
    tpu.vector_store %arg6[%c1, %c0_6], %6 {strides = array<i32>} : memref<18x72xf32, #tpu.memory_space<vmem>>, vector<16x72xf32>,
    %cst_7 = arith.constant 0.000000e+00 : f32
    %8 = vector.broadcast %cst_7 : f32 to vector<16x128xf32>
    %c0_8 = arith.constant 0 : index
    %c0_9 = arith.constant 0 : index
    %9 = vector.load %arg6[%c0_8, %c0_9] : memref<18x72xf32, #tpu.memory_space<vmem>>, vector<16x64xf32>
    %c0_10 = arith.constant 0 : index
    %c0_11 = arith.constant 0 : index
    %c0_12 = arith.constant 0 : index
    %10 = vector.load %arg2[%c0_10, %c0_11, %c0_12] : memref<9x64x128xf32, #tpu.memory_space<vmem>>, vector<1x64x128xf32>
    %11 = vector.shape_cast %10 : vector<1x64x128xf32> to vector<64x128xf32>
    %cst_13 = arith.constant dense<0.000000e+00> : vector<16x128xf32>
    %12 = tpu.matmul %9, %11, %cst_13 {dimension_numbers = #tpu.dot_dimension_numbers<[1], [0], [0], [1], [0, 0, 1, 1], [], []>} : vector<16x64xf32>, vector<64x128xf32>, vector<16x128xf32> -> vector<16x128xf32>
    %13 = arith.addf %8, %12 : vector<16x128xf32>
    %c0_14 = arith.constant 0 : index
    %c4 = arith.constant 4 : index
    %14 = vector.load %arg6[%c0_14, %c4] : memref<18x72xf32, #tpu.memory_space<vmem>>, vector<16x64xf32>
    %c1_15 = arith.constant 1 : index
    %c0_16 = arith.constant 0 : index
    %c0_17 = arith.constant 0 : index
    %15 = vector.load %arg2[%c1_15, %c0_16, %c0_17] : memref<9x64x128xf32, #tpu.memory_space<vmem>>, vector<1x64x128xf32>
    %16 = vector.shape_cast %15 : vector<1x64x128xf32> to vector<64x128xf32>
    %cst_18 = arith.constant dense<0.000000e+00> : vector<16x128xf32>
    %17 = tpu.matmul %14, %16, %cst_18 {dimension_numbers = #tpu.dot_dimension_numbers<[1], [0], [0], [1], [0, 0, 1, 1], [], []>} : vector<16x64xf32>, vector<64x128xf32>, vector<16x128xf32> -> vector<16x128xf32>
    %18 = arith.addf %13, %17 : vector<16x128xf32>
    %c0_19 = arith.constant 0 : index
    %c8 = arith.constant 8 : index
    %19 = vector.load %arg6[%c0_19, %c8] : memref<18x72xf32, #tpu.memory_space<vmem>>, vector<16x64xf32>
    %c2 = arith.constant 2 : index
    %c0_20 = arith.constant 0 : index
    %c0_21 = arith.constant 0 : index
    %20 = vector.load %arg2[%c2, %c0_20, %c0_21] : memref<9x64x128xf32, #tpu.memory_space<vmem>>, vector<1x64x128xf32>
    %21 = vector.shape_cast %20 : vector<1x64x128xf32> to vector<64x128xf32>
    %cst_22 = arith.constant dense<0.000000e+00> : vector<16x128xf32>
    %22 = tpu.matmul %19, %21, %cst_22 {dimension_numbers = #tpu.dot_dimension_numbers<[1], [0], [0], [1], [0, 0, 1, 1], [], []>} : vector<16x64xf32>, vector<64x128xf32>, vector<16x128xf32> -> vector<16x128xf32>
    %23 = arith.addf %18, %22 : vector<16x128xf32>
    %c1_23 = arith.constant 1 : index
    %c0_24 = arith.constant 0 : index
    %24 = vector.load %arg6[%c1_23, %c0_24] : memref<18x72xf32, #tpu.memory_space<vmem>>, vector<16x64xf32>
    %c3 = arith.constant 3 : index
    %c0_25 = arith.constant 0 : index
    %c0_26 = arith.constant 0 : index
    %25 = vector.load %arg2[%c3, %c0_25, %c0_26] : memref<9x64x128xf32, #tpu.memory_space<vmem>>, vector<1x64x128xf32>
    %26 = vector.shape_cast %25 : vector<1x64x128xf32> to vector<64x128xf32>
    %cst_27 = arith.constant dense<0.000000e+00> : vector<16x128xf32>
    %27 = tpu.matmul %24, %26, %cst_27 {dimension_numbers = #tpu.dot_dimension_numbers<[1], [0], [0], [1], [0, 0, 1, 1], [], []>} : vector<16x64xf32>, vector<64x128xf32>, vector<16x128xf32> -> vector<16x128xf32>
    %28 = arith.addf %23, %27 : vector<16x128xf32>
    %c1_28 = arith.constant 1 : index
    %c4_29 = arith.constant 4 : index
    %29 = vector.load %arg6[%c1_28, %c4_29] : memref<18x72xf32, #tpu.memory_space<vmem>>, vector<16x64xf32>
    %c4_30 = arith.constant 4 : index
    %c0_31 = arith.constant 0 : index
    %c0_32 = arith.constant 0 : index
    %30 = vector.load %arg2[%c4_30, %c0_31, %c0_32] : memref<9x64x128xf32, #tpu.memory_space<vmem>>, vector<1x64x128xf32>
    %31 = vector.shape_cast %30 : vector<1x64x128xf32> to vector<64x128xf32>
    %cst_33 = arith.constant dense<0.000000e+00> : vector<16x128xf32>
    %32 = tpu.matmul %29, %31, %cst_33 {dimension_numbers = #tpu.dot_dimension_numbers<[1], [0], [0], [1], [0, 0, 1, 1], [], []>} : vector<16x64xf32>, vector<64x128xf32>, vector<16x128xf32> -> vector<16x128xf32>
    %33 = arith.addf %28, %32 : vector<16x128xf32>
    %c1_34 = arith.constant 1 : index
    %c8_35 = arith.constant 8 : index
    %34 = vector.load %arg6[%c1_34, %c8_35] : memref<18x72xf32, #tpu.memory_space<vmem>>, vector<16x64xf32>
    %c5 = arith.constant 5 : index
    %c0_36 = arith.constant 0 : index
    %c0_37 = arith.constant 0 : index
    %35 = vector.load %arg2[%c5, %c0_36, %c0_37] : memref<9x64x128xf32, #tpu.memory_space<vmem>>, vector<1x64x128xf32>
    %36 = vector.shape_cast %35 : vector<1x64x128xf32> to vector<64x128xf32>
    %cst_38 = arith.constant dense<0.000000e+00> : vector<16x128xf32>
    %37 = tpu.matmul %34, %36, %cst_38 {dimension_numbers = #tpu.dot_dimension_numbers<[1], [0], [0], [1], [0, 0, 1, 1], [], []>} : vector<16x64xf32>, vector<64x128xf32>, vector<16x128xf32> -> vector<16x128xf32>
    %38 = arith.addf %33, %37 : vector<16x128xf32>
    %c2_39 = arith.constant 2 : index
    %c0_40 = arith.constant 0 : index
    %39 = vector.load %arg6[%c2_39, %c0_40] : memref<18x72xf32, #tpu.memory_space<vmem>>, vector<16x64xf32>
    %c6 = arith.constant 6 : index
    %c0_41 = arith.constant 0 : index
    %c0_42 = arith.constant 0 : index
    %40 = vector.load %arg2[%c6, %c0_41, %c0_42] : memref<9x64x128xf32, #tpu.memory_space<vmem>>, vector<1x64x128xf32>
    %41 = vector.shape_cast %40 : vector<1x64x128xf32> to vector<64x128xf32>
    %cst_43 = arith.constant dense<0.000000e+00> : vector<16x128xf32>
    %42 = tpu.matmul %39, %41, %cst_43 {dimension_numbers = #tpu.dot_dimension_numbers<[1], [0], [0], [1], [0, 0, 1, 1], [], []>} : vector<16x64xf32>, vector<64x128xf32>, vector<16x128xf32> -> vector<16x128xf32>
    %43 = arith.addf %38, %42 : vector<16x128xf32>
    %c2_44 = arith.constant 2 : index
    %c4_45 = arith.constant 4 : index
    %44 = vector.load %arg6[%c2_44, %c4_45] : memref<18x72xf32, #tpu.memory_space<vmem>>, vector<16x64xf32>
    %c7 = arith.constant 7 : index
    %c0_46 = arith.constant 0 : index
    %c0_47 = arith.constant 0 : index
    %45 = vector.load %arg2[%c7, %c0_46, %c0_47] : memref<9x64x128xf32, #tpu.memory_space<vmem>>, vector<1x64x128xf32>
    %46 = vector.shape_cast %45 : vector<1x64x128xf32> to vector<64x128xf32>
    %cst_48 = arith.constant dense<0.000000e+00> : vector<16x128xf32>
    %47 = tpu.matmul %44, %46, %cst_48 {dimension_numbers = #tpu.dot_dimension_numbers<[1], [0], [0], [1], [0, 0, 1, 1], [], []>} : vector<16x64xf32>, vector<64x128xf32>, vector<16x128xf32> -> vector<16x128xf32>
    %48 = arith.addf %43, %47 : vector<16x128xf32>
    %c2_49 = arith.constant 2 : index
    %c8_50 = arith.constant 8 : index
    %49 = vector.load %arg6[%c2_49, %c8_50] : memref<18x72xf32, #tpu.memory_space<vmem>>, vector<16x64xf32>
    %c8_51 = arith.constant 8 : index
    %c0_52 = arith.constant 0 : index
    %c0_53 = arith.constant 0 : index
    %50 = vector.load %arg2[%c8_51, %c0_52, %c0_53] : memref<9x64x128xf32, #tpu.memory_space<vmem>>, vector<1x64x128xf32>
    %51 = vector.shape_cast %50 : vector<1x64x128xf32> to vector<64x128xf32>
    %cst_54 = arith.constant dense<0.000000e+00> : vector<16x128xf32>
    %52 = tpu.matmul %49, %51, %cst_54 {dimension_numbers = #tpu.dot_dimension_numbers<[1], [0], [0], [1], [0, 0, 1, 1], [], []>} : vector<16x64xf32>, vector<64x128xf32>, vector<16x128xf32> -> vector<16x128xf32>
    %53 = arith.addf %48, %52 : vector<16x128xf32>
    %c0_55 = arith.constant 0 : index
    %c0_56 = arith.constant 0 : index
    %54 = vector.load %arg3[%c0_55, %c0_56] : memref<1x128xf32, #tpu.memory_space<vmem>>, vector<1x128xf32>
    %55 = vector.broadcast %54 : vector<1x128xf32> to vector<16x128xf32>
    %56 = arith.addf %53, %55 : vector<16x128xf32>
    %c0_57 = arith.constant 0 : index
    %c0_58 = arith.constant 0 : index
    %c0_59 = arith.constant 0 : index
    %57 = vector.load %arg4[%c0_57, %c0_58, %c0_59] : memref<1x16x128xf32, #tpu.memory_space<vmem>>, vector<1x16x128xf32>
    %58 = vector.shape_cast %57 : vector<1x16x128xf32> to vector<16x128xf32>
    %59 = vector.shape_cast %56 : vector<16x128xf32> to vector<1x16x128xf32>
    tpu.vector_store %arg4[%c0_57, %c0_58, %c0_59], %59 {strides = array<i32>} : memref<1x16x128xf32, #tpu.memory_space<vmem>>, vector<1x16x128xf32>,
    %cst_60 = arith.constant dense<0.000000e+00> : vector<128xf32>
    %60 = vector.multi_reduction <add>, %56, %cst_60 [0] : vector<16x128xf32> to vector<128xf32>
    %61 = vector.shape_cast %60 : vector<128xf32> to vector<1x128xf32>
    %62 = arith.mulf %56, %56 : vector<16x128xf32>
    %cst_61 = arith.constant dense<0.000000e+00> : vector<128xf32>
    %63 = vector.multi_reduction <add>, %62, %cst_61 [0] : vector<16x128xf32> to vector<128xf32>
    %64 = vector.shape_cast %63 : vector<128xf32> to vector<1x128xf32>
    %65 = tpu.concatenate %61, %64 in 0 : vector<1x128xf32>, vector<1x128xf32> -> vector<2x128xf32>
    %c0_62 = arith.constant 0 : index
    %c0_63 = arith.constant 0 : index
    %c0_64 = arith.constant 0 : index
    %66 = vector.load %arg5[%c0_62, %c0_63, %c0_64] : memref<1x2x128xf32, #tpu.memory_space<vmem>>, vector<1x2x128xf32>
    %67 = vector.shape_cast %66 : vector<1x2x128xf32> to vector<2x128xf32>
    %68 = vector.shape_cast %65 : vector<2x128xf32> to vector<1x2x128xf32>
    tpu.vector_store %arg5[%c0_62, %c0_63, %c0_64], %68 {strides = array<i32>} : memref<1x2x128xf32, #tpu.memory_space<vmem>>, vector<1x2x128xf32>,
    return
  }
  func.func @transform_0(%arg0: i32) -> (i32, i32, i32) {
    %c0_i32 = arith.constant 0 : i32
    %c0_i32_0 = arith.constant 0 : i32
    %c0_i32_1 = arith.constant 0 : i32
    return %arg0, %c0_i32, %c0_i32_0 : i32, i32, i32
  }
  func.func @transform_1(%arg0: i32) -> (i32, i32, i32) {
    %c0_i32 = arith.constant 0 : i32
    %c0_i32_0 = arith.constant 0 : i32
    %c0_i32_1 = arith.constant 0 : i32
    %c0_i32_2 = arith.constant 0 : i32
    return %c0_i32, %c0_i32_0, %c0_i32_1 : i32, i32, i32
  }
  func.func @transform_2(%arg0: i32) -> (i32, i32) {
    %c0_i32 = arith.constant 0 : i32
    %c0_i32_0 = arith.constant 0 : i32
    %c0_i32_1 = arith.constant 0 : i32
    return %c0_i32, %c0_i32_0 : i32, i32
  }
  func.func @transform_3(%arg0: i32) -> (i32, i32, i32) {
    %c0_i32 = arith.constant 0 : i32
    %c0_i32_0 = arith.constant 0 : i32
    %c0_i32_1 = arith.constant 0 : i32
    return %arg0, %c0_i32, %c0_i32_0 : i32, i32, i32
  }
  func.func @transform_4(%arg0: i32) -> (i32, i32, i32) {
    %c0_i32 = arith.constant 0 : i32
    %c0_i32_0 = arith.constant 0 : i32
    %c0_i32_1 = arith.constant 0 : i32
    return %arg0, %c0_i32, %c0_i32_0 : i32, i32, i32
  }
}

module attributes {stable_mosaic.version = 11 : i64} {
  func.func @conv3x3_fused_act_kernel(%arg0: i32, %arg1: memref<1x16x128xf32, #tpu.memory_space<vmem>>, %arg2: memref<9x128x128xf32, #tpu.memory_space<vmem>>, %arg3: memref<1x128xf32, #tpu.memory_space<vmem>>, %arg4: memref<1x128xf32, #tpu.memory_space<vmem>>, %arg5: memref<1x128xf32, #tpu.memory_space<vmem>>, %arg6: memref<1x16x128xf32, #tpu.memory_space<vmem>>, %arg7: memref<1x2x128xf32, #tpu.memory_space<vmem>>, %arg8: memref<18x144xf32, #tpu.memory_space<vmem>>) attributes {dimension_semantics = [#tpu.dimension_semantics<parallel>], iteration_bounds = array<i64: 2>, scalar_prefetch = 0 : i64, scratch_operands = 1 : i64, tpu.core_type = #tpu.core_type<tc>, window_params = [{transform_indices = @transform_0, window_bounds = array<i64: 1, 16, 128>}, {pipeline_mode = #tpu.pipeline_mode<synchronous>, transform_indices = @transform_1, window_bounds = array<i64: 9, 128, 128>}, {pipeline_mode = #tpu.pipeline_mode<synchronous>, transform_indices = @transform_2, window_bounds = array<i64: 1, 128>}, {pipeline_mode = #tpu.pipeline_mode<synchronous>, transform_indices = @transform_3, window_bounds = array<i64: 1, 128>}, {pipeline_mode = #tpu.pipeline_mode<synchronous>, transform_indices = @transform_4, window_bounds = array<i64: 1, 128>}, {transform_indices = @transform_5, window_bounds = array<i64: 1, 16, 128>}, {transform_indices = @transform_6, window_bounds = array<i64: 1, 2, 128>}]} {
    %c0 = arith.constant 0 : index
    %c0_0 = arith.constant 0 : index
    %c0_1 = arith.constant 0 : index
    %0 = vector.load %arg1[%c0, %c0_0, %c0_1] : memref<1x16x128xf32, #tpu.memory_space<vmem>>, vector<1x16x128xf32>
    %1 = vector.shape_cast %0 : vector<1x16x128xf32> to vector<16x128xf32>
    %c0_2 = arith.constant 0 : index
    %c0_3 = arith.constant 0 : index
    %2 = vector.load %arg4[%c0_2, %c0_3] : memref<1x128xf32, #tpu.memory_space<vmem>>, vector<1x128xf32>
    %3 = vector.broadcast %2 : vector<1x128xf32> to vector<16x128xf32>
    %4 = arith.mulf %1, %3 : vector<16x128xf32>
    %c0_4 = arith.constant 0 : index
    %c0_5 = arith.constant 0 : index
    %5 = vector.load %arg5[%c0_4, %c0_5] : memref<1x128xf32, #tpu.memory_space<vmem>>, vector<1x128xf32>
    %6 = vector.broadcast %5 : vector<1x128xf32> to vector<16x128xf32>
    %7 = arith.addf %4, %6 : vector<16x128xf32>
    %cst = arith.constant 0.000000e+00 : f32
    %8 = vector.broadcast %cst : f32 to vector<16x128xf32>
    %9 = arith.cmpf oge, %7, %8 : vector<16x128xf32>
    %cst_6 = arith.constant 0.00999999977 : f32
    %10 = vector.broadcast %cst_6 : f32 to vector<16x128xf32>
    %11 = arith.mulf %10, %7 : vector<16x128xf32>
    %12 = arith.select %9, %7, %11 : vector<16x128xi1>, vector<16x128xf32>
    %cst_7 = arith.constant 0.000000e+00 : f32
    %13 = vector.broadcast %cst_7 : f32 to vector<1x144xf32>
    %cst_8 = arith.constant 0.000000e+00 : f32
    %14 = vector.broadcast %cst_8 : f32 to vector<16x8xf32>
    %c0_9 = arith.constant 0 : index
    %c0_10 = arith.constant 0 : index
    %15 = vector.load %arg8[%c0_9, %c0_10] : memref<18x144xf32, #tpu.memory_space<vmem>>, vector<1x144xf32>
    tpu.vector_store %arg8[%c0_9, %c0_10], %13 {strides = array<i32>} : memref<18x144xf32, #tpu.memory_space<vmem>>, vector<1x144xf32>,
    %c17 = arith.constant 17 : index
    %c0_11 = arith.constant 0 : index
    %16 = vector.load %arg8[%c17, %c0_11] : memref<18x144xf32, #tpu.memory_space<vmem>>, vector<1x144xf32>
    tpu.vector_store %arg8[%c17, %c0_11], %13 {strides = array<i32>} : memref<18x144xf32, #tpu.memory_space<vmem>>, vector<1x144xf32>,
    %17 = tpu.concatenate %14, %12, %14 in 1 : vector<16x8xf32>, vector<16x128xf32>, vector<16x8xf32> -> vector<16x144xf32>
    %c1 = arith.constant 1 : index
    %c0_12 = arith.constant 0 : index
    %18 = vector.load %arg8[%c1, %c0_12] : memref<18x144xf32, #tpu.memory_space<vmem>>, vector<16x144xf32>
    tpu.vector_store %arg8[%c1, %c0_12], %17 {strides = array<i32>} : memref<18x144xf32, #tpu.memory_space<vmem>>, vector<16x144xf32>,
    %cst_13 = arith.constant 0.000000e+00 : f32
    %19 = vector.broadcast %cst_13 : f32 to vector<16x128xf32>
    %c0_14 = arith.constant 0 : index
    %c0_15 = arith.constant 0 : index
    %20 = vector.load %arg8[%c0_14, %c0_15] : memref<18x144xf32, #tpu.memory_space<vmem>>, vector<16x128xf32>
    %c0_16 = arith.constant 0 : index
    %c0_17 = arith.constant 0 : index
    %c0_18 = arith.constant 0 : index
    %21 = vector.load %arg2[%c0_16, %c0_17, %c0_18] : memref<9x128x128xf32, #tpu.memory_space<vmem>>, vector<1x128x128xf32>
    %22 = vector.shape_cast %21 : vector<1x128x128xf32> to vector<128x128xf32>
    %cst_19 = arith.constant dense<0.000000e+00> : vector<16x128xf32>
    %23 = tpu.matmul %20, %22, %cst_19 {dimension_numbers = #tpu.dot_dimension_numbers<[1], [0], [0], [1], [0, 0, 1, 1], [], []>} : vector<16x128xf32>, vector<128x128xf32>, vector<16x128xf32> -> vector<16x128xf32>
    %24 = arith.addf %19, %23 : vector<16x128xf32>
    %c0_20 = arith.constant 0 : index
    %c8 = arith.constant 8 : index
    %25 = vector.load %arg8[%c0_20, %c8] : memref<18x144xf32, #tpu.memory_space<vmem>>, vector<16x128xf32>
    %c1_21 = arith.constant 1 : index
    %c0_22 = arith.constant 0 : index
    %c0_23 = arith.constant 0 : index
    %26 = vector.load %arg2[%c1_21, %c0_22, %c0_23] : memref<9x128x128xf32, #tpu.memory_space<vmem>>, vector<1x128x128xf32>
    %27 = vector.shape_cast %26 : vector<1x128x128xf32> to vector<128x128xf32>
    %cst_24 = arith.constant dense<0.000000e+00> : vector<16x128xf32>
    %28 = tpu.matmul %25, %27, %cst_24 {dimension_numbers = #tpu.dot_dimension_numbers<[1], [0], [0], [1], [0, 0, 1, 1], [], []>} : vector<16x128xf32>, vector<128x128xf32>, vector<16x128xf32> -> vector<16x128xf32>
    %29 = arith.addf %24, %28 : vector<16x128xf32>
    %c0_25 = arith.constant 0 : index
    %c16 = arith.constant 16 : index
    %30 = vector.load %arg8[%c0_25, %c16] : memref<18x144xf32, #tpu.memory_space<vmem>>, vector<16x128xf32>
    %c2 = arith.constant 2 : index
    %c0_26 = arith.constant 0 : index
    %c0_27 = arith.constant 0 : index
    %31 = vector.load %arg2[%c2, %c0_26, %c0_27] : memref<9x128x128xf32, #tpu.memory_space<vmem>>, vector<1x128x128xf32>
    %32 = vector.shape_cast %31 : vector<1x128x128xf32> to vector<128x128xf32>
    %cst_28 = arith.constant dense<0.000000e+00> : vector<16x128xf32>
    %33 = tpu.matmul %30, %32, %cst_28 {dimension_numbers = #tpu.dot_dimension_numbers<[1], [0], [0], [1], [0, 0, 1, 1], [], []>} : vector<16x128xf32>, vector<128x128xf32>, vector<16x128xf32> -> vector<16x128xf32>
    %34 = arith.addf %29, %33 : vector<16x128xf32>
    %c1_29 = arith.constant 1 : index
    %c0_30 = arith.constant 0 : index
    %35 = vector.load %arg8[%c1_29, %c0_30] : memref<18x144xf32, #tpu.memory_space<vmem>>, vector<16x128xf32>
    %c3 = arith.constant 3 : index
    %c0_31 = arith.constant 0 : index
    %c0_32 = arith.constant 0 : index
    %36 = vector.load %arg2[%c3, %c0_31, %c0_32] : memref<9x128x128xf32, #tpu.memory_space<vmem>>, vector<1x128x128xf32>
    %37 = vector.shape_cast %36 : vector<1x128x128xf32> to vector<128x128xf32>
    %cst_33 = arith.constant dense<0.000000e+00> : vector<16x128xf32>
    %38 = tpu.matmul %35, %37, %cst_33 {dimension_numbers = #tpu.dot_dimension_numbers<[1], [0], [0], [1], [0, 0, 1, 1], [], []>} : vector<16x128xf32>, vector<128x128xf32>, vector<16x128xf32> -> vector<16x128xf32>
    %39 = arith.addf %34, %38 : vector<16x128xf32>
    %c1_34 = arith.constant 1 : index
    %c8_35 = arith.constant 8 : index
    %40 = vector.load %arg8[%c1_34, %c8_35] : memref<18x144xf32, #tpu.memory_space<vmem>>, vector<16x128xf32>
    %c4 = arith.constant 4 : index
    %c0_36 = arith.constant 0 : index
    %c0_37 = arith.constant 0 : index
    %41 = vector.load %arg2[%c4, %c0_36, %c0_37] : memref<9x128x128xf32, #tpu.memory_space<vmem>>, vector<1x128x128xf32>
    %42 = vector.shape_cast %41 : vector<1x128x128xf32> to vector<128x128xf32>
    %cst_38 = arith.constant dense<0.000000e+00> : vector<16x128xf32>
    %43 = tpu.matmul %40, %42, %cst_38 {dimension_numbers = #tpu.dot_dimension_numbers<[1], [0], [0], [1], [0, 0, 1, 1], [], []>} : vector<16x128xf32>, vector<128x128xf32>, vector<16x128xf32> -> vector<16x128xf32>
    %44 = arith.addf %39, %43 : vector<16x128xf32>
    %c1_39 = arith.constant 1 : index
    %c16_40 = arith.constant 16 : index
    %45 = vector.load %arg8[%c1_39, %c16_40] : memref<18x144xf32, #tpu.memory_space<vmem>>, vector<16x128xf32>
    %c5 = arith.constant 5 : index
    %c0_41 = arith.constant 0 : index
    %c0_42 = arith.constant 0 : index
    %46 = vector.load %arg2[%c5, %c0_41, %c0_42] : memref<9x128x128xf32, #tpu.memory_space<vmem>>, vector<1x128x128xf32>
    %47 = vector.shape_cast %46 : vector<1x128x128xf32> to vector<128x128xf32>
    %cst_43 = arith.constant dense<0.000000e+00> : vector<16x128xf32>
    %48 = tpu.matmul %45, %47, %cst_43 {dimension_numbers = #tpu.dot_dimension_numbers<[1], [0], [0], [1], [0, 0, 1, 1], [], []>} : vector<16x128xf32>, vector<128x128xf32>, vector<16x128xf32> -> vector<16x128xf32>
    %49 = arith.addf %44, %48 : vector<16x128xf32>
    %c2_44 = arith.constant 2 : index
    %c0_45 = arith.constant 0 : index
    %50 = vector.load %arg8[%c2_44, %c0_45] : memref<18x144xf32, #tpu.memory_space<vmem>>, vector<16x128xf32>
    %c6 = arith.constant 6 : index
    %c0_46 = arith.constant 0 : index
    %c0_47 = arith.constant 0 : index
    %51 = vector.load %arg2[%c6, %c0_46, %c0_47] : memref<9x128x128xf32, #tpu.memory_space<vmem>>, vector<1x128x128xf32>
    %52 = vector.shape_cast %51 : vector<1x128x128xf32> to vector<128x128xf32>
    %cst_48 = arith.constant dense<0.000000e+00> : vector<16x128xf32>
    %53 = tpu.matmul %50, %52, %cst_48 {dimension_numbers = #tpu.dot_dimension_numbers<[1], [0], [0], [1], [0, 0, 1, 1], [], []>} : vector<16x128xf32>, vector<128x128xf32>, vector<16x128xf32> -> vector<16x128xf32>
    %54 = arith.addf %49, %53 : vector<16x128xf32>
    %c2_49 = arith.constant 2 : index
    %c8_50 = arith.constant 8 : index
    %55 = vector.load %arg8[%c2_49, %c8_50] : memref<18x144xf32, #tpu.memory_space<vmem>>, vector<16x128xf32>
    %c7 = arith.constant 7 : index
    %c0_51 = arith.constant 0 : index
    %c0_52 = arith.constant 0 : index
    %56 = vector.load %arg2[%c7, %c0_51, %c0_52] : memref<9x128x128xf32, #tpu.memory_space<vmem>>, vector<1x128x128xf32>
    %57 = vector.shape_cast %56 : vector<1x128x128xf32> to vector<128x128xf32>
    %cst_53 = arith.constant dense<0.000000e+00> : vector<16x128xf32>
    %58 = tpu.matmul %55, %57, %cst_53 {dimension_numbers = #tpu.dot_dimension_numbers<[1], [0], [0], [1], [0, 0, 1, 1], [], []>} : vector<16x128xf32>, vector<128x128xf32>, vector<16x128xf32> -> vector<16x128xf32>
    %59 = arith.addf %54, %58 : vector<16x128xf32>
    %c2_54 = arith.constant 2 : index
    %c16_55 = arith.constant 16 : index
    %60 = vector.load %arg8[%c2_54, %c16_55] : memref<18x144xf32, #tpu.memory_space<vmem>>, vector<16x128xf32>
    %c8_56 = arith.constant 8 : index
    %c0_57 = arith.constant 0 : index
    %c0_58 = arith.constant 0 : index
    %61 = vector.load %arg2[%c8_56, %c0_57, %c0_58] : memref<9x128x128xf32, #tpu.memory_space<vmem>>, vector<1x128x128xf32>
    %62 = vector.shape_cast %61 : vector<1x128x128xf32> to vector<128x128xf32>
    %cst_59 = arith.constant dense<0.000000e+00> : vector<16x128xf32>
    %63 = tpu.matmul %60, %62, %cst_59 {dimension_numbers = #tpu.dot_dimension_numbers<[1], [0], [0], [1], [0, 0, 1, 1], [], []>} : vector<16x128xf32>, vector<128x128xf32>, vector<16x128xf32> -> vector<16x128xf32>
    %64 = arith.addf %59, %63 : vector<16x128xf32>
    %c0_60 = arith.constant 0 : index
    %c0_61 = arith.constant 0 : index
    %65 = vector.load %arg3[%c0_60, %c0_61] : memref<1x128xf32, #tpu.memory_space<vmem>>, vector<1x128xf32>
    %66 = vector.broadcast %65 : vector<1x128xf32> to vector<16x128xf32>
    %67 = arith.addf %64, %66 : vector<16x128xf32>
    %c0_62 = arith.constant 0 : index
    %c0_63 = arith.constant 0 : index
    %c0_64 = arith.constant 0 : index
    %68 = vector.load %arg6[%c0_62, %c0_63, %c0_64] : memref<1x16x128xf32, #tpu.memory_space<vmem>>, vector<1x16x128xf32>
    %69 = vector.shape_cast %68 : vector<1x16x128xf32> to vector<16x128xf32>
    %70 = vector.shape_cast %67 : vector<16x128xf32> to vector<1x16x128xf32>
    tpu.vector_store %arg6[%c0_62, %c0_63, %c0_64], %70 {strides = array<i32>} : memref<1x16x128xf32, #tpu.memory_space<vmem>>, vector<1x16x128xf32>,
    %cst_65 = arith.constant dense<0.000000e+00> : vector<128xf32>
    %71 = vector.multi_reduction <add>, %67, %cst_65 [0] : vector<16x128xf32> to vector<128xf32>
    %72 = vector.shape_cast %71 : vector<128xf32> to vector<1x128xf32>
    %73 = arith.mulf %67, %67 : vector<16x128xf32>
    %cst_66 = arith.constant dense<0.000000e+00> : vector<128xf32>
    %74 = vector.multi_reduction <add>, %73, %cst_66 [0] : vector<16x128xf32> to vector<128xf32>
    %75 = vector.shape_cast %74 : vector<128xf32> to vector<1x128xf32>
    %76 = tpu.concatenate %72, %75 in 0 : vector<1x128xf32>, vector<1x128xf32> -> vector<2x128xf32>
    %c0_67 = arith.constant 0 : index
    %c0_68 = arith.constant 0 : index
    %c0_69 = arith.constant 0 : index
    %77 = vector.load %arg7[%c0_67, %c0_68, %c0_69] : memref<1x2x128xf32, #tpu.memory_space<vmem>>, vector<1x2x128xf32>
    %78 = vector.shape_cast %77 : vector<1x2x128xf32> to vector<2x128xf32>
    %79 = vector.shape_cast %76 : vector<2x128xf32> to vector<1x2x128xf32>
    tpu.vector_store %arg7[%c0_67, %c0_68, %c0_69], %79 {strides = array<i32>} : memref<1x2x128xf32, #tpu.memory_space<vmem>>, vector<1x2x128xf32>,
    return
  }
  func.func @transform_0(%arg0: i32) -> (i32, i32, i32) {
    %c0_i32 = arith.constant 0 : i32
    %c0_i32_0 = arith.constant 0 : i32
    %c0_i32_1 = arith.constant 0 : i32
    return %arg0, %c0_i32, %c0_i32_0 : i32, i32, i32
  }
  func.func @transform_1(%arg0: i32) -> (i32, i32, i32) {
    %c0_i32 = arith.constant 0 : i32
    %c0_i32_0 = arith.constant 0 : i32
    %c0_i32_1 = arith.constant 0 : i32
    %c0_i32_2 = arith.constant 0 : i32
    return %c0_i32, %c0_i32_0, %c0_i32_1 : i32, i32, i32
  }
  func.func @transform_2(%arg0: i32) -> (i32, i32) {
    %c0_i32 = arith.constant 0 : i32
    %c0_i32_0 = arith.constant 0 : i32
    %c0_i32_1 = arith.constant 0 : i32
    return %c0_i32, %c0_i32_0 : i32, i32
  }
  func.func @transform_3(%arg0: i32) -> (i32, i32) {
    %c0_i32 = arith.constant 0 : i32
    %c0_i32_0 = arith.constant 0 : i32
    %c0_i32_1 = arith.constant 0 : i32
    return %c0_i32, %c0_i32_0 : i32, i32
  }
  func.func @transform_4(%arg0: i32) -> (i32, i32) {
    %c0_i32 = arith.constant 0 : i32
    %c0_i32_0 = arith.constant 0 : i32
    %c0_i32_1 = arith.constant 0 : i32
    return %c0_i32, %c0_i32_0 : i32, i32
  }
  func.func @transform_5(%arg0: i32) -> (i32, i32, i32) {
    %c0_i32 = arith.constant 0 : i32
    %c0_i32_0 = arith.constant 0 : i32
    %c0_i32_1 = arith.constant 0 : i32
    return %arg0, %c0_i32, %c0_i32_0 : i32, i32, i32
  }
  func.func @transform_6(%arg0: i32) -> (i32, i32, i32) {
    %c0_i32 = arith.constant 0 : i32
    %c0_i32_0 = arith.constant 0 : i32
    %c0_i32_1 = arith.constant 0 : i32
    return %arg0, %c0_i32, %c0_i32_0 : i32, i32, i32
  }
}

module attributes {stable_mosaic.version = 11 : i64} {
  func.func @bn_lrelu_kernel(%arg0: i32, %arg1: memref<1x16x128xf32, #tpu.memory_space<vmem>>, %arg2: memref<1x128xf32, #tpu.memory_space<vmem>>, %arg3: memref<1x128xf32, #tpu.memory_space<vmem>>, %arg4: memref<1x16x128xf32, #tpu.memory_space<vmem>>) attributes {dimension_semantics = [#tpu.dimension_semantics<parallel>], iteration_bounds = array<i64: 2>, scalar_prefetch = 0 : i64, scratch_operands = 0 : i64, tpu.core_type = #tpu.core_type<tc>, window_params = [{transform_indices = @transform_0, window_bounds = array<i64: 1, 16, 128>}, {pipeline_mode = #tpu.pipeline_mode<synchronous>, transform_indices = @transform_1, window_bounds = array<i64: 1, 128>}, {pipeline_mode = #tpu.pipeline_mode<synchronous>, transform_indices = @transform_2, window_bounds = array<i64: 1, 128>}, {transform_indices = @transform_3, window_bounds = array<i64: 1, 16, 128>}]} {
    %c0 = arith.constant 0 : index
    %c0_0 = arith.constant 0 : index
    %c0_1 = arith.constant 0 : index
    %0 = vector.load %arg1[%c0, %c0_0, %c0_1] : memref<1x16x128xf32, #tpu.memory_space<vmem>>, vector<1x16x128xf32>
    %1 = vector.shape_cast %0 : vector<1x16x128xf32> to vector<16x128xf32>
    %c0_2 = arith.constant 0 : index
    %c0_3 = arith.constant 0 : index
    %2 = vector.load %arg2[%c0_2, %c0_3] : memref<1x128xf32, #tpu.memory_space<vmem>>, vector<1x128xf32>
    %3 = vector.broadcast %2 : vector<1x128xf32> to vector<16x128xf32>
    %4 = arith.mulf %1, %3 : vector<16x128xf32>
    %c0_4 = arith.constant 0 : index
    %c0_5 = arith.constant 0 : index
    %5 = vector.load %arg3[%c0_4, %c0_5] : memref<1x128xf32, #tpu.memory_space<vmem>>, vector<1x128xf32>
    %6 = vector.broadcast %5 : vector<1x128xf32> to vector<16x128xf32>
    %7 = arith.addf %4, %6 : vector<16x128xf32>
    %cst = arith.constant 0.000000e+00 : f32
    %8 = vector.broadcast %cst : f32 to vector<16x128xf32>
    %9 = arith.cmpf oge, %7, %8 : vector<16x128xf32>
    %cst_6 = arith.constant 0.00999999977 : f32
    %10 = vector.broadcast %cst_6 : f32 to vector<16x128xf32>
    %11 = arith.mulf %10, %7 : vector<16x128xf32>
    %12 = arith.select %9, %7, %11 : vector<16x128xi1>, vector<16x128xf32>
    %c0_7 = arith.constant 0 : index
    %c0_8 = arith.constant 0 : index
    %c0_9 = arith.constant 0 : index
    %13 = vector.load %arg4[%c0_7, %c0_8, %c0_9] : memref<1x16x128xf32, #tpu.memory_space<vmem>>, vector<1x16x128xf32>
    %14 = vector.shape_cast %13 : vector<1x16x128xf32> to vector<16x128xf32>
    %15 = vector.shape_cast %12 : vector<16x128xf32> to vector<1x16x128xf32>
    tpu.vector_store %arg4[%c0_7, %c0_8, %c0_9], %15 {strides = array<i32>} : memref<1x16x128xf32, #tpu.memory_space<vmem>>, vector<1x16x128xf32>,
    return
  }
  func.func @transform_0(%arg0: i32) -> (i32, i32, i32) {
    %c0_i32 = arith.constant 0 : i32
    %c0_i32_0 = arith.constant 0 : i32
    %c0_i32_1 = arith.constant 0 : i32
    return %arg0, %c0_i32, %c0_i32_0 : i32, i32, i32
  }
  func.func @transform_1(%arg0: i32) -> (i32, i32) {
    %c0_i32 = arith.constant 0 : i32
    %c0_i32_0 = arith.constant 0 : i32
    %c0_i32_1 = arith.constant 0 : i32
    return %c0_i32, %c0_i32_0 : i32, i32
  }
  func.func @transform_2(%arg0: i32) -> (i32, i32) {
    %c0_i32 = arith.constant 0 : i32
    %c0_i32_0 = arith.constant 0 : i32
    %c0_i32_1 = arith.constant 0 : i32
    return %c0_i32, %c0_i32_0 : i32, i32
  }
  func.func @transform_3(%arg0: i32) -> (i32, i32, i32) {
    %c0_i32 = arith.constant 0 : i32
    %c0_i32_0 = arith.constant 0 : i32
    %c0_i32_1 = arith.constant 0 : i32
    return %arg0, %c0_i32, %c0_i32_0 : i32, i32, i32
  }
}

</mosaic_0001>

<llo_original>
// kernel: tile.33
$region0: #{tile.33}
  #allocation0 [shape = 's32[1]{0}', space=sflag, size = 0x4, scoped, tag = 'scoped memory for tile.33']
  %s0 = inlined_call_operand.vmem [shape: f32[8], index: 0, kind: input, shape index: {}]
  %s1 = inlined_call_operand.vmem [shape: f32[16,8], index: 1, kind: output, shape index: {}]
  // Predicated region
  $region2: #{tile.33} parent=0 // pred_check
    _
  $region3: #{tile.33} parent=0 // pred_check_branch
    %3 = sbr.rel (0) target = $region5
  $region4: #{tile.33} parent=0 // pred_region
    _
  $region5: #{tile.33} parent=0 // pred_fallthru
    _
  %v4 = vld [vmem:[%s0] ss:$0 sm:$0xff]
  %5 = vst [vmem:[%s1] sm:$0xff] %v4
  %s6 = scalar_lea.vmem %s1, 8
  %7 = vst [vmem:[%s6] sm:$0xff] %v4

// kernel: tile.34
$region0: #{tile.34}
  %s0 = inlined_call_operand.vmem [shape: f32[16,8], index: 0, kind: input, shape index: {}]
  %s1 = inlined_call_operand.vmem [shape: f32[1,128], index: 1, kind: output, shape index: {}]
  $region1: #{tile.34} parent=0
    #allocation0 [shape = 'u8[4096]{0}', space=vmem, size = 0x1000, scoped, tag = 'scoped mem for output reshape']
    %v2 = vld [vmem:[%s0] sm:$0x1]
    %vm3 = vcmask 64512
    %4 = vst.msk [vmem:[#allocation0] sm:$0x1] %vm3, %v2
    %s5 = scalar_lea.vmem %s0, 15
    %v6 = vld [vmem:[%s5] sm:$0x1]
    %7 = vrot.lane.b32.xlu0 %v6, 120
    %v8 = vpop.permute.xlu0 %7
    %vm9 = vcmask 1048512
    %10 = vst.msk [vmem:[#allocation0] sm:$0x1] %vm9, %v8
    %s11 = scalar_lea.vmem %s0, 14
    %v12 = vld [vmem:[%s11] sm:$0x1]
    %13 = vrot.lane.b32.xlu0 %v12, 112
    %v14 = vpop.permute.xlu0 %13
    %vm15 = vcmask 982912
    %16 = vst.msk [vmem:[#allocation0] sm:$0x1] %vm15, %v14
    %s17 = scalar_lea.vmem %s0, 13
    %v18 = vld [vmem:[%s17] sm:$0x1]
    %19 = vrot.lane.b32.xlu0 %v18, 104
    %v20 = vpop.permute.xlu0 %19
    %vm21 = vcmask 917312
    %22 = vst.msk [vmem:[#allocation0] sm:$0x1] %vm21, %v20
    %s23 = scalar_lea.vmem %s0, 12
    %v24 = vld [vmem:[%s23] sm:$0x1]
    %25 = vrot.lane.b32.xlu0 %v24, 96
    %v26 = vpop.permute.xlu0 %25
    %vm27 = vcmask 851712
    %28 = vst.msk [vmem:[#allocation0] sm:$0x1] %vm27, %v26
    %s29 = scalar_lea.vmem %s0, 11
    %v30 = vld [vmem:[%s29] sm:$0x1]
    %31 = vrot.lane.b32.xlu0 %v30, 88
    %v32 = vpop.permute.xlu0 %31
    %vm33 = vcmask 786112
    %34 = vst.msk [vmem:[#allocation0] sm:$0x1] %vm33, %v32
    %s35 = scalar_lea.vmem %s0, 10
    %v36 = vld [vmem:[%s35] sm:$0x1]
    %37 = vrot.lane.b32.xlu0 %v36, 80
    %v38 = vpop.permute.xlu0 %37
    %vm39 = vcmask 720512
    %40 = vst.msk [vmem:[#allocation0] sm:$0x1] %vm39, %v38
    %s41 = scalar_lea.vmem %s0, 9
    %v42 = vld [vmem:[%s41] sm:$0x1]
    %43 = vrot.lane.b32.xlu0 %v42, 72
    %v44 = vpop.permute.xlu0 %43
    %vm45 = vcmask 654912
    %46 = vst.msk [vmem:[#allocation0] sm:$0x1] %vm45, %v44
    %s47 = scalar_lea.vmem %s0, 8
    %v48 = vld [vmem:[%s47] sm:$0x1]
    %49 = vrot.lane.b32.xlu0 %v48, 64
    %v50 = vpop.permute.xlu0 %49
    %vm51 = vcmask 589312
    %52 = vst.msk [vmem:[#allocation0] sm:$0x1] %vm51, %v50
    %s53 = scalar_lea.vmem %s0, 7
    %v54 = vld [vmem:[%s53] sm:$0x1]
    %55 = vrot.lane.b32.xlu0 %v54, 56
    %v56 = vpop.permute.xlu0 %55
    %vm57 = vcmask 523712
    %58 = vst.msk [vmem:[#allocation0] sm:$0x1] %vm57, %v56
    %s59 = scalar_lea.vmem %s0, 6
    %v60 = vld [vmem:[%s59] sm:$0x1]
    %61 = vrot.lane.b32.xlu0 %v60, 48
    %v62 = vpop.permute.xlu0 %61
    %vm63 = vcmask 458112
    %64 = vst.msk [vmem:[#allocation0] sm:$0x1] %vm63, %v62
    %s65 = scalar_lea.vmem %s0, 5
    %v66 = vld [vmem:[%s65] sm:$0x1]
    %67 = vrot.lane.b32.xlu0 %v66, 40
    %v68 = vpop.permute.xlu0 %67
    %vm69 = vcmask 392512
    %70 = vst.msk [vmem:[#allocation0] sm:$0x1] %vm69, %v68
    %s71 = scalar_lea.vmem %s0, 4
    %v72 = vld [vmem:[%s71] sm:$0x1]
    %73 = vrot.lane.b32.xlu0 %v72, 32
    %v74 = vpop.permute.xlu0 %73
    %vm75 = vcmask 326912
    %76 = vst.msk [vmem:[#allocation0] sm:$0x1] %vm75, %v74
    %s77 = scalar_lea.vmem %s0, 3
    %v78 = vld [vmem:[%s77] sm:$0x1]
    %79 = vrot.lane.b32.xlu0 %v78, 24
    %v80 = vpop.permute.xlu0 %79
    %vm81 = vcmask 261312
    %82 = vst.msk [vmem:[#allocation0] sm:$0x1] %vm81, %v80
    %s83 = scalar_lea.vmem %s0, 2
    %v84 = vld [vmem:[%s83] sm:$0x1]
    %85 = vrot.lane.b32.xlu0 %v84, 16
    %v86 = vpop.permute.xlu0 %85
    %vm87 = vcmask 195712
    %88 = vst.msk [vmem:[#allocation0] sm:$0x1] %vm87, %v86
    %s89 = scalar_lea.vmem %s0, 1
    %v90 = vld [vmem:[%s89] sm:$0x1]
    %91 = vrot.lane.b32.xlu0 %v90, 8
    %v92 = vpop.permute.xlu0 %91
    %vm93 = vcmask 130112
    %94 = vst.msk [vmem:[#allocation0] sm:$0x1] %vm93, %v92
    %s96 = sshllo.u32 0, 1
    %v98 = vld [vmem:[#allocation0] sm:%s96]
    %s99 = sshllo.u32 0, 1
    %100 = vst [vmem:[%s1] sm:%s99] %v98

// kernel: conv_block_forward.3
$region0: #{conv_block_forward.3}
  #allocation0 [shape = 'u32[]', space=smem, size = 0x4, offset = 0x4, fixed_abs, tag = 'smem constant byte address 0x4 - core index']
  #allocation1 [shape = 'u32[144,128]{1,0:T(1,128)}', space=vmem, size = 0x12000, scoped, tag = 'internal scratch']
  #allocation2 [shape = 'f32[18,72]{1,0:T(8,128)}', space=vmem, size = 0x3000, scoped, tag = 'scratch operand']
  %s0 = inlined_call_operand.vmem [shape: f32[2,16,64], index: 0, kind: input, shape index: {}]
  %s1 = inlined_call_operand.vmem [shape: f32[9,64,128], index: 1, kind: input, shape index: {}]
  %s2 = inlined_call_operand.vmem [shape: f32[1,128], index: 2, kind: input, shape index: {}]
  %s3 = inlined_call_operand.vmem [shape: f32[2,16,128], index: 3, kind: output, shape index: {0}]
  %s4 = inlined_call_operand.vmem [shape: f32[2,2,128], index: 4, kind: output, shape index: {1}]
  %5 = xla_tuple %s3, %s4
  %s6 = sld [smem:[#allocation0]]
  $region53: #{conv_block_forward.3} parent=0
    _
  %s8 = ssub.s32 1, %s6
  %s9 = scalar_select 0, %s8, %s6
  loop: start=0, step=1, limit=4
  $region2: #{conv_block_forward.3} parent=0 // loop_pre_header
    _
  $region3: #{conv_block_forward.3} parent=0 // loop_header
    %s11 = sphi 0, %s15
    %p12 = scmp.ge.s32.totalorder %s11, 4
    %s21 = sphi 0, %s23
    %s24 = sphi 0, %s21
    %s25 = sphi 0, %s24
    %s41 = sphi 0, %s25
    %s45 = sphi 0, %s45
    %s47 = sphi 0, %s45
    %s48 = sphi 0, %s47
    %s62 = sphi 0, %s48
    %s66 = sphi 0, %s66
    %s68 = sphi 0, %s66
    %s69 = sphi 0, %s68
    %s83 = sphi 0, %s69
    %s89 = sphi 0, %s91
    %s92 = sphi 0, %s89
    %s93 = sphi 0, %s92
    %s109 = sphi 0, %s93
    %s115 = sphi 0, %s117
    %s118 = sphi 0, %s115
    %s119 = sphi 0, %s118
    %s135 = sphi 0, %s119
  $region4: #{conv_block_forward.3} parent=0 // loop_header_branch
    %14 = sbr.rel (%p12) target = $region8
  $region5: #{conv_block_forward.3} parent=0 // loop_body
    %s16 = ssub.s32 %s11, 1
    %s17 = ssub.s32 %s11, 2
    %s18 = sadd.s32 %s11, 1
    %s19 = ssub.s32 %s11, %s18
    %p20 = scmp.eq.s32.totalorder %s19, 0
    %s22 = sadd.s32 %s21, 1
    %s23 = scalar_select %p20, %s21, %s22
    %p26 = pneg %p20
    %p27 = scmp.eq.s32.totalorder %s11, 1
    %p28 = por %p26, %p27
    %p29 = scmp.ne.s32.totalorder %s21, %s24
    %p30 = scmp.eq.s32.totalorder %s11, 0
    %p31 = por %p29, %p30
    %p32 = scmp.ne.s32.totalorder %s21, %s24
    %p33 = scmp.eq.s32.totalorder %s16, 1
    %p34 = por %p32, %p33
    %p35 = scmp.ne.s32.totalorder %s24, %s25
    %p36 = scmp.eq.s32.totalorder %s16, 0
    %p37 = por %p35, %p36
    %p38 = scmp.ne.s32.totalorder %s24, %s25
    %p39 = scmp.eq.s32.totalorder %s17, 1
    %p40 = por %p38, %p39
    %p42 = scmp.ne.s32.totalorder %s25, %s41
    %p43 = scmp.eq.s32.totalorder %s17, 0
    %p44 = por %p42, %p43
    %s46 = sadd.s32 %s45, 1
    %p49 = scmp.eq.s32.totalorder %s11, 1
    %p50 = scmp.ne.s32.totalorder %s45, %s47
    %p51 = scmp.eq.s32.totalorder %s11, 0
    %p52 = por %p50, %p51
    %p53 = scmp.ne.s32.totalorder %s45, %s47
    %p54 = scmp.eq.s32.totalorder %s16, 1
    %p55 = por %p53, %p54
    %p56 = scmp.ne.s32.totalorder %s47, %s48
    %p57 = scmp.eq.s32.totalorder %s16, 0
    %p58 = por %p56, %p57
    %p59 = scmp.ne.s32.totalorder %s47, %s48
    %p60 = scmp.eq.s32.totalorder %s17, 1
    %p61 = por %p59, %p60
    %p63 = scmp.ne.s32.totalorder %s48, %s62
    %p64 = scmp.eq.s32.totalorder %s17, 0
    %p65 = por %p63, %p64
    %s67 = sadd.s32 %s66, 1
    %p70 = scmp.eq.s32.totalorder %s11, 1
    %p71 = scmp.ne.s32.totalorder %s66, %s68
    %p72 = scmp.eq.s32.totalorder %s11, 0
    %p73 = por %p71, %p72
    %p74 = scmp.ne.s32.totalorder %s66, %s68
    %p75 = scmp.eq.s32.totalorder %s16, 1
    %p76 = por %p74, %p75
    %p77 = scmp.ne.s32.totalorder %s68, %s69
    %p78 = scmp.eq.s32.totalorder %s16, 0
    %p79 = por %p77, %p78
    %p80 = scmp.ne.s32.totalorder %s68, %s69
    %p81 = scmp.eq.s32.totalorder %s17, 1
    %p82 = por %p80, %p81
    %p84 = scmp.ne.s32.totalorder %s69, %s83
    %p85 = scmp.eq.s32.totalorder %s17, 0
    %p86 = por %p84, %p85
    %s87 = ssub.s32 %s11, %s18
    %p88 = scmp.eq.s32.totalorder %s87, 0
    %s90 = sadd.s32 %s89, 1
    %s91 = scalar_select %p88, %s89, %s90
    %p94 = pneg %p88
    %p95 = scmp.eq.s32.totalorder %s11, 1
    %p96 = por %p94, %p95
    %p97 = scmp.ne.s32.totalorder %s89, %s92
    %p98 = scmp.eq.s32.totalorder %s11, 0
    %p99 = por %p97, %p98
    %p100 = scmp.ne.s32.totalorder %s89, %s92
    %p101 = scmp.eq.s32.totalorder %s16, 1
    %p102 = por %p100, %p101
    %p103 = scmp.ne.s32.totalorder %s92, %s93
    %p104 = scmp.eq.s32.totalorder %s16, 0
    %p105 = por %p103, %p104
    %p106 = scmp.ne.s32.totalorder %s92, %s93
    %p107 = scmp.eq.s32.totalorder %s17, 1
    %p108 = por %p106, %p107
    %p110 = scmp.ne.s32.totalorder %s93, %s109
    %p111 = scmp.eq.s32.totalorder %s17, 0
    %p112 = por %p110, %p111
    %s113 = ssub.s32 %s11, %s18
    %p114 = scmp.eq.s32.totalorder %s113, 0
    %s116 = sadd.s32 %s115, 1
    %s117 = scalar_select %p114, %s115, %s116
    %p120 = pneg %p114
    %p121 = scmp.eq.s32.totalorder %s11, 1
    %p122 = por %p120, %p121
    %p123 = scmp.ne.s32.totalorder %s115, %s118
    %p124 = scmp.eq.s32.totalorder %s11, 0
    %p125 = por %p123, %p124
    %p126 = scmp.ne.s32.totalorder %s115, %s118
    %p127 = scmp.eq.s32.totalorder %s16, 1
    %p128 = por %p126, %p127
    %p129 = scmp.ne.s32.totalorder %s118, %s119
    %p130 = scmp.eq.s32.totalorder %s16, 0
    %p131 = por %p129, %p130
    %p132 = scmp.ne.s32.totalorder %s118, %s119
    %p133 = scmp.eq.s32.totalorder %s17, 1
    %p134 = por %p132, %p133
    %p136 = scmp.ne.s32.totalorder %s119, %s135
    %p137 = scmp.eq.s32.totalorder %s17, 0
    %p138 = por %p136, %p137
    %p139 = scmp.le.s32.totalorder 1, %s11
    %p140 = scmp.lt.s32.totalorder %s11, 3
    %p141 = pnand %p139, %p140
    %p142 = pneg %p141
    // Predicated region
    $region9: #{conv_block_forward.3} parent=5 // pred_check
      _
    $region10: #{conv_block_forward.3} parent=5 // pred_check_branch
      %144 = sbr.rel (%p141) target = $region12
    $region11: #{conv_block_forward.3} parent=5 // pred_region
      %s145 = ssub.s32 %s11, 1
      // Predicated region
      $region13: #{conv_block_forward.3} parent=11 // pred_check
        %p146 = pneg %p58
      $region14: #{conv_block_forward.3} parent=11 // pred_check_branch
        %148 = sbr.rel (%p146) target = $region16
      $region15: #{conv_block_forward.3} parent=11 // pred_region
        _
      $region16: #{conv_block_forward.3} parent=11 // pred_fallthru
        _
      // Predicated region
      $region17: #{conv_block_forward.3} parent=11 // pred_check
        %p149 = pneg %p79
      $region18: #{conv_block_forward.3} parent=11 // pred_check_branch
        %151 = sbr.rel (%p149) target = $region20
      $region19: #{conv_block_forward.3} parent=11 // pred_region
        _
      $region20: #{conv_block_forward.3} parent=11 // pred_fallthru
        _
    $region12: #{conv_block_forward.3} parent=5 // pred_fallthru
      _
    %p152 = scmp.lt.s32.totalorder %s11, 2
    // Predicated region
    $region21: #{conv_block_forward.3} parent=5 // pred_check
      %p153 = pneg %p152
    $region22: #{conv_block_forward.3} parent=5 // pred_check_branch
      %155 = sbr.rel (%p153) target = $region24
    $region23: #{conv_block_forward.3} parent=5 // pred_region
      // Predicated region
      $region25: #{conv_block_forward.3} parent=23 // pred_check
        %p156 = pneg %p31
      $region26: #{conv_block_forward.3} parent=23 // pred_check_branch
        %158 = sbr.rel (%p156) target = $region28
      $region27: #{conv_block_forward.3} parent=23 // pred_region
        %p159 = scmp.lt.s32.totalorder %s11, 1
        %s160 = scalar_select %p159, %s11, 1
        %s161 = smul.addr %s160, 2
        %s162 = smul.addr %s161, 8
        %s163 = scalar_lea.vmem %s0, %s162
      $region28: #{conv_block_forward.3} parent=23 // pred_fallthru
        _
    $region24: #{conv_block_forward.3} parent=5 // pred_fallthru
      _
    %p164 = scmp.le.s32.totalorder 1, %s11
    %p165 = scmp.lt.s32.totalorder %s11, 3
    %p166 = pnand %p164, %p165
    %p167 = pneg %p166
    // Predicated region
    $region29: #{conv_block_forward.3} parent=5 // pred_check
      _
    $region30: #{conv_block_forward.3} parent=5 // pred_check_branch
      %169 = sbr.rel (%p166) target = $region32
    $region31: #{conv_block_forward.3} parent=5 // pred_region
      %s170 = ssub.s32 %s11, 1
      %p171 = scmp.lt.s32.totalorder %s16, 1
      %s172 = scalar_select %p171, %s16, 1
      %s173 = smul.addr %s172, 2
      %s174 = smul.addr %s173, 8
      %s175 = scalar_lea.vmem %s0, %s174
      %p176 = pneg %p37
      %p177 = pneg %p34
      %p178 = pneg %p58
      %p179 = pneg %p55
      %p180 = pneg %p79
      %p181 = pneg %p76
      %p182 = pneg %p105
      %p183 = pneg %p102
      %p184 = scmp.lt.s32.totalorder %s16, 1
      %s185 = scalar_select %p184, %s16, 1
      %s186 = smul.addr %s185, 2
      %s187 = smul.addr %s186, 8
      %s188 = scalar_lea.vmem %s3, %s187
      %p189 = pneg %p131
      %p190 = pneg %p128
      %p191 = scmp.lt.s32.totalorder %s16, 1
      %s192 = scalar_select %p191, %s16, 1
      %s193 = smul.addr %s192, 2
      %s194 = scalar_lea.vmem %s4, %s193
      %p195 = scmp.lt.s32.totalorder %s16, 1
      %s196 = scalar_select %p195, %s16, 1
      %s197 = smul.addr %s196, 2
      %s198 = smul.addr %s197, 8
      %s199 = scalar_lea.vmem %s0, %s198
      %p200 = scmp.lt.s32.totalorder %s16, 1
      %s201 = scalar_select %p200, %s16, 1
      %s202 = smul.addr %s201, 2
      %s203 = smul.addr %s202, 8
      %s204 = scalar_lea.vmem %s3, %s203
      %p205 = scmp.lt.s32.totalorder %s16, 1
      %s206 = scalar_select %p205, %s16, 1
      %s207 = smul.addr %s206, 2
      %s208 = scalar_lea.vmem %s4, %s207
      %v209 = vld [vmem:[%s199] sm:$0xff]
      %v210 = vld [vmem:[%s199 + $0x8] sm:$0xff]
      %vm211 = vcmask 581632
      %212 = vst.msk [vmem:[#allocation2] sm:$0x1] %vm211, 0.0
      %213 = vst.msk [vmem:[#allocation2 + $0x11] sm:$0x1] %vm211, 0.0
      %216 = vrot.lane.b32.xlu0 %v209, 4
      %v217 = vpop.permute.xlu0 %216
      %218 = vrot.lane.b32.xlu0 %v210, 4
      %v219 = vpop.permute.xlu0 %218
      %vm222 = vcmask 31744
      %v223 = vsel %vm222, 0.0, %v217
      %v224 = vsel %vm222, 0.0, %v219
      %vm225 = vcmask 556032
      %v226 = vsel %vm225, %v223, 0.0
      %v227 = vsel %vm225, %v224, 0.0
      %vm228 = vcmask 588800
      %229 = vst.msk [vmem:[#allocation2 + $0x1] sm:$0xff] %vm228, %v226
      %230 = vst.msk [vmem:[#allocation2 + $0x9] sm:$0xff] %vm228, %v227
      %v231 = vld [vmem:[#allocation2] sm:$0xff]
      %v232 = vld [vmem:[#allocation2 + $0x8] sm:$0xff]
      %v233 = vld [vmem:[%s1] sm:$0xff]
      %v234 = vld [vmem:[%s1 + $0x8] sm:$0xff]
      %v235 = vld [vmem:[%s1 + $0x10] sm:$0xff]
      %v236 = vld [vmem:[%s1 + $0x18] sm:$0xff]
      %v237 = vld [vmem:[%s1 + $0x20] sm:$0xff]
      %v238 = vld [vmem:[%s1 + $0x28] sm:$0xff]
      %v239 = vld [vmem:[%s1 + $0x30] sm:$0xff]
      %v240 = vld [vmem:[%s1 + $0x38] sm:$0xff]
      %s241 = scalar_lea.vmem %s1, 64
      %v242 = vld [vmem:[%s241] sm:$0xff]
      %v243 = vld [vmem:[%s241 + $0x8] sm:$0xff]
      %v244 = vld [vmem:[%s241 + $0x10] sm:$0xff]
      %v245 = vld [vmem:[%s241 + $0x18] sm:$0xff]
      %v246 = vld [vmem:[%s241 + $0x20] sm:$0xff]
      %v247 = vld [vmem:[%s241 + $0x28] sm:$0xff]
      %v248 = vld [vmem:[%s241 + $0x30] sm:$0xff]
      %v249 = vld [vmem:[%s241 + $0x38] sm:$0xff]
      %252 = vrot.lane.b32.xlu0 %v231, 124
      %v253 = vpop.permute.xlu0 %252
      %254 = vrot.lane.b32.xlu0 %v232, 124
      %v255 = vpop.permute.xlu0 %254
      %vm256 = vcmask 523264
      %v257 = vsel %vm256, %v253, 0
      %v259 = vsel %vm256, %v255, 0
      %261 = vmatprep.subr.mxu0 0.0
      %262 = vmatpush1.msra.mxu0 %v242
      %263 = vmatprep.subr.mxu0 0.0
      %264 = vmatpush1.msra.mxu0 %v243
      %265 = vmatprep.subr.mxu0 0.0
      %266 = vmatpush1.msra.mxu0 %v244
      %267 = vmatprep.subr.mxu0 0.0
      %268 = vmatpush1.msra.mxu0 %v245
      %269 = vmatprep.subr.mxu0 0.0
      %270 = vmatpush1.msra.mxu0 %v246
      %271 = vmatprep.subr.mxu0 0.0
      %272 = vmatpush1.msra.mxu0 %v247
      %273 = vmatprep.subr.mxu0 0.0
      %274 = vmatpush1.msra.mxu0 %v248
      %275 = vmatprep.subr.mxu0 0.0
      %276 = vmatpush1.msra.mxu0 %v249
      %277 = vmatprep.subr.mxu0 0.0
      %278 = vmatpush1.msra.mxu0 0.0
      %279 = vmatprep.subr.mxu0 0.0
      %280 = vmatpush1.msra.mxu0 0.0
      %281 = vmatprep.subr.mxu0 0.0
      %282 = vmatpush1.msra.mxu0 0.0
      %283 = vmatprep.subr.mxu0 0.0
      %284 = vmatpush1.msra.mxu0 0.0
      %285 = vmatprep.subr.mxu0 0.0
      %286 = vmatpush1.msra.mxu0 0.0
      %287 = vmatprep.subr.mxu0 0.0
      %288 = vmatpush1.msra.mxu0 0.0
      %289 = vmatprep.subr.mxu0 0.0
      %290 = vmatpush1.msra.mxu0 0.0
      %291 = vmatprep.subr.mxu0 0.0
      %292 = vmatpush1.msra.mxu0 0.0
      %293 = vmatprep.subr.mxu0 0.0
      %294 = vmatpush1.msra.mxu0 0.0
      %295 = vmatprep.subr.mxu0 0.0
      %296 = vmatpush1.msra.mxu0 0.0
      %297 = vmatprep.subr.mxu0 0.0
      %298 = vmatpush1.msra.mxu0 0.0
      %299 = vmatprep.subr.mxu0 0.0
      %300 = vmatpush1.msra.mxu0 0.0
      %301 = vmatprep.subr.mxu0 0.0
      %302 = vmatpush1.msra.mxu0 0.0
      %303 = vmatprep.subr.mxu0 0.0
      %304 = vmatpush1.msra.mxu0 0.0
      %305 = vmatprep.subr.mxu0 0.0
      %306 = vmatpush1.msra.mxu0 0.0
      %307 = vmatprep.subr.mxu0 0.0
      %308 = vmatpush1.msra.mxu0 0.0
      %309 = vmatprep.subr.mxu0 0.0
      %310 = vmatpush1.msra.mxu0 0.0
      %311 = vmatprep.subr.mxu0 0.0
      %312 = vmatpush1.msra.mxu0 0.0
      %313 = vmatprep.subr.mxu0 0.0
      %314 = vmatpush1.msra.mxu0 0.0
      %315 = vmatprep.subr.mxu0 0.0
      %316 = vmatpush1.msra.mxu0 0.0
      %317 = vmatprep.subr.mxu0 0.0
      %318 = vmatpush1.msra.mxu0 0.0
      %319 = vmatprep.subr.mxu0 0.0
      %320 = vmatpush1.msra.mxu0 0.0
      %321 = vmatprep.subr.mxu0 0.0
      %322 = vmatpush1.msra.mxu0 0.0
      %323 = vmatprep.subr.mxu0 0.0
      %324 = vmatpush1.msra.mxu0 0.0
      %325 = vmatprep.mubr.f32.mxu0 0.0
      %326 = vmatmul.mubr.f32.gmra.mrb[0].mxu0 %v257
      %v327 = vpop.f32.mrb[0].mxu0
      %v328 = vadd.f32 0.0, %v327
      %v329 = vpop.f32.mrb[0].mxu0
      %330 = vmatprep.mubr.f32.mxu0 0.0
      %331 = vmatmul.mubr.f32.gmra.mrb[0].mxu0 %v259
      %v332 = vpop.f32.mrb[0].mxu0
      %v333 = vadd.f32 0.0, %v332
      %v334 = vpop.f32.mrb[0].mxu0
      %335 = vdwg.mxu0
      %v336 = vsel %vm256, %v231, 0
      %v338 = vsel %vm256, %v232, 0
      %340 = vmatprep.subr.mxu0 0.0
      %341 = vmatpush1.msra.mxu0 %v233
      %342 = vmatprep.subr.mxu0 0.0
      %343 = vmatpush1.msra.mxu0 %v234
      %344 = vmatprep.subr.mxu0 0.0
      %345 = vmatpush1.msra.mxu0 %v235
      %346 = vmatprep.subr.mxu0 0.0
      %347 = vmatpush1.msra.mxu0 %v236
      %348 = vmatprep.subr.mxu0 0.0
      %349 = vmatpush1.msra.mxu0 %v237
      %350 = vmatprep.subr.mxu0 0.0
      %351 = vmatpush1.msra.mxu0 %v238
      %352 = vmatprep.subr.mxu0 0.0
      %353 = vmatpush1.msra.mxu0 %v239
      %354 = vmatprep.subr.mxu0 0.0
      %355 = vmatpush1.msra.mxu0 %v240
      %356 = vmatprep.subr.mxu0 0.0
      %357 = vmatpush1.msra.mxu0 0.0
      %358 = vmatprep.subr.mxu0 0.0
      %359 = vmatpush1.msra.mxu0 0.0
      %360 = vmatprep.subr.mxu0 0.0
      %361 = vmatpush1.msra.mxu0 0.0
      %362 = vmatprep.subr.mxu0 0.0
      %363 = vmatpush1.msra.mxu0 0.0
      %364 = vmatprep.subr.mxu0 0.0
      %365 = vmatpush1.msra.mxu0 0.0
      %366 = vmatprep.subr.mxu0 0.0
      %367 = vmatpush1.msra.mxu0 0.0
      %368 = vmatprep.subr.mxu0 0.0
      %369 = vmatpush1.msra.mxu0 0.0
      %370 = vmatprep.subr.mxu0 0.0
      %371 = vmatpush1.msra.mxu0 0.0
      %372 = vmatprep.subr.mxu0 0.0
      %373 = vmatpush1.msra.mxu0 0.0
      %374 = vmatprep.subr.mxu0 0.0
      %375 = vmatpush1.msra.mxu0 0.0
      %376 = vmatprep.subr.mxu0 0.0
      %377 = vmatpush1.msra.mxu0 0.0
      %378 = vmatprep.subr.mxu0 0.0
      %379 = vmatpush1.msra.mxu0 0.0
      %380 = vmatprep.subr.mxu0 0.0
      %381 = vmatpush1.msra.mxu0 0.0
      %382 = vmatprep.subr.mxu0 0.0
      %383 = vmatpush1.msra.mxu0 0.0
      %384 = vmatprep.subr.mxu0 0.0
      %385 = vmatpush1.msra.mxu0 0.0
      %386 = vmatprep.subr.mxu0 0.0
      %387 = vmatpush1.msra.mxu0 0.0
      %388 = vmatprep.subr.mxu0 0.0
      %389 = vmatpush1.msra.mxu0 0.0
      %390 = vmatprep.subr.mxu0 0.0
      %391 = vmatpush1.msra.mxu0 0.0
      %392 = vmatprep.subr.mxu0 0.0
      %393 = vmatpush1.msra.mxu0 0.0
      %394 = vmatprep.subr.mxu0 0.0
      %395 = vmatpush1.msra.mxu0 0.0
      %396 = vmatprep.subr.mxu0 0.0
      %397 = vmatpush1.msra.mxu0 0.0
      %398 = vmatprep.subr.mxu0 0.0
      %399 = vmatpush1.msra.mxu0 0.0
      %400 = vmatprep.subr.mxu0 0.0
      %401 = vmatpush1.msra.mxu0 0.0
      %402 = vmatprep.subr.mxu0 0.0
      %403 = vmatpush1.msra.mxu0 0.0
      %404 = vmatprep.mubr.f32.mxu0 0.0
      %405 = vmatmul.mubr.f32.gmra.mrb[0].mxu0 %v336
      %v406 = vpop.f32.mrb[0].mxu0
      %v407 = vadd.f32 %v328, %v406
      %v408 = vpop.f32.mrb[0].mxu0
      %409 = vmatprep.mubr.f32.mxu0 0.0
      %410 = vmatmul.mubr.f32.gmra.mrb[0].mxu0 %v338
      %v411 = vpop.f32.mrb[0].mxu0
      %v412 = vadd.f32 %v333, %v411
      %v413 = vpop.f32.mrb[0].mxu0
      %414 = vdwg.mxu0
      %s415 = scalar_lea.vmem %s1, 128
      %v416 = vld [vmem:[%s415] sm:$0xff]
      %v417 = vld [vmem:[%s415 + $0x8] sm:$0xff]
      %v418 = vld [vmem:[%s415 + $0x10] sm:$0xff]
      %v419 = vld [vmem:[%s415 + $0x18] sm:$0xff]
      %v420 = vld [vmem:[%s415 + $0x20] sm:$0xff]
      %v421 = vld [vmem:[%s415 + $0x28] sm:$0xff]
      %v422 = vld [vmem:[%s415 + $0x30] sm:$0xff]
      %v423 = vld [vmem:[%s415 + $0x38] sm:$0xff]
      %424 = vrot.lane.b32.xlu0 %v231, 120
      %v425 = vpop.permute.xlu0 %424
      %426 = vrot.lane.b32.xlu0 %v232, 120
      %v427 = vpop.permute.xlu0 %426
      %v428 = vsel %vm256, %v425, 0
      %v430 = vsel %vm256, %v427, 0
      %432 = vmatprep.subr.mxu0 0.0
      %433 = vmatpush1.msra.mxu0 %v416
      %434 = vmatprep.subr.mxu0 0.0
      %435 = vmatpush1.msra.mxu0 %v417
      %436 = vmatprep.subr.mxu0 0.0
      %437 = vmatpush1.msra.mxu0 %v418
      %438 = vmatprep.subr.mxu0 0.0
      %439 = vmatpush1.msra.mxu0 %v419
      %440 = vmatprep.subr.mxu0 0.0
      %441 = vmatpush1.msra.mxu0 %v420
      %442 = vmatprep.subr.mxu0 0.0
      %443 = vmatpush1.msra.mxu0 %v421
      %444 = vmatprep.subr.mxu0 0.0
      %445 = vmatpush1.msra.mxu0 %v422
      %446 = vmatprep.subr.mxu0 0.0
      %447 = vmatpush1.msra.mxu0 %v423
      %448 = vmatprep.subr.mxu0 0.0
      %449 = vmatpush1.msra.mxu0 0.0
      %450 = vmatprep.subr.mxu0 0.0
      %451 = vmatpush1.msra.mxu0 0.0
      %452 = vmatprep.subr.mxu0 0.0
      %453 = vmatpush1.msra.mxu0 0.0
      %454 = vmatprep.subr.mxu0 0.0
      %455 = vmatpush1.msra.mxu0 0.0
      %456 = vmatprep.subr.mxu0 0.0
      %457 = vmatpush1.msra.mxu0 0.0
      %458 = vmatprep.subr.mxu0 0.0
      %459 = vmatpush1.msra.mxu0 0.0
      %460 = vmatprep.subr.mxu0 0.0
      %461 = vmatpush1.msra.mxu0 0.0
      %462 = vmatprep.subr.mxu0 0.0
      %463 = vmatpush1.msra.mxu0 0.0
      %464 = vmatprep.subr.mxu0 0.0
      %465 = vmatpush1.msra.mxu0 0.0
      %466 = vmatprep.subr.mxu0 0.0
      %467 = vmatpush1.msra.mxu0 0.0
      %468 = vmatprep.subr.mxu0 0.0
      %469 = vmatpush1.msra.mxu0 0.0
      %470 = vmatprep.subr.mxu0 0.0
      %471 = vmatpush1.msra.mxu0 0.0
      %472 = vmatprep.subr.mxu0 0.0
      %473 = vmatpush1.msra.mxu0 0.0
      %474 = vmatprep.subr.mxu0 0.0
      %475 = vmatpush1.msra.mxu0 0.0
      %476 = vmatprep.subr.mxu0 0.0
      %477 = vmatpush1.msra.mxu0 0.0
      %478 = vmatprep.subr.mxu0 0.0
      %479 = vmatpush1.msra.mxu0 0.0
      %480 = vmatprep.subr.mxu0 0.0
      %481 = vmatpush1.msra.mxu0 0.0
      %482 = vmatprep.subr.mxu0 0.0
      %483 = vmatpush1.msra.mxu0 0.0
      %484 = vmatprep.subr.mxu0 0.0
      %485 = vmatpush1.msra.mxu0 0.0
      %486 = vmatprep.subr.mxu0 0.0
      %487 = vmatpush1.msra.mxu0 0.0
      %488 = vmatprep.subr.mxu0 0.0
      %489 = vmatpush1.msra.mxu0 0.0
      %490 = vmatprep.subr.mxu0 0.0
      %491 = vmatpush1.msra.mxu0 0.0
      %492 = vmatprep.subr.mxu0 0.0
      %493 = vmatpush1.msra.mxu0 0.0
      %494 = vmatprep.subr.mxu0 0.0
      %495 = vmatpush1.msra.mxu0 0.0
      %496 = vmatprep.mubr.f32.mxu0 0.0
      %497 = vmatmul.mubr.f32.gmra.mrb[0].mxu0 %v428
      %v498 = vpop.f32.mrb[0].mxu0
      %v499 = vadd.f32 0.0, %v498
      %v500 = vpop.f32.mrb[0].mxu0
      %501 = vmatprep.mubr.f32.mxu0 0.0
      %502 = vmatmul.mubr.f32.gmra.mrb[0].mxu0 %v430
      %v503 = vpop.f32.mrb[0].mxu0
      %v504 = vadd.f32 0.0, %v503
      %v505 = vpop.f32.mrb[0].mxu0
      %506 = vdwg.mxu0
      %v507 = vadd.f32 %v407, %v499
      %v508 = vadd.f32 %v412, %v504
      %v509 = vld [vmem:[#allocation2 + $0x1] sm:$0xff]
      %v510 = vld [vmem:[#allocation2 + $0x9] sm:$0xff]
      %s511 = scalar_lea.vmem %s1, 192
      %v512 = vld [vmem:[%s511] sm:$0xff]
      %v513 = vld [vmem:[%s511 + $0x8] sm:$0xff]
      %v514 = vld [vmem:[%s511 + $0x10] sm:$0xff]
      %v515 = vld [vmem:[%s511 + $0x18] sm:$0xff]
      %v516 = vld [vmem:[%s511 + $0x20] sm:$0xff]
      %v517 = vld [vmem:[%s511 + $0x28] sm:$0xff]
      %v518 = vld [vmem:[%s511 + $0x30] sm:$0xff]
      %v519 = vld [vmem:[%s511 + $0x38] sm:$0xff]
      %v521 = vsel %vm256, %v509, 0
      %v524 = vsel %vm256, %v510, 0
      %526 = vmatprep.subr.mxu0 0.0
      %527 = vmatpush1.msra.mxu0 %v512
      %528 = vmatprep.subr.mxu0 0.0
      %529 = vmatpush1.msra.mxu0 %v513
      %530 = vmatprep.subr.mxu0 0.0
      %531 = vmatpush1.msra.mxu0 %v514
      %532 = vmatprep.subr.mxu0 0.0
      %533 = vmatpush1.msra.mxu0 %v515
      %534 = vmatprep.subr.mxu0 0.0
      %535 = vmatpush1.msra.mxu0 %v516
      %536 = vmatprep.subr.mxu0 0.0
      %537 = vmatpush1.msra.mxu0 %v517
      %538 = vmatprep.subr.mxu0 0.0
      %539 = vmatpush1.msra.mxu0 %v518
      %540 = vmatprep.subr.mxu0 0.0
      %541 = vmatpush1.msra.mxu0 %v519
      %542 = vmatprep.subr.mxu0 0.0
      %543 = vmatpush1.msra.mxu0 0.0
      %544 = vmatprep.subr.mxu0 0.0
      %545 = vmatpush1.msra.mxu0 0.0
      %546 = vmatprep.subr.mxu0 0.0
      %547 = vmatpush1.msra.mxu0 0.0
      %548 = vmatprep.subr.mxu0 0.0
      %549 = vmatpush1.msra.mxu0 0.0
      %550 = vmatprep.subr.mxu0 0.0
      %551 = vmatpush1.msra.mxu0 0.0
      %552 = vmatprep.subr.mxu0 0.0
      %553 = vmatpush1.msra.mxu0 0.0
      %554 = vmatprep.subr.mxu0 0.0
      %555 = vmatpush1.msra.mxu0 0.0
      %556 = vmatprep.subr.mxu0 0.0
      %557 = vmatpush1.msra.mxu0 0.0
      %558 = vmatprep.subr.mxu0 0.0
      %559 = vmatpush1.msra.mxu0 0.0
      %560 = vmatprep.subr.mxu0 0.0
      %561 = vmatpush1.msra.mxu0 0.0
      %562 = vmatprep.subr.mxu0 0.0
      %563 = vmatpush1.msra.mxu0 0.0
      %564 = vmatprep.subr.mxu0 0.0
      %565 = vmatpush1.msra.mxu0 0.0
      %566 = vmatprep.subr.mxu0 0.0
      %567 = vmatpush1.msra.mxu0 0.0
      %568 = vmatprep.subr.mxu0 0.0
      %569 = vmatpush1.msra.mxu0 0.0
      %570 = vmatprep.subr.mxu0 0.0
      %571 = vmatpush1.msra.mxu0 0.0
      %572 = vmatprep.subr.mxu0 0.0
      %573 = vmatpush1.msra.mxu0 0.0
      %574 = vmatprep.subr.mxu0 0.0
      %575 = vmatpush1.msra.mxu0 0.0
      %576 = vmatprep.subr.mxu0 0.0
      %577 = vmatpush1.msra.mxu0 0.0
      %578 = vmatprep.subr.mxu0 0.0
      %579 = vmatpush1.msra.mxu0 0.0
      %580 = vmatprep.subr.mxu0 0.0
      %581 = vmatpush1.msra.mxu0 0.0
      %582 = vmatprep.subr.mxu0 0.0
      %583 = vmatpush1.msra.mxu0 0.0
      %584 = vmatprep.subr.mxu0 0.0
      %585 = vmatpush1.msra.mxu0 0.0
      %586 = vmatprep.subr.mxu0 0.0
      %587 = vmatpush1.msra.mxu0 0.0
      %588 = vmatprep.subr.mxu0 0.0
      %589 = vmatpush1.msra.mxu0 0.0
      %590 = vmatprep.mubr.f32.mxu0 0.0
      %591 = vmatmul.mubr.f32.gmra.mrb[0].mxu0 %v521
      %v592 = vpop.f32.mrb[0].mxu0
      %v593 = vadd.f32 0.0, %v592
      %v594 = vpop.f32.mrb[0].mxu0
      %595 = vmatprep.mubr.f32.mxu0 0.0
      %596 = vmatmul.mubr.f32.gmra.mrb[0].mxu0 %v524
      %v597 = vpop.f32.mrb[0].mxu0
      %v598 = vadd.f32 0.0, %v597
      %v599 = vpop.f32.mrb[0].mxu0
      %600 = vdwg.mxu0
      %v601 = vadd.f32 %v507, %v593
      %v602 = vadd.f32 %v508, %v598
      %s603 = scalar_lea.vmem %s1, 256
      %v604 = vld [vmem:[%s603] sm:$0xff]
      %v605 = vld [vmem:[%s603 + $0x8] sm:$0xff]
      %v606 = vld [vmem:[%s603 + $0x10] sm:$0xff]
      %v607 = vld [vmem:[%s603 + $0x18] sm:$0xff]
      %v608 = vld [vmem:[%s603 + $0x20] sm:$0xff]
      %v609 = vld [vmem:[%s603 + $0x28] sm:$0xff]
      %v610 = vld [vmem:[%s603 + $0x30] sm:$0xff]
      %v611 = vld [vmem:[%s603 + $0x38] sm:$0xff]
      %612 = vrot.lane.b32.xlu0 %v509, 124
      %v613 = vpop.permute.xlu0 %612
      %614 = vrot.lane.b32.xlu0 %v510, 124
      %v615 = vpop.permute.xlu0 %614
      %v616 = vsel %vm256, %v613, 0
      %v618 = vsel %vm256, %v615, 0
      %620 = vmatprep.subr.mxu0 0.0
      %621 = vmatpush1.msra.mxu0 %v604
      %622 = vmatprep.subr.mxu0 0.0
      %623 = vmatpush1.msra.mxu0 %v605
      %624 = vmatprep.subr.mxu0 0.0
      %625 = vmatpush1.msra.mxu0 %v606
      %626 = vmatprep.subr.mxu0 0.0
      %627 = vmatpush1.msra.mxu0 %v607
      %628 = vmatprep.subr.mxu0 0.0
      %629 = vmatpush1.msra.mxu0 %v608
      %630 = vmatprep.subr.mxu0 0.0
      %631 = vmatpush1.msra.mxu0 %v609
      %632 = vmatprep.subr.mxu0 0.0
      %633 = vmatpush1.msra.mxu0 %v610
      %634 = vmatprep.subr.mxu0 0.0
      %635 = vmatpush1.msra.mxu0 %v611
      %636 = vmatprep.subr.mxu0 0.0
      %637 = vmatpush1.msra.mxu0 0.0
      %638 = vmatprep.subr.mxu0 0.0
      %639 = vmatpush1.msra.mxu0 0.0
      %640 = vmatprep.subr.mxu0 0.0
      %641 = vmatpush1.msra.mxu0 0.0
      %642 = vmatprep.subr.mxu0 0.0
      %643 = vmatpush1.msra.mxu0 0.0
      %644 = vmatprep.subr.mxu0 0.0
      %645 = vmatpush1.msra.mxu0 0.0
      %646 = vmatprep.subr.mxu0 0.0
      %647 = vmatpush1.msra.mxu0 0.0
      %648 = vmatprep.subr.mxu0 0.0
      %649 = vmatpush1.msra.mxu0 0.0
      %650 = vmatprep.subr.mxu0 0.0
      %651 = vmatpush1.msra.mxu0 0.0
      %652 = vmatprep.subr.mxu0 0.0
      %653 = vmatpush1.msra.mxu0 0.0
      %654 = vmatprep.subr.mxu0 0.0
      %655 = vmatpush1.msra.mxu0 0.0
      %656 = vmatprep.subr.mxu0 0.0
      %657 = vmatpush1.msra.mxu0 0.0
      %658 = vmatprep.subr.mxu0 0.0
      %659 = vmatpush1.msra.mxu0 0.0
      %660 = vmatprep.subr.mxu0 0.0
      %661 = vmatpush1.msra.mxu0 0.0
      %662 = vmatprep.subr.mxu0 0.0
      %663 = vmatpush1.msra.mxu0 0.0
      %664 = vmatprep.subr.mxu0 0.0
      %665 = vmatpush1.msra.mxu0 0.0
      %666 = vmatprep.subr.mxu0 0.0
      %667 = vmatpush1.msra.mxu0 0.0
      %668 = vmatprep.subr.mxu0 0.0
      %669 = vmatpush1.msra.mxu0 0.0
      %670 = vmatprep.subr.mxu0 0.0
      %671 = vmatpush1.msra.mxu0 0.0
      %672 = vmatprep.subr.mxu0 0.0
      %673 = vmatpush1.msra.mxu0 0.0
      %674 = vmatprep.subr.mxu0 0.0
      %675 = vmatpush1.msra.mxu0 0.0
      %676 = vmatprep.subr.mxu0 0.0
      %677 = vmatpush1.msra.mxu0 0.0
      %678 = vmatprep.subr.mxu0 0.0
      %679 = vmatpush1.msra.mxu0 0.0
      %680 = vmatprep.subr.mxu0 0.0
      %681 = vmatpush1.msra.mxu0 0.0
      %682 = vmatprep.subr.mxu0 0.0
      %683 = vmatpush1.msra.mxu0 0.0
      %684 = vmatprep.mubr.f32.mxu0 0.0
      %685 = vmatmul.mubr.f32.gmra.mrb[0].mxu0 %v616
      %v686 = vpop.f32.mrb[0].mxu0
      %v687 = vadd.f32 0.0, %v686
      %v688 = vpop.f32.mrb[0].mxu0
      %689 = vmatprep.mubr.f32.mxu0 0.0
      %690 = vmatmul.mubr.f32.gmra.mrb[0].mxu0 %v618
      %v691 = vpop.f32.mrb[0].mxu0
      %v692 = vadd.f32 0.0, %v691
      %v693 = vpop.f32.mrb[0].mxu0
      %694 = vdwg.mxu0
      %v695 = vadd.f32 %v601, %v687
      %v696 = vadd.f32 %v602, %v692
      %s697 = scalar_lea.vmem %s1, 320
      %v698 = vld [vmem:[%s697] sm:$0xff]
      %v699 = vld [vmem:[%s697 + $0x8] sm:$0xff]
      %v700 = vld [vmem:[%s697 + $0x10] sm:$0xff]
      %v701 = vld [vmem:[%s697 + $0x18] sm:$0xff]
      %v702 = vld [vmem:[%s697 + $0x20] sm:$0xff]
      %v703 = vld [vmem:[%s697 + $0x28] sm:$0xff]
      %v704 = vld [vmem:[%s697 + $0x30] sm:$0xff]
      %v705 = vld [vmem:[%s697 + $0x38] sm:$0xff]
      %706 = vrot.lane.b32.xlu0 %v509, 120
      %v707 = vpop.permute.xlu0 %706
      %708 = vrot.lane.b32.xlu0 %v510, 120
      %v709 = vpop.permute.xlu0 %708
      %v710 = vsel %vm256, %v707, 0
      %v712 = vsel %vm256, %v709, 0
      %714 = vmatprep.subr.mxu0 0.0
      %715 = vmatpush1.msra.mxu0 %v698
      %716 = vmatprep.subr.mxu0 0.0
      %717 = vmatpush1.msra.mxu0 %v699
      %718 = vmatprep.subr.mxu0 0.0
      %719 = vmatpush1.msra.mxu0 %v700
      %720 = vmatprep.subr.mxu0 0.0
      %721 = vmatpush1.msra.mxu0 %v701
      %722 = vmatprep.subr.mxu0 0.0
      %723 = vmatpush1.msra.mxu0 %v702
      %724 = vmatprep.subr.mxu0 0.0
      %725 = vmatpush1.msra.mxu0 %v703
      %726 = vmatprep.subr.mxu0 0.0
      %727 = vmatpush1.msra.mxu0 %v704
      %728 = vmatprep.subr.mxu0 0.0
      %729 = vmatpush1.msra.mxu0 %v705
      %730 = vmatprep.subr.mxu0 0.0
      %731 = vmatpush1.msra.mxu0 0.0
      %732 = vmatprep.subr.mxu0 0.0
      %733 = vmatpush1.msra.mxu0 0.0
      %734 = vmatprep.subr.mxu0 0.0
      %735 = vmatpush1.msra.mxu0 0.0
      %736 = vmatprep.subr.mxu0 0.0
      %737 = vmatpush1.msra.mxu0 0.0
      %738 = vmatprep.subr.mxu0 0.0
      %739 = vmatpush1.msra.mxu0 0.0
      %740 = vmatprep.subr.mxu0 0.0
      %741 = vmatpush1.msra.mxu0 0.0
      %742 = vmatprep.subr.mxu0 0.0
      %743 = vmatpush1.msra.mxu0 0.0
      %744 = vmatprep.subr.mxu0 0.0
      %745 = vmatpush1.msra.mxu0 0.0
      %746 = vmatprep.subr.mxu0 0.0
      %747 = vmatpush1.msra.mxu0 0.0
      %748 = vmatprep.subr.mxu0 0.0
      %749 = vmatpush1.msra.mxu0 0.0
      %750 = vmatprep.subr.mxu0 0.0
      %751 = vmatpush1.msra.mxu0 0.0
      %752 = vmatprep.subr.mxu0 0.0
      %753 = vmatpush1.msra.mxu0 0.0
      %754 = vmatprep.subr.mxu0 0.0
      %755 = vmatpush1.msra.mxu0 0.0
      %756 = vmatprep.subr.mxu0 0.0
      %757 = vmatpush1.msra.mxu0 0.0
      %758 = vmatprep.subr.mxu0 0.0
      %759 = vmatpush1.msra.mxu0 0.0
      %760 = vmatprep.subr.mxu0 0.0
      %761 = vmatpush1.msra.mxu0 0.0
      %762 = vmatprep.subr.mxu0 0.0
      %763 = vmatpush1.msra.mxu0 0.0
      %764 = vmatprep.subr.mxu0 0.0
      %765 = vmatpush1.msra.mxu0 0.0
      %766 = vmatprep.subr.mxu0 0.0
      %767 = vmatpush1.msra.mxu0 0.0
      %768 = vmatprep.subr.mxu0 0.0
      %769 = vmatpush1.msra.mxu0 0.0
      %770 = vmatprep.subr.mxu0 0.0
      %771 = vmatpush1.msra.mxu0 0.0
      %772 = vmatprep.subr.mxu0 0.0
      %773 = vmatpush1.msra.mxu0 0.0
      %774 = vmatprep.subr.mxu0 0.0
      %775 = vmatpush1.msra.mxu0 0.0
      %776 = vmatprep.subr.mxu0 0.0
      %777 = vmatpush1.msra.mxu0 0.0
      %778 = vmatprep.mubr.f32.mxu0 0.0
      %779 = vmatmul.mubr.f32.gmra.mrb[0].mxu0 %v710
      %v780 = vpop.f32.mrb[0].mxu0
      %v781 = vadd.f32 0.0, %v780
      %v782 = vpop.f32.mrb[0].mxu0
      %783 = vmatprep.mubr.f32.mxu0 0.0
      %784 = vmatmul.mubr.f32.gmra.mrb[0].mxu0 %v712
      %v785 = vpop.f32.mrb[0].mxu0
      %v786 = vadd.f32 0.0, %v785
      %v787 = vpop.f32.mrb[0].mxu0
      %788 = vdwg.mxu0
      %v789 = vadd.f32 %v695, %v781
      %v790 = vadd.f32 %v696, %v786
      %v791 = vld [vmem:[#allocation2 + $0x2] sm:$0xff]
      %v792 = vld [vmem:[#allocation2 + $0xa] sm:$0xff]
      %s793 = scalar_lea.vmem %s1, 384
      %v794 = vld [vmem:[%s793] sm:$0xff]
      %v795 = vld [vmem:[%s793 + $0x8] sm:$0xff]
      %v796 = vld [vmem:[%s793 + $0x10] sm:$0xff]
      %v797 = vld [vmem:[%s793 + $0x18] sm:$0xff]
      %v798 = vld [vmem:[%s793 + $0x20] sm:$0xff]
      %v799 = vld [vmem:[%s793 + $0x28] sm:$0xff]
      %v800 = vld [vmem:[%s793 + $0x30] sm:$0xff]
      %v801 = vld [vmem:[%s793 + $0x38] sm:$0xff]
      %v803 = vsel %vm256, %v791, 0
      %v806 = vsel %vm256, %v792, 0
      %808 = vmatprep.subr.mxu0 0.0
      %809 = vmatpush1.msra.mxu0 %v794
      %810 = vmatprep.subr.mxu0 0.0
      %811 = vmatpush1.msra.mxu0 %v795
      %812 = vmatprep.subr.mxu0 0.0
      %813 = vmatpush1.msra.mxu0 %v796
      %814 = vmatprep.subr.mxu0 0.0
      %815 = vmatpush1.msra.mxu0 %v797
      %816 = vmatprep.subr.mxu0 0.0
      %817 = vmatpush1.msra.mxu0 %v798
      %818 = vmatprep.subr.mxu0 0.0
      %819 = vmatpush1.msra.mxu0 %v799
      %820 = vmatprep.subr.mxu0 0.0
      %821 = vmatpush1.msra.mxu0 %v800
      %822 = vmatprep.subr.mxu0 0.0
      %823 = vmatpush1.msra.mxu0 %v801
      %824 = vmatprep.subr.mxu0 0.0
      %825 = vmatpush1.msra.mxu0 0.0
      %826 = vmatprep.subr.mxu0 0.0
      %827 = vmatpush1.msra.mxu0 0.0
      %828 = vmatprep.subr.mxu0 0.0
      %829 = vmatpush1.msra.mxu0 0.0
      %830 = vmatprep.subr.mxu0 0.0
      %831 = vmatpush1.msra.mxu0 0.0
      %832 = vmatprep.subr.mxu0 0.0
      %833 = vmatpush1.msra.mxu0 0.0
      %834 = vmatprep.subr.mxu0 0.0
      %835 = vmatpush1.msra.mxu0 0.0
      %836 = vmatprep.subr.mxu0 0.0
      %837 = vmatpush1.msra.mxu0 0.0
      %838 = vmatprep.subr.mxu0 0.0
      %839 = vmatpush1.msra.mxu0 0.0
      %840 = vmatprep.subr.mxu0 0.0
      %841 = vmatpush1.msra.mxu0 0.0
      %842 = vmatprep.subr.mxu0 0.0
      %843 = vmatpush1.msra.mxu0 0.0
      %844 = vmatprep.subr.mxu0 0.0
      %845 = vmatpush1.msra.mxu0 0.0
      %846 = vmatprep.subr.mxu0 0.0
      %847 = vmatpush1.msra.mxu0 0.0
      %848 = vmatprep.subr.mxu0 0.0
      %849 = vmatpush1.msra.mxu0 0.0
      %850 = vmatprep.subr.mxu0 0.0
      %851 = vmatpush1.msra.mxu0 0.0
      %852 = vmatprep.subr.mxu0 0.0
      %853 = vmatpush1.msra.mxu0 0.0
      %854 = vmatprep.subr.mxu0 0.0
      %855 = vmatpush1.msra.mxu0 0.0
      %856 = vmatprep.subr.mxu0 0.0
      %857 = vmatpush1.msra.mxu0 0.0
      %858 = vmatprep.subr.mxu0 0.0
      %859 = vmatpush1.msra.mxu0 0.0
      %860 = vmatprep.subr.mxu0 0.0
      %861 = vmatpush1.msra.mxu0 0.0
      %862 = vmatprep.subr.mxu0 0.0
      %863 = vmatpush1.msra.mxu0 0.0
      %864 = vmatprep.subr.mxu0 0.0
      %865 = vmatpush1.msra.mxu0 0.0
      %866 = vmatprep.subr.mxu0 0.0
      %867 = vmatpush1.msra.mxu0 0.0
      %868 = vmatprep.subr.mxu0 0.0
      %869 = vmatpush1.msra.mxu0 0.0
      %870 = vmatprep.subr.mxu0 0.0
      %871 = vmatpush1.msra.mxu0 0.0
      %872 = vmatprep.mubr.f32.mxu0 0.0
      %873 = vmatmul.mubr.f32.gmra.mrb[0].mxu0 %v803
      %v874 = vpop.f32.mrb[0].mxu0
      %v875 = vadd.f32 0.0, %v874
      %v876 = vpop.f32.mrb[0].mxu0
      %877 = vmatprep.mubr.f32.mxu0 0.0
      %878 = vmatmul.mubr.f32.gmra.mrb[0].mxu0 %v806
      %v879 = vpop.f32.mrb[0].mxu0
      %v880 = vadd.f32 0.0, %v879
      %v881 = vpop.f32.mrb[0].mxu0
      %882 = vdwg.mxu0
      %v883 = vadd.f32 %v789, %v875
      %v884 = vadd.f32 %v790, %v880
      %s885 = scalar_lea.vmem %s1, 448
      %v886 = vld [vmem:[%s885] sm:$0xff]
      %v887 = vld [vmem:[%s885 + $0x8] sm:$0xff]
      %v888 = vld [vmem:[%s885 + $0x10] sm:$0xff]
      %v889 = vld [vmem:[%s885 + $0x18] sm:$0xff]
      %v890 = vld [vmem:[%s885 + $0x20] sm:$0xff]
      %v891 = vld [vmem:[%s885 + $0x28] sm:$0xff]
      %v892 = vld [vmem:[%s885 + $0x30] sm:$0xff]
      %v893 = vld [vmem:[%s885 + $0x38] sm:$0xff]
      %894 = vrot.lane.b32.xlu0 %v791, 124
      %v895 = vpop.permute.xlu0 %894
      %896 = vrot.lane.b32.xlu0 %v792, 124
      %v897 = vpop.permute.xlu0 %896
      %v898 = vsel %vm256, %v895, 0
      %v900 = vsel %vm256, %v897, 0
      %902 = vmatprep.subr.mxu0 0.0
      %903 = vmatpush1.msra.mxu0 %v886
      %904 = vmatprep.subr.mxu0 0.0
      %905 = vmatpush1.msra.mxu0 %v887
      %906 = vmatprep.subr.mxu0 0.0
      %907 = vmatpush1.msra.mxu0 %v888
      %908 = vmatprep.subr.mxu0 0.0
      %909 = vmatpush1.msra.mxu0 %v889
      %910 = vmatprep.subr.mxu0 0.0
      %911 = vmatpush1.msra.mxu0 %v890
      %912 = vmatprep.subr.mxu0 0.0
      %913 = vmatpush1.msra.mxu0 %v891
      %914 = vmatprep.subr.mxu0 0.0
      %915 = vmatpush1.msra.mxu0 %v892
      %916 = vmatprep.subr.mxu0 0.0
      %917 = vmatpush1.msra.mxu0 %v893
      %918 = vmatprep.subr.mxu0 0.0
      %919 = vmatpush1.msra.mxu0 0.0
      %920 = vmatprep.subr.mxu0 0.0
      %921 = vmatpush1.msra.mxu0 0.0
      %922 = vmatprep.subr.mxu0 0.0
      %923 = vmatpush1.msra.mxu0 0.0
      %924 = vmatprep.subr.mxu0 0.0
      %925 = vmatpush1.msra.mxu0 0.0
      %926 = vmatprep.subr.mxu0 0.0
      %927 = vmatpush1.msra.mxu0 0.0
      %928 = vmatprep.subr.mxu0 0.0
      %929 = vmatpush1.msra.mxu0 0.0
      %930 = vmatprep.subr.mxu0 0.0
      %931 = vmatpush1.msra.mxu0 0.0
      %932 = vmatprep.subr.mxu0 0.0
      %933 = vmatpush1.msra.mxu0 0.0
      %934 = vmatprep.subr.mxu0 0.0
      %935 = vmatpush1.msra.mxu0 0.0
      %936 = vmatprep.subr.mxu0 0.0
      %937 = vmatpush1.msra.mxu0 0.0
      %938 = vmatprep.subr.mxu0 0.0
      %939 = vmatpush1.msra.mxu0 0.0
      %940 = vmatprep.subr.mxu0 0.0
      %941 = vmatpush1.msra.mxu0 0.0
      %942 = vmatprep.subr.mxu0 0.0
      %943 = vmatpush1.msra.mxu0 0.0
      %944 = vmatprep.subr.mxu0 0.0
      %945 = vmatpush1.msra.mxu0 0.0
      %946 = vmatprep.subr.mxu0 0.0
      %947 = vmatpush1.msra.mxu0 0.0
      %948 = vmatprep.subr.mxu0 0.0
      %949 = vmatpush1.msra.mxu0 0.0
      %950 = vmatprep.subr.mxu0 0.0
      %951 = vmatpush1.msra.mxu0 0.0
      %952 = vmatprep.subr.mxu0 0.0
      %953 = vmatpush1.msra.mxu0 0.0
      %954 = vmatprep.subr.mxu0 0.0
      %955 = vmatpush1.msra.mxu0 0.0
      %956 = vmatprep.subr.mxu0 0.0
      %957 = vmatpush1.msra.mxu0 0.0
      %958 = vmatprep.subr.mxu0 0.0
      %959 = vmatpush1.msra.mxu0 0.0
      %960 = vmatprep.subr.mxu0 0.0
      %961 = vmatpush1.msra.mxu0 0.0
      %962 = vmatprep.subr.mxu0 0.0
      %963 = vmatpush1.msra.mxu0 0.0
      %964 = vmatprep.subr.mxu0 0.0
      %965 = vmatpush1.msra.mxu0 0.0
      %966 = vmatprep.mubr.f32.mxu0 0.0
      %967 = vmatmul.mubr.f32.gmra.mrb[0].mxu0 %v898
      %v968 = vpop.f32.mrb[0].mxu0
      %v969 = vadd.f32 0.0, %v968
      %v970 = vpop.f32.mrb[0].mxu0
      %971 = vmatprep.mubr.f32.mxu0 0.0
      %972 = vmatmul.mubr.f32.gmra.mrb[0].mxu0 %v900
      %v973 = vpop.f32.mrb[0].mxu0
      %v974 = vadd.f32 0.0, %v973
      %v975 = vpop.f32.mrb[0].mxu0
      %976 = vdwg.mxu0
      %v977 = vadd.f32 %v883, %v969
      %v978 = vadd.f32 %v884, %v974
      %s979 = scalar_lea.vmem %s1, 512
      %v980 = vld [vmem:[%s979] sm:$0xff]
      %v981 = vld [vmem:[%s979 + $0x8] sm:$0xff]
      %v982 = vld [vmem:[%s979 + $0x10] sm:$0xff]
      %v983 = vld [vmem:[%s979 + $0x18] sm:$0xff]
      %v984 = vld [vmem:[%s979 + $0x20] sm:$0xff]
      %v985 = vld [vmem:[%s979 + $0x28] sm:$0xff]
      %v986 = vld [vmem:[%s979 + $0x30] sm:$0xff]
      %v987 = vld [vmem:[%s979 + $0x38] sm:$0xff]
      %988 = vrot.lane.b32.xlu0 %v791, 120
      %v989 = vpop.permute.xlu0 %988
      %990 = vrot.lane.b32.xlu0 %v792, 120
      %v991 = vpop.permute.xlu0 %990
      %v992 = vsel %vm256, %v989, 0
      %v994 = vsel %vm256, %v991, 0
      %996 = vmatprep.subr.mxu0 0.0
      %997 = vmatpush1.msra.mxu0 %v980
      %998 = vmatprep.subr.mxu0 0.0
      %999 = vmatpush1.msra.mxu0 %v981
      %1000 = vmatprep.subr.mxu0 0.0
      %1001 = vmatpush1.msra.mxu0 %v982
      %1002 = vmatprep.subr.mxu0 0.0
      %1003 = vmatpush1.msra.mxu0 %v983
      %1004 = vmatprep.subr.mxu0 0.0
      %1005 = vmatpush1.msra.mxu0 %v984
      %1006 = vmatprep.subr.mxu0 0.0
      %1007 = vmatpush1.msra.mxu0 %v985
      %1008 = vmatprep.subr.mxu0 0.0
      %1009 = vmatpush1.msra.mxu0 %v986
      %1010 = vmatprep.subr.mxu0 0.0
      %1011 = vmatpush1.msra.mxu0 %v987
      %1012 = vmatprep.subr.mxu0 0.0
      %1013 = vmatpush1.msra.mxu0 0.0
      %1014 = vmatprep.subr.mxu0 0.0
      %1015 = vmatpush1.msra.mxu0 0.0
      %1016 = vmatprep.subr.mxu0 0.0
      %1017 = vmatpush1.msra.mxu0 0.0
      %1018 = vmatprep.subr.mxu0 0.0
      %1019 = vmatpush1.msra.mxu0 0.0
      %1020 = vmatprep.subr.mxu0 0.0
      %1021 = vmatpush1.msra.mxu0 0.0
      %1022 = vmatprep.subr.mxu0 0.0
      %1023 = vmatpush1.msra.mxu0 0.0
      %1024 = vmatprep.subr.mxu0 0.0
      %1025 = vmatpush1.msra.mxu0 0.0
      %1026 = vmatprep.subr.mxu0 0.0
      %1027 = vmatpush1.msra.mxu0 0.0
      %1028 = vmatprep.subr.mxu0 0.0
      %1029 = vmatpush1.msra.mxu0 0.0
      %1030 = vmatprep.subr.mxu0 0.0
      %1031 = vmatpush1.msra.mxu0 0.0
      %1032 = vmatprep.subr.mxu0 0.0
      %1033 = vmatpush1.msra.mxu0 0.0
      %1034 = vmatprep.subr.mxu0 0.0
      %1035 = vmatpush1.msra.mxu0 0.0
      %1036 = vmatprep.subr.mxu0 0.0
      %1037 = vmatpush1.msra.mxu0 0.0
      %1038 = vmatprep.subr.mxu0 0.0
      %1039 = vmatpush1.msra.mxu0 0.0
      %1040 = vmatprep.subr.mxu0 0.0
      %1041 = vmatpush1.msra.mxu0 0.0
      %1042 = vmatprep.subr.mxu0 0.0
      %1043 = vmatpush1.msra.mxu0 0.0
      %1044 = vmatprep.subr.mxu0 0.0
      %1045 = vmatpush1.msra.mxu0 0.0
      %1046 = vmatprep.subr.mxu0 0.0
      %1047 = vmatpush1.msra.mxu0 0.0
      %1048 = vmatprep.subr.mxu0 0.0
      %1049 = vmatpush1.msra.mxu0 0.0
      %1050 = vmatprep.subr.mxu0 0.0
      %1051 = vmatpush1.msra.mxu0 0.0
      %1052 = vmatprep.subr.mxu0 0.0
      %1053 = vmatpush1.msra.mxu0 0.0
      %1054 = vmatprep.subr.mxu0 0.0
      %1055 = vmatpush1.msra.mxu0 0.0
      %1056 = vmatprep.subr.mxu0 0.0
      %1057 = vmatpush1.msra.mxu0 0.0
      %1058 = vmatprep.subr.mxu0 0.0
      %1059 = vmatpush1.msra.mxu0 0.0
      %1060 = vmatprep.mubr.f32.mxu0 0.0
      %1061 = vmatmul.mubr.f32.gmra.mrb[0].mxu0 %v992
      %v1062 = vpop.f32.mrb[0].mxu0
      %v1063 = vadd.f32 0.0, %v1062
      %v1064 = vpop.f32.mrb[0].mxu0
      %1065 = vmatprep.mubr.f32.mxu0 0.0
      %1066 = vmatmul.mubr.f32.gmra.mrb[0].mxu0 %v994
      %v1067 = vpop.f32.mrb[0].mxu0
      %v1068 = vadd.f32 0.0, %v1067
      %v1069 = vpop.f32.mrb[0].mxu0
      %1070 = vdwg.mxu0
      %v1071 = vadd.f32 %v977, %v1063
      %v1072 = vadd.f32 %v978, %v1068
      %v1073 = vld [vmem:[%s2] sm:$0x1]
      %v1075 = vlaneseq
      %v1076 = vshrl.u32 %v1075, 7
      %v1077 = vsub.s32 0, %v1076
      %v1078 = vrot.slane %v1073, %v1077
      %v1080 = vadd.f32 %v1071, %v1078
      %v1081 = vadd.f32 %v1072, %v1078
      %1082 = vst [vmem:[%s204] sm:$0xff] %v1080
      %1083 = vst [vmem:[%s204 + $0x8] sm:$0xff] %v1081
      %v1084 = vadd.f32 %v1080, %v1081
      %v1085 = vrot.slane %v1084, 4
      %v1086 = vadd.f32 %v1084, %v1085
      %v1087 = vrot.slane %v1086, 2
      %v1088 = vadd.f32 %v1086, %v1087
      %v1089 = vrot.slane %v1088, 1
      %v1090 = vadd.f32 %v1088, %v1089
      %v1091 = vmul.f32 %v1080, %v1080
      %v1092 = vmul.f32 %v1081, %v1081
      %v1093 = vadd.f32 %v1091, %v1092
      %v1094 = vrot.slane %v1093, 4
      %v1095 = vadd.f32 %v1093, %v1094
      %v1096 = vrot.slane %v1095, 2
      %v1097 = vadd.f32 %v1095, %v1096
      %v1098 = vrot.slane %v1097, 1
      %v1099 = vadd.f32 %v1097, %v1098
      %vm1100 = vcmask 1040384
      %v1101 = vsel %vm1100, %v1090, %v1099
      %1102 = vst [vmem:[%s208] sm:$0x3] %v1101
      %p1103 = scmp.lt.s32.totalorder %s16, 1
      %s1104 = scalar_select %p1103, %s16, 1
      %s1105 = smul.addr %s1104, 2
      %s1106 = smul.addr %s1105, 8
      %s1107 = scalar_lea.vmem %s3, %s1106
      %p1108 = scmp.lt.s32.totalorder %s16, 1
      %s1109 = scalar_select %p1108, %s16, 1
      %s1110 = smul.addr %s1109, 2
      %s1111 = scalar_lea.vmem %s4, %s1110
      // Predicated region
      $region33: #{conv_block_forward.3} parent=31 // pred_check
        %p1112 = pneg %p102
      $region34: #{conv_block_forward.3} parent=31 // pred_check_branch
        %1114 = sbr.rel (%p1112) target = $region36
      $region35: #{conv_block_forward.3} parent=31 // pred_region
        _
      $region36: #{conv_block_forward.3} parent=31 // pred_fallthru
        _
      // Predicated region
      $region37: #{conv_block_forward.3} parent=31 // pred_check
        %p1115 = pneg %p128
      $region38: #{conv_block_forward.3} parent=31 // pred_check_branch
        %1117 = sbr.rel (%p1115) target = $region40
      $region39: #{conv_block_forward.3} parent=31 // pred_region
        _
      $region40: #{conv_block_forward.3} parent=31 // pred_fallthru
        _
    $region32: #{conv_block_forward.3} parent=5 // pred_fallthru
      _
    %p1118 = scmp.le.s32.totalorder 2, %s11
    // Predicated region
    $region41: #{conv_block_forward.3} parent=5 // pred_check
      %p1119 = pneg %p1118
    $region42: #{conv_block_forward.3} parent=5 // pred_check_branch
      %1121 = sbr.rel (%p1119) target = $region44
    $region43: #{conv_block_forward.3} parent=5 // pred_region
      %s1122 = ssub.s32 %s11, 2
      // Predicated region
      $region45: #{conv_block_forward.3} parent=43 // pred_check
        %p1123 = pneg %p108
      $region46: #{conv_block_forward.3} parent=43 // pred_check_branch
        %1125 = sbr.rel (%p1123) target = $region48
      $region47: #{conv_block_forward.3} parent=43 // pred_region
        %p1126 = scmp.lt.s32.totalorder %s17, 1
        %s1127 = scalar_select %p1126, %s17, 1
        %s1128 = smul.addr %s1127, 2
        %s1129 = smul.addr %s1128, 8
        %s1130 = scalar_lea.vmem %s3, %s1129
      $region48: #{conv_block_forward.3} parent=43 // pred_fallthru
        _
      // Predicated region
      $region49: #{conv_block_forward.3} parent=43 // pred_check
        %p1131 = pneg %p134
      $region50: #{conv_block_forward.3} parent=43 // pred_check_branch
        %1133 = sbr.rel (%p1131) target = $region52
      $region51: #{conv_block_forward.3} parent=43 // pred_region
        %p1134 = scmp.lt.s32.totalorder %s17, 1
        %s1135 = scalar_select %p1134, %s17, 1
        %s1136 = smul.addr %s1135, 2
        %s1137 = scalar_lea.vmem %s4, %s1136
      $region52: #{conv_block_forward.3} parent=43 // pred_fallthru
        _
    $region44: #{conv_block_forward.3} parent=5 // pred_fallthru
      _
  $region6: #{conv_block_forward.3} parent=0 // loop_footer
    %s15 = sadd.s32 1, %s11
  $region7: #{conv_block_forward.3} parent=0 // loop_footer_branch
    %10 = sbr.rel target = $region3
  $region8: #{conv_block_forward.3} parent=0 // loop_exit
    _

// kernel: conv_block_forward.4
$region0: #{conv_block_forward.4}
  #allocation0 [shape = 'u32[]', space=smem, size = 0x4, offset = 0x4, fixed_abs, tag = 'smem constant byte address 0x4 - core index']
  #allocation1 [shape = 'u32[144,128]{1,0:T(1,128)}', space=vmem, size = 0x12000, scoped, tag = 'internal scratch']
  #allocation2 [shape = 'f32[18,144]{1,0:T(8,128)}', space=vmem, size = 0x6000, scoped, tag = 'scratch operand']
  %s0 = inlined_call_operand.vmem [shape: f32[2,16,128], index: 0, kind: input, shape index: {}]
  %s1 = inlined_call_operand.vmem [shape: f32[9,128,128], index: 1, kind: input, shape index: {}]
  %s2 = inlined_call_operand.vmem [shape: f32[1,128], index: 2, kind: input, shape index: {}]
  %s3 = inlined_call_operand.vmem [shape: f32[1,128], index: 3, kind: input, shape index: {}]
  %s4 = inlined_call_operand.vmem [shape: f32[1,128], index: 4, kind: input, shape index: {}]
  %s5 = inlined_call_operand.vmem [shape: f32[2,16,128], index: 5, kind: output, shape index: {0}]
  %s6 = inlined_call_operand.vmem [shape: f32[2,2,128], index: 6, kind: output, shape index: {1}]
  %7 = xla_tuple %s5, %s6
  %s8 = sld [smem:[#allocation0]]
  $region61: #{conv_block_forward.4} parent=0
    _
  %s10 = ssub.s32 1, %s8
  %s11 = scalar_select 0, %s10, %s8
  loop: start=0, step=1, limit=4
  $region2: #{conv_block_forward.4} parent=0 // loop_pre_header
    _
  $region3: #{conv_block_forward.4} parent=0 // loop_header
    %s13 = sphi 0, %s17
    %p14 = scmp.ge.s32.totalorder %s13, 4
    %s23 = sphi 0, %s25
    %s26 = sphi 0, %s23
    %s27 = sphi 0, %s26
    %s43 = sphi 0, %s27
    %s47 = sphi 0, %s47
    %s49 = sphi 0, %s47
    %s50 = sphi 0, %s49
    %s64 = sphi 0, %s50
    %s68 = sphi 0, %s68
    %s70 = sphi 0, %s68
    %s71 = sphi 0, %s70
    %s85 = sphi 0, %s71
    %s89 = sphi 0, %s89
    %s91 = sphi 0, %s89
    %s92 = sphi 0, %s91
    %s106 = sphi 0, %s92
    %s110 = sphi 0, %s110
    %s112 = sphi 0, %s110
    %s113 = sphi 0, %s112
    %s127 = sphi 0, %s113
    %s133 = sphi 0, %s135
    %s136 = sphi 0, %s133
    %s137 = sphi 0, %s136
    %s153 = sphi 0, %s137
    %s159 = sphi 0, %s161
    %s162 = sphi 0, %s159
    %s163 = sphi 0, %s162
    %s179 = sphi 0, %s163
  $region4: #{conv_block_forward.4} parent=0 // loop_header_branch
    %16 = sbr.rel (%p14) target = $region8
  $region5: #{conv_block_forward.4} parent=0 // loop_body
    %s18 = ssub.s32 %s13, 1
    %s19 = ssub.s32 %s13, 2
    %s20 = sadd.s32 %s13, 1
    %s21 = ssub.s32 %s13, %s20
    %p22 = scmp.eq.s32.totalorder %s21, 0
    %s24 = sadd.s32 %s23, 1
    %s25 = scalar_select %p22, %s23, %s24
    %p28 = pneg %p22
    %p29 = scmp.eq.s32.totalorder %s13, 1
    %p30 = por %p28, %p29
    %p31 = scmp.ne.s32.totalorder %s23, %s26
    %p32 = scmp.eq.s32.totalorder %s13, 0
    %p33 = por %p31, %p32
    %p34 = scmp.ne.s32.totalorder %s23, %s26
    %p35 = scmp.eq.s32.totalorder %s18, 1
    %p36 = por %p34, %p35
    %p37 = scmp.ne.s32.totalorder %s26, %s27
    %p38 = scmp.eq.s32.totalorder %s18, 0
    %p39 = por %p37, %p38
    %p40 = scmp.ne.s32.totalorder %s26, %s27
    %p41 = scmp.eq.s32.totalorder %s19, 1
    %p42 = por %p40, %p41
    %p44 = scmp.ne.s32.totalorder %s27, %s43
    %p45 = scmp.eq.s32.totalorder %s19, 0
    %p46 = por %p44, %p45
    %s48 = sadd.s32 %s47, 1
    %p51 = scmp.eq.s32.totalorder %s13, 1
    %p52 = scmp.ne.s32.totalorder %s47, %s49
    %p53 = scmp.eq.s32.totalorder %s13, 0
    %p54 = por %p52, %p53
    %p55 = scmp.ne.s32.totalorder %s47, %s49
    %p56 = scmp.eq.s32.totalorder %s18, 1
    %p57 = por %p55, %p56
    %p58 = scmp.ne.s32.totalorder %s49, %s50
    %p59 = scmp.eq.s32.totalorder %s18, 0
    %p60 = por %p58, %p59
    %p61 = scmp.ne.s32.totalorder %s49, %s50
    %p62 = scmp.eq.s32.totalorder %s19, 1
    %p63 = por %p61, %p62
    %p65 = scmp.ne.s32.totalorder %s50, %s64
    %p66 = scmp.eq.s32.totalorder %s19, 0
    %p67 = por %p65, %p66
    %s69 = sadd.s32 %s68, 1
    %p72 = scmp.eq.s32.totalorder %s13, 1
    %p73 = scmp.ne.s32.totalorder %s68, %s70
    %p74 = scmp.eq.s32.totalorder %s13, 0
    %p75 = por %p73, %p74
    %p76 = scmp.ne.s32.totalorder %s68, %s70
    %p77 = scmp.eq.s32.totalorder %s18, 1
    %p78 = por %p76, %p77
    %p79 = scmp.ne.s32.totalorder %s70, %s71
    %p80 = scmp.eq.s32.totalorder %s18, 0
    %p81 = por %p79, %p80
    %p82 = scmp.ne.s32.totalorder %s70, %s71
    %p83 = scmp.eq.s32.totalorder %s19, 1
    %p84 = por %p82, %p83
    %p86 = scmp.ne.s32.totalorder %s71, %s85
    %p87 = scmp.eq.s32.totalorder %s19, 0
    %p88 = por %p86, %p87
    %s90 = sadd.s32 %s89, 1
    %p93 = scmp.eq.s32.totalorder %s13, 1
    %p94 = scmp.ne.s32.totalorder %s89, %s91
    %p95 = scmp.eq.s32.totalorder %s13, 0
    %p96 = por %p94, %p95
    %p97 = scmp.ne.s32.totalorder %s89, %s91
    %p98 = scmp.eq.s32.totalorder %s18, 1
    %p99 = por %p97, %p98
    %p100 = scmp.ne.s32.totalorder %s91, %s92
    %p101 = scmp.eq.s32.totalorder %s18, 0
    %p102 = por %p100, %p101
    %p103 = scmp.ne.s32.totalorder %s91, %s92
    %p104 = scmp.eq.s32.totalorder %s19, 1
    %p105 = por %p103, %p104
    %p107 = scmp.ne.s32.totalorder %s92, %s106
    %p108 = scmp.eq.s32.totalorder %s19, 0
    %p109 = por %p107, %p108
    %s111 = sadd.s32 %s110, 1
    %p114 = scmp.eq.s32.totalorder %s13, 1
    %p115 = scmp.ne.s32.totalorder %s110, %s112
    %p116 = scmp.eq.s32.totalorder %s13, 0
    %p117 = por %p115, %p116
    %p118 = scmp.ne.s32.totalorder %s110, %s112
    %p119 = scmp.eq.s32.totalorder %s18, 1
    %p120 = por %p118, %p119
    %p121 = scmp.ne.s32.totalorder %s112, %s113
    %p122 = scmp.eq.s32.totalorder %s18, 0
    %p123 = por %p121, %p122
    %p124 = scmp.ne.s32.totalorder %s112, %s113
    %p125 = scmp.eq.s32.totalorder %s19, 1
    %p126 = por %p124, %p125
    %p128 = scmp.ne.s32.totalorder %s113, %s127
    %p129 = scmp.eq.s32.totalorder %s19, 0
    %p130 = por %p128, %p129
    %s131 = ssub.s32 %s13, %s20
    %p132 = scmp.eq.s32.totalorder %s131, 0
    %s134 = sadd.s32 %s133, 1
    %s135 = scalar_select %p132, %s133, %s134
    %p138 = pneg %p132
    %p139 = scmp.eq.s32.totalorder %s13, 1
    %p140 = por %p138, %p139
    %p141 = scmp.ne.s32.totalorder %s133, %s136
    %p142 = scmp.eq.s32.totalorder %s13, 0
    %p143 = por %p141, %p142
    %p144 = scmp.ne.s32.totalorder %s133, %s136
    %p145 = scmp.eq.s32.totalorder %s18, 1
    %p146 = por %p144, %p145
    %p147 = scmp.ne.s32.totalorder %s136, %s137
    %p148 = scmp.eq.s32.totalorder %s18, 0
    %p149 = por %p147, %p148
    %p150 = scmp.ne.s32.totalorder %s136, %s137
    %p151 = scmp.eq.s32.totalorder %s19, 1
    %p152 = por %p150, %p151
    %p154 = scmp.ne.s32.totalorder %s137, %s153
    %p155 = scmp.eq.s32.totalorder %s19, 0
    %p156 = por %p154, %p155
    %s157 = ssub.s32 %s13, %s20
    %p158 = scmp.eq.s32.totalorder %s157, 0
    %s160 = sadd.s32 %s159, 1
    %s161 = scalar_select %p158, %s159, %s160
    %p164 = pneg %p158
    %p165 = scmp.eq.s32.totalorder %s13, 1
    %p166 = por %p164, %p165
    %p167 = scmp.ne.s32.totalorder %s159, %s162
    %p168 = scmp.eq.s32.totalorder %s13, 0
    %p169 = por %p167, %p168
    %p170 = scmp.ne.s32.totalorder %s159, %s162
    %p171 = scmp.eq.s32.totalorder %s18, 1
    %p172 = por %p170, %p171
    %p173 = scmp.ne.s32.totalorder %s162, %s163
    %p174 = scmp.eq.s32.totalorder %s18, 0
    %p175 = por %p173, %p174
    %p176 = scmp.ne.s32.totalorder %s162, %s163
    %p177 = scmp.eq.s32.totalorder %s19, 1
    %p178 = por %p176, %p177
    %p180 = scmp.ne.s32.totalorder %s163, %s179
    %p181 = scmp.eq.s32.totalorder %s19, 0
    %p182 = por %p180, %p181
    %p183 = scmp.le.s32.totalorder 1, %s13
    %p184 = scmp.lt.s32.totalorder %s13, 3
    %p185 = pnand %p183, %p184
    %p186 = pneg %p185
    // Predicated region
    $region9: #{conv_block_forward.4} parent=5 // pred_check
      _
    $region10: #{conv_block_forward.4} parent=5 // pred_check_branch
      %188 = sbr.rel (%p185) target = $region12
    $region11: #{conv_block_forward.4} parent=5 // pred_region
      %s189 = ssub.s32 %s13, 1
      // Predicated region
      $region13: #{conv_block_forward.4} parent=11 // pred_check
        %p190 = pneg %p60
      $region14: #{conv_block_forward.4} parent=11 // pred_check_branch
        %192 = sbr.rel (%p190) target = $region16
      $region15: #{conv_block_forward.4} parent=11 // pred_region
        _
      $region16: #{conv_block_forward.4} parent=11 // pred_fallthru
        _
      // Predicated region
      $region17: #{conv_block_forward.4} parent=11 // pred_check
        %p193 = pneg %p81
      $region18: #{conv_block_forward.4} parent=11 // pred_check_branch
        %195 = sbr.rel (%p193) target = $region20
      $region19: #{conv_block_forward.4} parent=11 // pred_region
        _
      $region20: #{conv_block_forward.4} parent=11 // pred_fallthru
        _
      // Predicated region
      $region21: #{conv_block_forward.4} parent=11 // pred_check
        %p196 = pneg %p102
      $region22: #{conv_block_forward.4} parent=11 // pred_check_branch
        %198 = sbr.rel (%p196) target = $region24
      $region23: #{conv_block_forward.4} parent=11 // pred_region
        _
      $region24: #{conv_block_forward.4} parent=11 // pred_fallthru
        _
      // Predicated region
      $region25: #{conv_block_forward.4} parent=11 // pred_check
        %p199 = pneg %p123
      $region26: #{conv_block_forward.4} parent=11 // pred_check_branch
        %201 = sbr.rel (%p199) target = $region28
      $region27: #{conv_block_forward.4} parent=11 // pred_region
        _
      $region28: #{conv_block_forward.4} parent=11 // pred_fallthru
        _
    $region12: #{conv_block_forward.4} parent=5 // pred_fallthru
      _
    %p202 = scmp.lt.s32.totalorder %s13, 2
    // Predicated region
    $region29: #{conv_block_forward.4} parent=5 // pred_check
      %p203 = pneg %p202
    $region30: #{conv_block_forward.4} parent=5 // pred_check_branch
      %205 = sbr.rel (%p203) target = $region32
    $region31: #{conv_block_forward.4} parent=5 // pred_region
      // Predicated region
      $region33: #{conv_block_forward.4} parent=31 // pred_check
        %p206 = pneg %p33
      $region34: #{conv_block_forward.4} parent=31 // pred_check_branch
        %208 = sbr.rel (%p206) target = $region36
      $region35: #{conv_block_forward.4} parent=31 // pred_region
        %p209 = scmp.lt.s32.totalorder %s13, 1
        %s210 = scalar_select %p209, %s13, 1
        %s211 = smul.addr %s210, 2
        %s212 = smul.addr %s211, 8
        %s213 = scalar_lea.vmem %s0, %s212
      $region36: #{conv_block_forward.4} parent=31 // pred_fallthru
        _
    $region32: #{conv_block_forward.4} parent=5 // pred_fallthru
      _
    %p214 = scmp.le.s32.totalorder 1, %s13
    %p215 = scmp.lt.s32.totalorder %s13, 3
    %p216 = pnand %p214, %p215
    %p217 = pneg %p216
    // Predicated region
    $region37: #{conv_block_forward.4} parent=5 // pred_check
      _
    $region38: #{conv_block_forward.4} parent=5 // pred_check_branch
      %219 = sbr.rel (%p216) target = $region40
    $region39: #{conv_block_forward.4} parent=5 // pred_region
      %s220 = ssub.s32 %s13, 1
      %p221 = scmp.lt.s32.totalorder %s18, 1
      %s222 = scalar_select %p221, %s18, 1
      %s223 = smul.addr %s222, 2
      %s224 = smul.addr %s223, 8
      %s225 = scalar_lea.vmem %s0, %s224
      %p226 = pneg %p39
      %p227 = pneg %p36
      %p228 = pneg %p60
      %p229 = pneg %p57
      %p230 = pneg %p81
      %p231 = pneg %p78
      %p232 = pneg %p102
      %p233 = pneg %p99
      %p234 = pneg %p123
      %p235 = pneg %p120
      %p236 = pneg %p149
      %p237 = pneg %p146
      %p238 = scmp.lt.s32.totalorder %s18, 1
      %s239 = scalar_select %p238, %s18, 1
      %s240 = smul.addr %s239, 2
      %s241 = smul.addr %s240, 8
      %s242 = scalar_lea.vmem %s5, %s241
      %p243 = pneg %p175
      %p244 = pneg %p172
      %p245 = scmp.lt.s32.totalorder %s18, 1
      %s246 = scalar_select %p245, %s18, 1
      %s247 = smul.addr %s246, 2
      %s248 = scalar_lea.vmem %s6, %s247
      %p249 = scmp.lt.s32.totalorder %s18, 1
      %s250 = scalar_select %p249, %s18, 1
      %s251 = smul.addr %s250, 2
      %s252 = smul.addr %s251, 8
      %s253 = scalar_lea.vmem %s0, %s252
      %p254 = scmp.lt.s32.totalorder %s18, 1
      %s255 = scalar_select %p254, %s18, 1
      %s256 = smul.addr %s255, 2
      %s257 = smul.addr %s256, 8
      %s258 = scalar_lea.vmem %s5, %s257
      %p259 = scmp.lt.s32.totalorder %s18, 1
      %s260 = scalar_select %p259, %s18, 1
      %s261 = smul.addr %s260, 2
      %s262 = scalar_lea.vmem %s6, %s261
      %v263 = vld [vmem:[%s253] sm:$0xff]
      %v264 = vld [vmem:[%s253 + $0x8] sm:$0xff]
      %v265 = vld [vmem:[%s3] sm:$0x1]
      %v267 = vlaneseq
      %v268 = vshrl.u32 %v267, 7
      %v269 = vsub.s32 0, %v268
      %v270 = vrot.slane %v265, %v269
      %v272 = vmul.f32 %v263, %v270
      %v273 = vmul.f32 %v264, %v270
      %v274 = vld [vmem:[%s4] sm:$0x1]
      %v276 = vlaneseq
      %v277 = vshrl.u32 %v276, 7
      %v278 = vsub.s32 0, %v277
      %v279 = vrot.slane %v274, %v278
      %v281 = vadd.f32 %v272, %v279
      %v282 = vadd.f32 %v273, %v279
      %vm283 = vcmp.ge.f32.partialorder %v281, 0.0
      %vm284 = vcmp.ge.f32.partialorder %v282, 0.0
      %v285 = vmul.f32 %v281, 0.01
      %v286 = vmul.f32 %v282, 0.01
      %v287 = vsel %vm283, %v281, %v285
      %v288 = vsel %vm284, %v282, %v286
      %v289 = vlaneseq
      %vm290 = vcmp.ge.s32.totalorder %v289, 0
      %vm291 = vcmp.lt.s32.totalorder %v289, 144
      %vm292 = vmand %vm290, %vm291
      %293 = vst.msk [vmem:[#allocation2] ss:$8 sm:$0x3] %vm292, 0.0
      %294 = vst.msk [vmem:[#allocation2] ss:$8 sm:$0x0] %vm292, 0.0
      %s295 = scalar_lea.vmem [#allocation2], 33
      %296 = vst.msk [vmem:[%s295] ss:$8 sm:$0x3] %vm292, 0.0
      %297 = vst.msk [vmem:[%s295] ss:$8 sm:$0x0] %vm292, 0.0
      %300 = vrot.lane.b32.xlu0 %v287, 8
      %v301 = vpop.permute.xlu0 %300
      %302 = vrot.lane.b32.xlu0 %v288, 8
      %v303 = vpop.permute.xlu0 %302
      %vm306 = vcmask 64512
      %v307 = vsel %vm306, 0.0, %v301
      %v308 = vsel %vm306, 0.0, %v303
      %v309 = vsel %vm306, %v301, 0.0
      %v310 = vsel %vm306, %v303, 0.0
      %vm315 = vcmask 1040384
      %v316 = vrot.slane %v307, 7
      %v317 = vrot.slane %v309, 7
      %v318 = vrot.slane %v308, 7
      %v319 = vsel %vm315, %v316, %v318
      %v320 = vrot.slane %v310, 7
      %v321 = vsel %vm315, %v317, %v320
      %328 = vst [vmem:[#allocation2] sm:$0xfe] %v316
      %vm329 = vcmask 130049
      %330 = vst.msk [vmem:[#allocation2 + $0x8] sm:$0xfe] %vm329, %v317
      %331 = vst [vmem:[#allocation2 + $0x10] sm:$0xff] %v319
      %vm332 = vcmask 130048
      %333 = vst.msk [vmem:[#allocation2 + $0x18] sm:$0xff] %vm332, %v321
      %334 = vst [vmem:[#allocation2 + $0x20] sm:$0x1] %v318
      %vm335 = vcmask 122880
      %336 = vst.msk [vmem:[#allocation2 + $0x28] sm:$0x1] %vm335, %v320
      %v337 = vld [vmem:[#allocation2] sm:$0xff]
      %v338 = vld [vmem:[#allocation2 + $0x10] sm:$0xff]
      %v339 = vld [vmem:[%s1] sm:$0xff]
      %v340 = vld [vmem:[%s1 + $0x8] sm:$0xff]
      %v341 = vld [vmem:[%s1 + $0x10] sm:$0xff]
      %v342 = vld [vmem:[%s1 + $0x18] sm:$0xff]
      %v343 = vld [vmem:[%s1 + $0x20] sm:$0xff]
      %v344 = vld [vmem:[%s1 + $0x28] sm:$0xff]
      %v345 = vld [vmem:[%s1 + $0x30] sm:$0xff]
      %v346 = vld [vmem:[%s1 + $0x38] sm:$0xff]
      %v347 = vld [vmem:[%s1 + $0x40] sm:$0xff]
      %v348 = vld [vmem:[%s1 + $0x48] sm:$0xff]
      %v349 = vld [vmem:[%s1 + $0x50] sm:$0xff]
      %v350 = vld [vmem:[%s1 + $0x58] sm:$0xff]
      %v351 = vld [vmem:[%s1 + $0x60] sm:$0xff]
      %v352 = vld [vmem:[%s1 + $0x68] sm:$0xff]
      %v353 = vld [vmem:[%s1 + $0x70] sm:$0xff]
      %v354 = vld [vmem:[%s1 + $0x78] sm:$0xff]
      %v355 = vld [vmem:[#allocation2 + $0x8] sm:$0xff]
      %v356 = vld [vmem:[#allocation2 + $0x18] sm:$0xff]
      %s357 = scalar_lea.vmem %s1, 128
      %v358 = vld [vmem:[%s357] sm:$0xff]
      %v359 = vld [vmem:[%s357 + $0x8] sm:$0xff]
      %v360 = vld [vmem:[%s357 + $0x10] sm:$0xff]
      %v361 = vld [vmem:[%s357 + $0x18] sm:$0xff]
      %v362 = vld [vmem:[%s357 + $0x20] sm:$0xff]
      %v363 = vld [vmem:[%s357 + $0x28] sm:$0xff]
      %v364 = vld [vmem:[%s357 + $0x30] sm:$0xff]
      %v365 = vld [vmem:[%s357 + $0x38] sm:$0xff]
      %v366 = vld [vmem:[%s357 + $0x40] sm:$0xff]
      %v367 = vld [vmem:[%s357 + $0x48] sm:$0xff]
      %v368 = vld [vmem:[%s357 + $0x50] sm:$0xff]
      %v369 = vld [vmem:[%s357 + $0x58] sm:$0xff]
      %v370 = vld [vmem:[%s357 + $0x60] sm:$0xff]
      %v371 = vld [vmem:[%s357 + $0x68] sm:$0xff]
      %v372 = vld [vmem:[%s357 + $0x70] sm:$0xff]
      %v373 = vld [vmem:[%s357 + $0x78] sm:$0xff]
      %378 = vrot.lane.b32.xlu0 %v337, 120
      %v379 = vpop.permute.xlu0 %378
      %380 = vrot.lane.b32.xlu0 %v355, 120
      %v381 = vpop.permute.xlu0 %380
      %382 = vrot.lane.b32.xlu0 %v338, 120
      %v383 = vpop.permute.xlu0 %382
      %384 = vrot.lane.b32.xlu0 %v356, 120
      %v385 = vpop.permute.xlu0 %384
      %vm386 = vcmask 982016
      %v387 = vsel %vm386, %v379, %v381
      %v388 = vsel %vm386, %v383, %v385
      %391 = vmatprep.subr.mxu0 0.0
      %392 = vmatpush1.msra.mxu0 %v358
      %393 = vmatprep.subr.mxu0 0.0
      %394 = vmatpush1.msra.mxu0 %v359
      %395 = vmatprep.subr.mxu0 0.0
      %396 = vmatpush1.msra.mxu0 %v360
      %397 = vmatprep.subr.mxu0 0.0
      %398 = vmatpush1.msra.mxu0 %v361
      %399 = vmatprep.subr.mxu0 0.0
      %400 = vmatpush1.msra.mxu0 %v362
      %401 = vmatprep.subr.mxu0 0.0
      %402 = vmatpush1.msra.mxu0 %v363
      %403 = vmatprep.subr.mxu0 0.0
      %404 = vmatpush1.msra.mxu0 %v364
      %405 = vmatprep.subr.mxu0 0.0
      %406 = vmatpush1.msra.mxu0 %v365
      %407 = vmatprep.subr.mxu0 0.0
      %408 = vmatpush1.msra.mxu0 %v366
      %409 = vmatprep.subr.mxu0 0.0
      %410 = vmatpush1.msra.mxu0 %v367
      %411 = vmatprep.subr.mxu0 0.0
      %412 = vmatpush1.msra.mxu0 %v368
      %413 = vmatprep.subr.mxu0 0.0
      %414 = vmatpush1.msra.mxu0 %v369
      %415 = vmatprep.subr.mxu0 0.0
      %416 = vmatpush1.msra.mxu0 %v370
      %417 = vmatprep.subr.mxu0 0.0
      %418 = vmatpush1.msra.mxu0 %v371
      %419 = vmatprep.subr.mxu0 0.0
      %420 = vmatpush1.msra.mxu0 %v372
      %421 = vmatprep.subr.mxu0 0.0
      %422 = vmatpush1.msra.mxu0 %v373
      %423 = vmatprep.subr.mxu0 0.0
      %424 = vmatpush1.msra.mxu0 0.0
      %425 = vmatprep.subr.mxu0 0.0
      %426 = vmatpush1.msra.mxu0 0.0
      %427 = vmatprep.subr.mxu0 0.0
      %428 = vmatpush1.msra.mxu0 0.0
      %429 = vmatprep.subr.mxu0 0.0
      %430 = vmatpush1.msra.mxu0 0.0
      %431 = vmatprep.subr.mxu0 0.0
      %432 = vmatpush1.msra.mxu0 0.0
      %433 = vmatprep.subr.mxu0 0.0
      %434 = vmatpush1.msra.mxu0 0.0
      %435 = vmatprep.subr.mxu0 0.0
      %436 = vmatpush1.msra.mxu0 0.0
      %437 = vmatprep.subr.mxu0 0.0
      %438 = vmatpush1.msra.mxu0 0.0
      %439 = vmatprep.subr.mxu0 0.0
      %440 = vmatpush1.msra.mxu0 0.0
      %441 = vmatprep.subr.mxu0 0.0
      %442 = vmatpush1.msra.mxu0 0.0
      %443 = vmatprep.subr.mxu0 0.0
      %444 = vmatpush1.msra.mxu0 0.0
      %445 = vmatprep.subr.mxu0 0.0
      %446 = vmatpush1.msra.mxu0 0.0
      %447 = vmatprep.subr.mxu0 0.0
      %448 = vmatpush1.msra.mxu0 0.0
      %449 = vmatprep.subr.mxu0 0.0
      %450 = vmatpush1.msra.mxu0 0.0
      %451 = vmatprep.subr.mxu0 0.0
      %452 = vmatpush1.msra.mxu0 0.0
      %453 = vmatprep.subr.mxu0 0.0
      %454 = vmatpush1.msra.mxu0 0.0
      %455 = vmatprep.mubr.f32.mxu0 0.0
      %456 = vmatmul.mubr.f32.gmra.mrb[0].mxu0 %v387
      %v457 = vpop.f32.mrb[0].mxu0
      %v458 = vadd.f32 0.0, %v457
      %v459 = vpop.f32.mrb[0].mxu0
      %460 = vmatprep.mubr.f32.mxu0 0.0
      %461 = vmatmul.mubr.f32.gmra.mrb[0].mxu0 %v388
      %v462 = vpop.f32.mrb[0].mxu0
      %v463 = vadd.f32 0.0, %v462
      %v464 = vpop.f32.mrb[0].mxu0
      %465 = vdwg.mxu0
      %466 = vmatprep.subr.mxu0 0.0
      %467 = vmatpush1.msra.mxu0 %v339
      %468 = vmatprep.subr.mxu0 0.0
      %469 = vmatpush1.msra.mxu0 %v340
      %470 = vmatprep.subr.mxu0 0.0
      %471 = vmatpush1.msra.mxu0 %v341
      %472 = vmatprep.subr.mxu0 0.0
      %473 = vmatpush1.msra.mxu0 %v342
      %474 = vmatprep.subr.mxu0 0.0
      %475 = vmatpush1.msra.mxu0 %v343
      %476 = vmatprep.subr.mxu0 0.0
      %477 = vmatpush1.msra.mxu0 %v344
      %478 = vmatprep.subr.mxu0 0.0
      %479 = vmatpush1.msra.mxu0 %v345
      %480 = vmatprep.subr.mxu0 0.0
      %481 = vmatpush1.msra.mxu0 %v346
      %482 = vmatprep.subr.mxu0 0.0
      %483 = vmatpush1.msra.mxu0 %v347
      %484 = vmatprep.subr.mxu0 0.0
      %485 = vmatpush1.msra.mxu0 %v348
      %486 = vmatprep.subr.mxu0 0.0
      %487 = vmatpush1.msra.mxu0 %v349
      %488 = vmatprep.subr.mxu0 0.0
      %489 = vmatpush1.msra.mxu0 %v350
      %490 = vmatprep.subr.mxu0 0.0
      %491 = vmatpush1.msra.mxu0 %v351
      %492 = vmatprep.subr.mxu0 0.0
      %493 = vmatpush1.msra.mxu0 %v352
      %494 = vmatprep.subr.mxu0 0.0
      %495 = vmatpush1.msra.mxu0 %v353
      %496 = vmatprep.subr.mxu0 0.0
      %497 = vmatpush1.msra.mxu0 %v354
      %498 = vmatprep.subr.mxu0 0.0
      %499 = vmatpush1.msra.mxu0 0.0
      %500 = vmatprep.subr.mxu0 0.0
      %501 = vmatpush1.msra.mxu0 0.0
      %502 = vmatprep.subr.mxu0 0.0
      %503 = vmatpush1.msra.mxu0 0.0
      %504 = vmatprep.subr.mxu0 0.0
      %505 = vmatpush1.msra.mxu0 0.0
      %506 = vmatprep.subr.mxu0 0.0
      %507 = vmatpush1.msra.mxu0 0.0
      %508 = vmatprep.subr.mxu0 0.0
      %509 = vmatpush1.msra.mxu0 0.0
      %510 = vmatprep.subr.mxu0 0.0
      %511 = vmatpush1.msra.mxu0 0.0
      %512 = vmatprep.subr.mxu0 0.0
      %513 = vmatpush1.msra.mxu0 0.0
      %514 = vmatprep.subr.mxu0 0.0
      %515 = vmatpush1.msra.mxu0 0.0
      %516 = vmatprep.subr.mxu0 0.0
      %517 = vmatpush1.msra.mxu0 0.0
      %518 = vmatprep.subr.mxu0 0.0
      %519 = vmatpush1.msra.mxu0 0.0
      %520 = vmatprep.subr.mxu0 0.0
      %521 = vmatpush1.msra.mxu0 0.0
      %522 = vmatprep.subr.mxu0 0.0
      %523 = vmatpush1.msra.mxu0 0.0
      %524 = vmatprep.subr.mxu0 0.0
      %525 = vmatpush1.msra.mxu0 0.0
      %526 = vmatprep.subr.mxu0 0.0
      %527 = vmatpush1.msra.mxu0 0.0
      %528 = vmatprep.subr.mxu0 0.0
      %529 = vmatpush1.msra.mxu0 0.0
      %530 = vmatprep.mubr.f32.mxu0 0.0
      %531 = vmatmul.mubr.f32.gmra.mrb[0].mxu0 %v337
      %v532 = vpop.f32.mrb[0].mxu0
      %v533 = vadd.f32 %v458, %v532
      %v534 = vpop.f32.mrb[0].mxu0
      %535 = vmatprep.mubr.f32.mxu0 0.0
      %536 = vmatmul.mubr.f32.gmra.mrb[0].mxu0 %v338
      %v537 = vpop.f32.mrb[0].mxu0
      %v538 = vadd.f32 %v463, %v537
      %v539 = vpop.f32.mrb[0].mxu0
      %540 = vdwg.mxu0
      %s541 = scalar_lea.vmem %s1, 256
      %v542 = vld [vmem:[%s541] sm:$0xff]
      %v543 = vld [vmem:[%s541 + $0x8] sm:$0xff]
      %v544 = vld [vmem:[%s541 + $0x10] sm:$0xff]
      %v545 = vld [vmem:[%s541 + $0x18] sm:$0xff]
      %v546 = vld [vmem:[%s541 + $0x20] sm:$0xff]
      %v547 = vld [vmem:[%s541 + $0x28] sm:$0xff]
      %v548 = vld [vmem:[%s541 + $0x30] sm:$0xff]
      %v549 = vld [vmem:[%s541 + $0x38] sm:$0xff]
      %v550 = vld [vmem:[%s541 + $0x40] sm:$0xff]
      %v551 = vld [vmem:[%s541 + $0x48] sm:$0xff]
      %v552 = vld [vmem:[%s541 + $0x50] sm:$0xff]
      %v553 = vld [vmem:[%s541 + $0x58] sm:$0xff]
      %v554 = vld [vmem:[%s541 + $0x60] sm:$0xff]
      %v555 = vld [vmem:[%s541 + $0x68] sm:$0xff]
      %v556 = vld [vmem:[%s541 + $0x70] sm:$0xff]
      %v557 = vld [vmem:[%s541 + $0x78] sm:$0xff]
      %558 = vrot.lane.b32.xlu0 %v337, 112
      %v559 = vpop.permute.xlu0 %558
      %560 = vrot.lane.b32.xlu0 %v355, 112
      %v561 = vpop.permute.xlu0 %560
      %562 = vrot.lane.b32.xlu0 %v338, 112
      %v563 = vpop.permute.xlu0 %562
      %564 = vrot.lane.b32.xlu0 %v356, 112
      %v565 = vpop.permute.xlu0 %564
      %vm566 = vcmask 916480
      %v567 = vsel %vm566, %v559, %v561
      %v568 = vsel %vm566, %v563, %v565
      %571 = vmatprep.subr.mxu0 0.0
      %572 = vmatpush1.msra.mxu0 %v542
      %573 = vmatprep.subr.mxu0 0.0
      %574 = vmatpush1.msra.mxu0 %v543
      %575 = vmatprep.subr.mxu0 0.0
      %576 = vmatpush1.msra.mxu0 %v544
      %577 = vmatprep.subr.mxu0 0.0
      %578 = vmatpush1.msra.mxu0 %v545
      %579 = vmatprep.subr.mxu0 0.0
      %580 = vmatpush1.msra.mxu0 %v546
      %581 = vmatprep.subr.mxu0 0.0
      %582 = vmatpush1.msra.mxu0 %v547
      %583 = vmatprep.subr.mxu0 0.0
      %584 = vmatpush1.msra.mxu0 %v548
      %585 = vmatprep.subr.mxu0 0.0
      %586 = vmatpush1.msra.mxu0 %v549
      %587 = vmatprep.subr.mxu0 0.0
      %588 = vmatpush1.msra.mxu0 %v550
      %589 = vmatprep.subr.mxu0 0.0
      %590 = vmatpush1.msra.mxu0 %v551
      %591 = vmatprep.subr.mxu0 0.0
      %592 = vmatpush1.msra.mxu0 %v552
      %593 = vmatprep.subr.mxu0 0.0
      %594 = vmatpush1.msra.mxu0 %v553
      %595 = vmatprep.subr.mxu0 0.0
      %596 = vmatpush1.msra.mxu0 %v554
      %597 = vmatprep.subr.mxu0 0.0
      %598 = vmatpush1.msra.mxu0 %v555
      %599 = vmatprep.subr.mxu0 0.0
      %600 = vmatpush1.msra.mxu0 %v556
      %601 = vmatprep.subr.mxu0 0.0
      %602 = vmatpush1.msra.mxu0 %v557
      %603 = vmatprep.subr.mxu0 0.0
      %604 = vmatpush1.msra.mxu0 0.0
      %605 = vmatprep.subr.mxu0 0.0
      %606 = vmatpush1.msra.mxu0 0.0
      %607 = vmatprep.subr.mxu0 0.0
      %608 = vmatpush1.msra.mxu0 0.0
      %609 = vmatprep.subr.mxu0 0.0
      %610 = vmatpush1.msra.mxu0 0.0
      %611 = vmatprep.subr.mxu0 0.0
      %612 = vmatpush1.msra.mxu0 0.0
      %613 = vmatprep.subr.mxu0 0.0
      %614 = vmatpush1.msra.mxu0 0.0
      %615 = vmatprep.subr.mxu0 0.0
      %616 = vmatpush1.msra.mxu0 0.0
      %617 = vmatprep.subr.mxu0 0.0
      %618 = vmatpush1.msra.mxu0 0.0
      %619 = vmatprep.subr.mxu0 0.0
      %620 = vmatpush1.msra.mxu0 0.0
      %621 = vmatprep.subr.mxu0 0.0
      %622 = vmatpush1.msra.mxu0 0.0
      %623 = vmatprep.subr.mxu0 0.0
      %624 = vmatpush1.msra.mxu0 0.0
      %625 = vmatprep.subr.mxu0 0.0
      %626 = vmatpush1.msra.mxu0 0.0
      %627 = vmatprep.subr.mxu0 0.0
      %628 = vmatpush1.msra.mxu0 0.0
      %629 = vmatprep.subr.mxu0 0.0
      %630 = vmatpush1.msra.mxu0 0.0
      %631 = vmatprep.subr.mxu0 0.0
      %632 = vmatpush1.msra.mxu0 0.0
      %633 = vmatprep.subr.mxu0 0.0
      %634 = vmatpush1.msra.mxu0 0.0
      %635 = vmatprep.mubr.f32.mxu0 0.0
      %636 = vmatmul.mubr.f32.gmra.mrb[0].mxu0 %v567
      %v637 = vpop.f32.mrb[0].mxu0
      %v638 = vadd.f32 0.0, %v637
      %v639 = vpop.f32.mrb[0].mxu0
      %640 = vmatprep.mubr.f32.mxu0 0.0
      %641 = vmatmul.mubr.f32.gmra.mrb[0].mxu0 %v568
      %v642 = vpop.f32.mrb[0].mxu0
      %v643 = vadd.f32 0.0, %v642
      %v644 = vpop.f32.mrb[0].mxu0
      %645 = vdwg.mxu0
      %v646 = vadd.f32 %v533, %v638
      %v647 = vadd.f32 %v538, %v643
      %v648 = vld [vmem:[#allocation2] sm:$0xfe]
      %v649 = vld [vmem:[#allocation2 + $0x10] sm:$0xff]
      %v650 = vld [vmem:[#allocation2 + $0x20] sm:$0x1]
      %s651 = scalar_lea.vmem %s1, 384
      %v652 = vld [vmem:[%s651] sm:$0xff]
      %v653 = vld [vmem:[%s651 + $0x8] sm:$0xff]
      %v654 = vld [vmem:[%s651 + $0x10] sm:$0xff]
      %v655 = vld [vmem:[%s651 + $0x18] sm:$0xff]
      %v656 = vld [vmem:[%s651 + $0x20] sm:$0xff]
      %v657 = vld [vmem:[%s651 + $0x28] sm:$0xff]
      %v658 = vld [vmem:[%s651 + $0x30] sm:$0xff]
      %v659 = vld [vmem:[%s651 + $0x38] sm:$0xff]
      %v660 = vld [vmem:[%s651 + $0x40] sm:$0xff]
      %v661 = vld [vmem:[%s651 + $0x48] sm:$0xff]
      %v662 = vld [vmem:[%s651 + $0x50] sm:$0xff]
      %v663 = vld [vmem:[%s651 + $0x58] sm:$0xff]
      %v664 = vld [vmem:[%s651 + $0x60] sm:$0xff]
      %v665 = vld [vmem:[%s651 + $0x68] sm:$0xff]
      %v666 = vld [vmem:[%s651 + $0x70] sm:$0xff]
      %v667 = vld [vmem:[%s651 + $0x78] sm:$0xff]
      %vm671 = vcmask 1046528
      %v672 = vrot.slane %v648, 1
      %v673 = vrot.slane %v649, 1
      %v674 = vsel %vm671, %v672, %v673
      %v675 = vrot.slane %v650, 1
      %v676 = vsel %vm671, %v673, %v675
      %679 = vmatprep.subr.mxu0 0.0
      %680 = vmatpush1.msra.mxu0 %v652
      %681 = vmatprep.subr.mxu0 0.0
      %682 = vmatpush1.msra.mxu0 %v653
      %683 = vmatprep.subr.mxu0 0.0
      %684 = vmatpush1.msra.mxu0 %v654
      %685 = vmatprep.subr.mxu0 0.0
      %686 = vmatpush1.msra.mxu0 %v655
      %687 = vmatprep.subr.mxu0 0.0
      %688 = vmatpush1.msra.mxu0 %v656
      %689 = vmatprep.subr.mxu0 0.0
      %690 = vmatpush1.msra.mxu0 %v657
      %691 = vmatprep.subr.mxu0 0.0
      %692 = vmatpush1.msra.mxu0 %v658
      %693 = vmatprep.subr.mxu0 0.0
      %694 = vmatpush1.msra.mxu0 %v659
      %695 = vmatprep.subr.mxu0 0.0
      %696 = vmatpush1.msra.mxu0 %v660
      %697 = vmatprep.subr.mxu0 0.0
      %698 = vmatpush1.msra.mxu0 %v661
      %699 = vmatprep.subr.mxu0 0.0
      %700 = vmatpush1.msra.mxu0 %v662
      %701 = vmatprep.subr.mxu0 0.0
      %702 = vmatpush1.msra.mxu0 %v663
      %703 = vmatprep.subr.mxu0 0.0
      %704 = vmatpush1.msra.mxu0 %v664
      %705 = vmatprep.subr.mxu0 0.0
      %706 = vmatpush1.msra.mxu0 %v665
      %707 = vmatprep.subr.mxu0 0.0
      %708 = vmatpush1.msra.mxu0 %v666
      %709 = vmatprep.subr.mxu0 0.0
      %710 = vmatpush1.msra.mxu0 %v667
      %711 = vmatprep.subr.mxu0 0.0
      %712 = vmatpush1.msra.mxu0 0.0
      %713 = vmatprep.subr.mxu0 0.0
      %714 = vmatpush1.msra.mxu0 0.0
      %715 = vmatprep.subr.mxu0 0.0
      %716 = vmatpush1.msra.mxu0 0.0
      %717 = vmatprep.subr.mxu0 0.0
      %718 = vmatpush1.msra.mxu0 0.0
      %719 = vmatprep.subr.mxu0 0.0
      %720 = vmatpush1.msra.mxu0 0.0
      %721 = vmatprep.subr.mxu0 0.0
      %722 = vmatpush1.msra.mxu0 0.0
      %723 = vmatprep.subr.mxu0 0.0
      %724 = vmatpush1.msra.mxu0 0.0
      %725 = vmatprep.subr.mxu0 0.0
      %726 = vmatpush1.msra.mxu0 0.0
      %727 = vmatprep.subr.mxu0 0.0
      %728 = vmatpush1.msra.mxu0 0.0
      %729 = vmatprep.subr.mxu0 0.0
      %730 = vmatpush1.msra.mxu0 0.0
      %731 = vmatprep.subr.mxu0 0.0
      %732 = vmatpush1.msra.mxu0 0.0
      %733 = vmatprep.subr.mxu0 0.0
      %734 = vmatpush1.msra.mxu0 0.0
      %735 = vmatprep.subr.mxu0 0.0
      %736 = vmatpush1.msra.mxu0 0.0
      %737 = vmatprep.subr.mxu0 0.0
      %738 = vmatpush1.msra.mxu0 0.0
      %739 = vmatprep.subr.mxu0 0.0
      %740 = vmatpush1.msra.mxu0 0.0
      %741 = vmatprep.subr.mxu0 0.0
      %742 = vmatpush1.msra.mxu0 0.0
      %743 = vmatprep.mubr.f32.mxu0 0.0
      %744 = vmatmul.mubr.f32.gmra.mrb[0].mxu0 %v674
      %v745 = vpop.f32.mrb[0].mxu0
      %v746 = vadd.f32 0.0, %v745
      %v747 = vpop.f32.mrb[0].mxu0
      %748 = vmatprep.mubr.f32.mxu0 0.0
      %749 = vmatmul.mubr.f32.gmra.mrb[0].mxu0 %v676
      %v750 = vpop.f32.mrb[0].mxu0
      %v751 = vadd.f32 0.0, %v750
      %v752 = vpop.f32.mrb[0].mxu0
      %753 = vdwg.mxu0
      %v754 = vadd.f32 %v646, %v746
      %v755 = vadd.f32 %v647, %v751
      %v756 = vld [vmem:[#allocation2] sm:$0xfe]
      %v757 = vld [vmem:[#allocation2 + $0x8] sm:$0xfe]
      %v758 = vld [vmem:[#allocation2 + $0x10] sm:$0xff]
      %v759 = vld [vmem:[#allocation2 + $0x18] sm:$0xff]
      %v760 = vld [vmem:[#allocation2 + $0x20] sm:$0x1]
      %v761 = vld [vmem:[#allocation2 + $0x28] sm:$0x1]
      %s762 = scalar_lea.vmem %s1, 512
      %v763 = vld [vmem:[%s762] sm:$0xff]
      %v764 = vld [vmem:[%s762 + $0x8] sm:$0xff]
      %v765 = vld [vmem:[%s762 + $0x10] sm:$0xff]
      %v766 = vld [vmem:[%s762 + $0x18] sm:$0xff]
      %v767 = vld [vmem:[%s762 + $0x20] sm:$0xff]
      %v768 = vld [vmem:[%s762 + $0x28] sm:$0xff]
      %v769 = vld [vmem:[%s762 + $0x30] sm:$0xff]
      %v770 = vld [vmem:[%s762 + $0x38] sm:$0xff]
      %v771 = vld [vmem:[%s762 + $0x40] sm:$0xff]
      %v772 = vld [vmem:[%s762 + $0x48] sm:$0xff]
      %v773 = vld [vmem:[%s762 + $0x50] sm:$0xff]
      %v774 = vld [vmem:[%s762 + $0x58] sm:$0xff]
      %v775 = vld [vmem:[%s762 + $0x60] sm:$0xff]
      %v776 = vld [vmem:[%s762 + $0x68] sm:$0xff]
      %v777 = vld [vmem:[%s762 + $0x70] sm:$0xff]
      %v778 = vld [vmem:[%s762 + $0x78] sm:$0xff]
      %v785 = vrot.slane %v756, 1
      %v786 = vrot.slane %v758, 1
      %v787 = vsel %vm671, %v785, %v786
      %v788 = vrot.slane %v757, 1
      %v789 = vrot.slane %v759, 1
      %v790 = vsel %vm671, %v788, %v789
      %v791 = vrot.slane %v760, 1
      %v792 = vsel %vm671, %v786, %v791
      %v793 = vrot.slane %v761, 1
      %v794 = vsel %vm671, %v789, %v793
      %795 = vrot.lane.b32.xlu0 %v787, 120
      %v796 = vpop.permute.xlu0 %795
      %797 = vrot.lane.b32.xlu0 %v790, 120
      %v798 = vpop.permute.xlu0 %797
      %799 = vrot.lane.b32.xlu0 %v792, 120
      %v800 = vpop.permute.xlu0 %799
      %801 = vrot.lane.b32.xlu0 %v794, 120
      %v802 = vpop.permute.xlu0 %801
      %v803 = vsel %vm386, %v796, %v798
      %v804 = vsel %vm386, %v800, %v802
      %807 = vmatprep.subr.mxu0 0.0
      %808 = vmatpush1.msra.mxu0 %v763
      %809 = vmatprep.subr.mxu0 0.0
      %810 = vmatpush1.msra.mxu0 %v764
      %811 = vmatprep.subr.mxu0 0.0
      %812 = vmatpush1.msra.mxu0 %v765
      %813 = vmatprep.subr.mxu0 0.0
      %814 = vmatpush1.msra.mxu0 %v766
      %815 = vmatprep.subr.mxu0 0.0
      %816 = vmatpush1.msra.mxu0 %v767
      %817 = vmatprep.subr.mxu0 0.0
      %818 = vmatpush1.msra.mxu0 %v768
      %819 = vmatprep.subr.mxu0 0.0
      %820 = vmatpush1.msra.mxu0 %v769
      %821 = vmatprep.subr.mxu0 0.0
      %822 = vmatpush1.msra.mxu0 %v770
      %823 = vmatprep.subr.mxu0 0.0
      %824 = vmatpush1.msra.mxu0 %v771
      %825 = vmatprep.subr.mxu0 0.0
      %826 = vmatpush1.msra.mxu0 %v772
      %827 = vmatprep.subr.mxu0 0.0
      %828 = vmatpush1.msra.mxu0 %v773
      %829 = vmatprep.subr.mxu0 0.0
      %830 = vmatpush1.msra.mxu0 %v774
      %831 = vmatprep.subr.mxu0 0.0
      %832 = vmatpush1.msra.mxu0 %v775
      %833 = vmatprep.subr.mxu0 0.0
      %834 = vmatpush1.msra.mxu0 %v776
      %835 = vmatprep.subr.mxu0 0.0
      %836 = vmatpush1.msra.mxu0 %v777
      %837 = vmatprep.subr.mxu0 0.0
      %838 = vmatpush1.msra.mxu0 %v778
      %839 = vmatprep.subr.mxu0 0.0
      %840 = vmatpush1.msra.mxu0 0.0
      %841 = vmatprep.subr.mxu0 0.0
      %842 = vmatpush1.msra.mxu0 0.0
      %843 = vmatprep.subr.mxu0 0.0
      %844 = vmatpush1.msra.mxu0 0.0
      %845 = vmatprep.subr.mxu0 0.0
      %846 = vmatpush1.msra.mxu0 0.0
      %847 = vmatprep.subr.mxu0 0.0
      %848 = vmatpush1.msra.mxu0 0.0
      %849 = vmatprep.subr.mxu0 0.0
      %850 = vmatpush1.msra.mxu0 0.0
      %851 = vmatprep.subr.mxu0 0.0
      %852 = vmatpush1.msra.mxu0 0.0
      %853 = vmatprep.subr.mxu0 0.0
      %854 = vmatpush1.msra.mxu0 0.0
      %855 = vmatprep.subr.mxu0 0.0
      %856 = vmatpush1.msra.mxu0 0.0
      %857 = vmatprep.subr.mxu0 0.0
      %858 = vmatpush1.msra.mxu0 0.0
      %859 = vmatprep.subr.mxu0 0.0
      %860 = vmatpush1.msra.mxu0 0.0
      %861 = vmatprep.subr.mxu0 0.0
      %862 = vmatpush1.msra.mxu0 0.0
      %863 = vmatprep.subr.mxu0 0.0
      %864 = vmatpush1.msra.mxu0 0.0
      %865 = vmatprep.subr.mxu0 0.0
      %866 = vmatpush1.msra.mxu0 0.0
      %867 = vmatprep.subr.mxu0 0.0
      %868 = vmatpush1.msra.mxu0 0.0
      %869 = vmatprep.subr.mxu0 0.0
      %870 = vmatpush1.msra.mxu0 0.0
      %871 = vmatprep.mubr.f32.mxu0 0.0
      %872 = vmatmul.mubr.f32.gmra.mrb[0].mxu0 %v803
      %v873 = vpop.f32.mrb[0].mxu0
      %v874 = vadd.f32 0.0, %v873
      %v875 = vpop.f32.mrb[0].mxu0
      %876 = vmatprep.mubr.f32.mxu0 0.0
      %877 = vmatmul.mubr.f32.gmra.mrb[0].mxu0 %v804
      %v878 = vpop.f32.mrb[0].mxu0
      %v879 = vadd.f32 0.0, %v878
      %v880 = vpop.f32.mrb[0].mxu0
      %881 = vdwg.mxu0
      %v882 = vadd.f32 %v754, %v874
      %v883 = vadd.f32 %v755, %v879
      %s884 = scalar_lea.vmem %s1, 640
      %v885 = vld [vmem:[%s884] sm:$0xff]
      %v886 = vld [vmem:[%s884 + $0x8] sm:$0xff]
      %v887 = vld [vmem:[%s884 + $0x10] sm:$0xff]
      %v888 = vld [vmem:[%s884 + $0x18] sm:$0xff]
      %v889 = vld [vmem:[%s884 + $0x20] sm:$0xff]
      %v890 = vld [vmem:[%s884 + $0x28] sm:$0xff]
      %v891 = vld [vmem:[%s884 + $0x30] sm:$0xff]
      %v892 = vld [vmem:[%s884 + $0x38] sm:$0xff]
      %v893 = vld [vmem:[%s884 + $0x40] sm:$0xff]
      %v894 = vld [vmem:[%s884 + $0x48] sm:$0xff]
      %v895 = vld [vmem:[%s884 + $0x50] sm:$0xff]
      %v896 = vld [vmem:[%s884 + $0x58] sm:$0xff]
      %v897 = vld [vmem:[%s884 + $0x60] sm:$0xff]
      %v898 = vld [vmem:[%s884 + $0x68] sm:$0xff]
      %v899 = vld [vmem:[%s884 + $0x70] sm:$0xff]
      %v900 = vld [vmem:[%s884 + $0x78] sm:$0xff]
      %901 = vrot.lane.b32.xlu0 %v787, 112
      %v902 = vpop.permute.xlu0 %901
      %903 = vrot.lane.b32.xlu0 %v790, 112
      %v904 = vpop.permute.xlu0 %903
      %905 = vrot.lane.b32.xlu0 %v792, 112
      %v906 = vpop.permute.xlu0 %905
      %907 = vrot.lane.b32.xlu0 %v794, 112
      %v908 = vpop.permute.xlu0 %907
      %v909 = vsel %vm566, %v902, %v904
      %v910 = vsel %vm566, %v906, %v908
      %913 = vmatprep.subr.mxu0 0.0
      %914 = vmatpush1.msra.mxu0 %v885
      %915 = vmatprep.subr.mxu0 0.0
      %916 = vmatpush1.msra.mxu0 %v886
      %917 = vmatprep.subr.mxu0 0.0
      %918 = vmatpush1.msra.mxu0 %v887
      %919 = vmatprep.subr.mxu0 0.0
      %920 = vmatpush1.msra.mxu0 %v888
      %921 = vmatprep.subr.mxu0 0.0
      %922 = vmatpush1.msra.mxu0 %v889
      %923 = vmatprep.subr.mxu0 0.0
      %924 = vmatpush1.msra.mxu0 %v890
      %925 = vmatprep.subr.mxu0 0.0
      %926 = vmatpush1.msra.mxu0 %v891
      %927 = vmatprep.subr.mxu0 0.0
      %928 = vmatpush1.msra.mxu0 %v892
      %929 = vmatprep.subr.mxu0 0.0
      %930 = vmatpush1.msra.mxu0 %v893
      %931 = vmatprep.subr.mxu0 0.0
      %932 = vmatpush1.msra.mxu0 %v894
      %933 = vmatprep.subr.mxu0 0.0
      %934 = vmatpush1.msra.mxu0 %v895
      %935 = vmatprep.subr.mxu0 0.0
      %936 = vmatpush1.msra.mxu0 %v896
      %937 = vmatprep.subr.mxu0 0.0
      %938 = vmatpush1.msra.mxu0 %v897
      %939 = vmatprep.subr.mxu0 0.0
      %940 = vmatpush1.msra.mxu0 %v898
      %941 = vmatprep.subr.mxu0 0.0
      %942 = vmatpush1.msra.mxu0 %v899
      %943 = vmatprep.subr.mxu0 0.0
      %944 = vmatpush1.msra.mxu0 %v900
      %945 = vmatprep.subr.mxu0 0.0
      %946 = vmatpush1.msra.mxu0 0.0
      %947 = vmatprep.subr.mxu0 0.0
      %948 = vmatpush1.msra.mxu0 0.0
      %949 = vmatprep.subr.mxu0 0.0
      %950 = vmatpush1.msra.mxu0 0.0
      %951 = vmatprep.subr.mxu0 0.0
      %952 = vmatpush1.msra.mxu0 0.0
      %953 = vmatprep.subr.mxu0 0.0
      %954 = vmatpush1.msra.mxu0 0.0
      %955 = vmatprep.subr.mxu0 0.0
      %956 = vmatpush1.msra.mxu0 0.0
      %957 = vmatprep.subr.mxu0 0.0
      %958 = vmatpush1.msra.mxu0 0.0
      %959 = vmatprep.subr.mxu0 0.0
      %960 = vmatpush1.msra.mxu0 0.0
      %961 = vmatprep.subr.mxu0 0.0
      %962 = vmatpush1.msra.mxu0 0.0
      %963 = vmatprep.subr.mxu0 0.0
      %964 = vmatpush1.msra.mxu0 0.0
      %965 = vmatprep.subr.mxu0 0.0
      %966 = vmatpush1.msra.mxu0 0.0
      %967 = vmatprep.subr.mxu0 0.0
      %968 = vmatpush1.msra.mxu0 0.0
      %969 = vmatprep.subr.mxu0 0.0
      %970 = vmatpush1.msra.mxu0 0.0
      %971 = vmatprep.subr.mxu0 0.0
      %972 = vmatpush1.msra.mxu0 0.0
      %973 = vmatprep.subr.mxu0 0.0
      %974 = vmatpush1.msra.mxu0 0.0
      %975 = vmatprep.subr.mxu0 0.0
      %976 = vmatpush1.msra.mxu0 0.0
      %977 = vmatprep.mubr.f32.mxu0 0.0
      %978 = vmatmul.mubr.f32.gmra.mrb[0].mxu0 %v909
      %v979 = vpop.f32.mrb[0].mxu0
      %v980 = vadd.f32 0.0, %v979
      %v981 = vpop.f32.mrb[0].mxu0
      %982 = vmatprep.mubr.f32.mxu0 0.0
      %983 = vmatmul.mubr.f32.gmra.mrb[0].mxu0 %v910
      %v984 = vpop.f32.mrb[0].mxu0
      %v985 = vadd.f32 0.0, %v984
      %v986 = vpop.f32.mrb[0].mxu0
      %987 = vdwg.mxu0
      %v988 = vadd.f32 %v882, %v980
      %v989 = vadd.f32 %v883, %v985
      %v990 = vld [vmem:[#allocation2] sm:$0xfc]
      %v991 = vld [vmem:[#allocation2 + $0x20] sm:$0x3]
      %s992 = scalar_lea.vmem %s1, 768
      %v993 = vld [vmem:[%s992] sm:$0xff]
      %v994 = vld [vmem:[%s992 + $0x8] sm:$0xff]
      %v995 = vld [vmem:[%s992 + $0x10] sm:$0xff]
      %v996 = vld [vmem:[%s992 + $0x18] sm:$0xff]
      %v997 = vld [vmem:[%s992 + $0x20] sm:$0xff]
      %v998 = vld [vmem:[%s992 + $0x28] sm:$0xff]
      %v999 = vld [vmem:[%s992 + $0x30] sm:$0xff]
      %v1000 = vld [vmem:[%s992 + $0x38] sm:$0xff]
      %v1001 = vld [vmem:[%s992 + $0x40] sm:$0xff]
      %v1002 = vld [vmem:[%s992 + $0x48] sm:$0xff]
      %v1003 = vld [vmem:[%s992 + $0x50] sm:$0xff]
      %v1004 = vld [vmem:[%s992 + $0x58] sm:$0xff]
      %v1005 = vld [vmem:[%s992 + $0x60] sm:$0xff]
      %v1006 = vld [vmem:[%s992 + $0x68] sm:$0xff]
      %v1007 = vld [vmem:[%s992 + $0x70] sm:$0xff]
      %v1008 = vld [vmem:[%s992 + $0x78] sm:$0xff]
      %vm1011 = vcmask 1045504
      %v1012 = vrot.slane %v990, 2
      %v1013 = vrot.slane %v649, 2
      %v1014 = vsel %vm1011, %v1012, %v1013
      %v1015 = vrot.slane %v991, 2
      %v1016 = vsel %vm1011, %v1013, %v1015
      %1019 = vmatprep.subr.mxu0 0.0
      %1020 = vmatpush1.msra.mxu0 %v993
      %1021 = vmatprep.subr.mxu0 0.0
      %1022 = vmatpush1.msra.mxu0 %v994
      %1023 = vmatprep.subr.mxu0 0.0
      %1024 = vmatpush1.msra.mxu0 %v995
      %1025 = vmatprep.subr.mxu0 0.0
      %1026 = vmatpush1.msra.mxu0 %v996
      %1027 = vmatprep.subr.mxu0 0.0
      %1028 = vmatpush1.msra.mxu0 %v997
      %1029 = vmatprep.subr.mxu0 0.0
      %1030 = vmatpush1.msra.mxu0 %v998
      %1031 = vmatprep.subr.mxu0 0.0
      %1032 = vmatpush1.msra.mxu0 %v999
      %1033 = vmatprep.subr.mxu0 0.0
      %1034 = vmatpush1.msra.mxu0 %v1000
      %1035 = vmatprep.subr.mxu0 0.0
      %1036 = vmatpush1.msra.mxu0 %v1001
      %1037 = vmatprep.subr.mxu0 0.0
      %1038 = vmatpush1.msra.mxu0 %v1002
      %1039 = vmatprep.subr.mxu0 0.0
      %1040 = vmatpush1.msra.mxu0 %v1003
      %1041 = vmatprep.subr.mxu0 0.0
      %1042 = vmatpush1.msra.mxu0 %v1004
      %1043 = vmatprep.subr.mxu0 0.0
      %1044 = vmatpush1.msra.mxu0 %v1005
      %1045 = vmatprep.subr.mxu0 0.0
      %1046 = vmatpush1.msra.mxu0 %v1006
      %1047 = vmatprep.subr.mxu0 0.0
      %1048 = vmatpush1.msra.mxu0 %v1007
      %1049 = vmatprep.subr.mxu0 0.0
      %1050 = vmatpush1.msra.mxu0 %v1008
      %1051 = vmatprep.subr.mxu0 0.0
      %1052 = vmatpush1.msra.mxu0 0.0
      %1053 = vmatprep.subr.mxu0 0.0
      %1054 = vmatpush1.msra.mxu0 0.0
      %1055 = vmatprep.subr.mxu0 0.0
      %1056 = vmatpush1.msra.mxu0 0.0
      %1057 = vmatprep.subr.mxu0 0.0
      %1058 = vmatpush1.msra.mxu0 0.0
      %1059 = vmatprep.subr.mxu0 0.0
      %1060 = vmatpush1.msra.mxu0 0.0
      %1061 = vmatprep.subr.mxu0 0.0
      %1062 = vmatpush1.msra.mxu0 0.0
      %1063 = vmatprep.subr.mxu0 0.0
      %1064 = vmatpush1.msra.mxu0 0.0
      %1065 = vmatprep.subr.mxu0 0.0
      %1066 = vmatpush1.msra.mxu0 0.0
      %1067 = vmatprep.subr.mxu0 0.0
      %1068 = vmatpush1.msra.mxu0 0.0
      %1069 = vmatprep.subr.mxu0 0.0
      %1070 = vmatpush1.msra.mxu0 0.0
      %1071 = vmatprep.subr.mxu0 0.0
      %1072 = vmatpush1.msra.mxu0 0.0
      %1073 = vmatprep.subr.mxu0 0.0
      %1074 = vmatpush1.msra.mxu0 0.0
      %1075 = vmatprep.subr.mxu0 0.0
      %1076 = vmatpush1.msra.mxu0 0.0
      %1077 = vmatprep.subr.mxu0 0.0
      %1078 = vmatpush1.msra.mxu0 0.0
      %1079 = vmatprep.subr.mxu0 0.0
      %1080 = vmatpush1.msra.mxu0 0.0
      %1081 = vmatprep.subr.mxu0 0.0
      %1082 = vmatpush1.msra.mxu0 0.0
      %1083 = vmatprep.mubr.f32.mxu0 0.0
      %1084 = vmatmul.mubr.f32.gmra.mrb[0].mxu0 %v1014
      %v1085 = vpop.f32.mrb[0].mxu0
      %v1086 = vadd.f32 0.0, %v1085
      %v1087 = vpop.f32.mrb[0].mxu0
      %1088 = vmatprep.mubr.f32.mxu0 0.0
      %1089 = vmatmul.mubr.f32.gmra.mrb[0].mxu0 %v1016
      %v1090 = vpop.f32.mrb[0].mxu0
      %v1091 = vadd.f32 0.0, %v1090
      %v1092 = vpop.f32.mrb[0].mxu0
      %1093 = vdwg.mxu0
      %v1094 = vadd.f32 %v988, %v1086
      %v1095 = vadd.f32 %v989, %v1091
      %v1096 = vld [vmem:[#allocation2] sm:$0xfc]
      %v1097 = vld [vmem:[#allocation2 + $0x8] sm:$0xfc]
      %v1098 = vld [vmem:[#allocation2 + $0x20] sm:$0x3]
      %v1099 = vld [vmem:[#allocation2 + $0x28] sm:$0x3]
      %s1100 = scalar_lea.vmem %s1, 896
      %v1101 = vld [vmem:[%s1100] sm:$0xff]
      %v1102 = vld [vmem:[%s1100 + $0x8] sm:$0xff]
      %v1103 = vld [vmem:[%s1100 + $0x10] sm:$0xff]
      %v1104 = vld [vmem:[%s1100 + $0x18] sm:$0xff]
      %v1105 = vld [vmem:[%s1100 + $0x20] sm:$0xff]
      %v1106 = vld [vmem:[%s1100 + $0x28] sm:$0xff]
      %v1107 = vld [vmem:[%s1100 + $0x30] sm:$0xff]
      %v1108 = vld [vmem:[%s1100 + $0x38] sm:$0xff]
      %v1109 = vld [vmem:[%s1100 + $0x40] sm:$0xff]
      %v1110 = vld [vmem:[%s1100 + $0x48] sm:$0xff]
      %v1111 = vld [vmem:[%s1100 + $0x50] sm:$0xff]
      %v1112 = vld [vmem:[%s1100 + $0x58] sm:$0xff]
      %v1113 = vld [vmem:[%s1100 + $0x60] sm:$0xff]
      %v1114 = vld [vmem:[%s1100 + $0x68] sm:$0xff]
      %v1115 = vld [vmem:[%s1100 + $0x70] sm:$0xff]
      %v1116 = vld [vmem:[%s1100 + $0x78] sm:$0xff]
      %v1121 = vrot.slane %v1096, 2
      %v1122 = vrot.slane %v758, 2
      %v1123 = vsel %vm1011, %v1121, %v1122
      %v1124 = vrot.slane %v1097, 2
      %v1125 = vrot.slane %v759, 2
      %v1126 = vsel %vm1011, %v1124, %v1125
      %v1127 = vrot.slane %v1098, 2
      %v1128 = vsel %vm1011, %v1122, %v1127
      %v1129 = vrot.slane %v1099, 2
      %v1130 = vsel %vm1011, %v1125, %v1129
      %1131 = vrot.lane.b32.xlu0 %v1123, 120
      %v1132 = vpop.permute.xlu0 %1131
      %1133 = vrot.lane.b32.xlu0 %v1126, 120
      %v1134 = vpop.permute.xlu0 %1133
      %1135 = vrot.lane.b32.xlu0 %v1128, 120
      %v1136 = vpop.permute.xlu0 %1135
      %1137 = vrot.lane.b32.xlu0 %v1130, 120
      %v1138 = vpop.permute.xlu0 %1137
      %v1139 = vsel %vm386, %v1132, %v1134
      %v1140 = vsel %vm386, %v1136, %v1138
      %1143 = vmatprep.subr.mxu0 0.0
      %1144 = vmatpush1.msra.mxu0 %v1101
      %1145 = vmatprep.subr.mxu0 0.0
      %1146 = vmatpush1.msra.mxu0 %v1102
      %1147 = vmatprep.subr.mxu0 0.0
      %1148 = vmatpush1.msra.mxu0 %v1103
      %1149 = vmatprep.subr.mxu0 0.0
      %1150 = vmatpush1.msra.mxu0 %v1104
      %1151 = vmatprep.subr.mxu0 0.0
      %1152 = vmatpush1.msra.mxu0 %v1105
      %1153 = vmatprep.subr.mxu0 0.0
      %1154 = vmatpush1.msra.mxu0 %v1106
      %1155 = vmatprep.subr.mxu0 0.0
      %1156 = vmatpush1.msra.mxu0 %v1107
      %1157 = vmatprep.subr.mxu0 0.0
      %1158 = vmatpush1.msra.mxu0 %v1108
      %1159 = vmatprep.subr.mxu0 0.0
      %1160 = vmatpush1.msra.mxu0 %v1109
      %1161 = vmatprep.subr.mxu0 0.0
      %1162 = vmatpush1.msra.mxu0 %v1110
      %1163 = vmatprep.subr.mxu0 0.0
      %1164 = vmatpush1.msra.mxu0 %v1111
      %1165 = vmatprep.subr.mxu0 0.0
      %1166 = vmatpush1.msra.mxu0 %v1112
      %1167 = vmatprep.subr.mxu0 0.0
      %1168 = vmatpush1.msra.mxu0 %v1113
      %1169 = vmatprep.subr.mxu0 0.0
      %1170 = vmatpush1.msra.mxu0 %v1114
      %1171 = vmatprep.subr.mxu0 0.0
      %1172 = vmatpush1.msra.mxu0 %v1115
      %1173 = vmatprep.subr.mxu0 0.0
      %1174 = vmatpush1.msra.mxu0 %v1116
      %1175 = vmatprep.subr.mxu0 0.0
      %1176 = vmatpush1.msra.mxu0 0.0
      %1177 = vmatprep.subr.mxu0 0.0
      %1178 = vmatpush1.msra.mxu0 0.0
      %1179 = vmatprep.subr.mxu0 0.0
      %1180 = vmatpush1.msra.mxu0 0.0
      %1181 = vmatprep.subr.mxu0 0.0
      %1182 = vmatpush1.msra.mxu0 0.0
      %1183 = vmatprep.subr.mxu0 0.0
      %1184 = vmatpush1.msra.mxu0 0.0
      %1185 = vmatprep.subr.mxu0 0.0
      %1186 = vmatpush1.msra.mxu0 0.0
      %1187 = vmatprep.subr.mxu0 0.0
      %1188 = vmatpush1.msra.mxu0 0.0
      %1189 = vmatprep.subr.mxu0 0.0
      %1190 = vmatpush1.msra.mxu0 0.0
      %1191 = vmatprep.subr.mxu0 0.0
      %1192 = vmatpush1.msra.mxu0 0.0
      %1193 = vmatprep.subr.mxu0 0.0
      %1194 = vmatpush1.msra.mxu0 0.0
      %1195 = vmatprep.subr.mxu0 0.0
      %1196 = vmatpush1.msra.mxu0 0.0
      %1197 = vmatprep.subr.mxu0 0.0
      %1198 = vmatpush1.msra.mxu0 0.0
      %1199 = vmatprep.subr.mxu0 0.0
      %1200 = vmatpush1.msra.mxu0 0.0
      %1201 = vmatprep.subr.mxu0 0.0
      %1202 = vmatpush1.msra.mxu0 0.0
      %1203 = vmatprep.subr.mxu0 0.0
      %1204 = vmatpush1.msra.mxu0 0.0
      %1205 = vmatprep.subr.mxu0 0.0
      %1206 = vmatpush1.msra.mxu0 0.0
      %1207 = vmatprep.mubr.f32.mxu0 0.0
      %1208 = vmatmul.mubr.f32.gmra.mrb[0].mxu0 %v1139
      %v1209 = vpop.f32.mrb[0].mxu0
      %v1210 = vadd.f32 0.0, %v1209
      %v1211 = vpop.f32.mrb[0].mxu0
      %1212 = vmatprep.mubr.f32.mxu0 0.0
      %1213 = vmatmul.mubr.f32.gmra.mrb[0].mxu0 %v1140
      %v1214 = vpop.f32.mrb[0].mxu0
      %v1215 = vadd.f32 0.0, %v1214
      %v1216 = vpop.f32.mrb[0].mxu0
      %1217 = vdwg.mxu0
      %v1218 = vadd.f32 %v1094, %v1210
      %v1219 = vadd.f32 %v1095, %v1215
      %s1220 = scalar_lea.vmem %s1, 1024
      %v1221 = vld [vmem:[%s1220] sm:$0xff]
      %v1222 = vld [vmem:[%s1220 + $0x8] sm:$0xff]
      %v1223 = vld [vmem:[%s1220 + $0x10] sm:$0xff]
      %v1224 = vld [vmem:[%s1220 + $0x18] sm:$0xff]
      %v1225 = vld [vmem:[%s1220 + $0x20] sm:$0xff]
      %v1226 = vld [vmem:[%s1220 + $0x28] sm:$0xff]
      %v1227 = vld [vmem:[%s1220 + $0x30] sm:$0xff]
      %v1228 = vld [vmem:[%s1220 + $0x38] sm:$0xff]
      %v1229 = vld [vmem:[%s1220 + $0x40] sm:$0xff]
      %v1230 = vld [vmem:[%s1220 + $0x48] sm:$0xff]
      %v1231 = vld [vmem:[%s1220 + $0x50] sm:$0xff]
      %v1232 = vld [vmem:[%s1220 + $0x58] sm:$0xff]
      %v1233 = vld [vmem:[%s1220 + $0x60] sm:$0xff]
      %v1234 = vld [vmem:[%s1220 + $0x68] sm:$0xff]
      %v1235 = vld [vmem:[%s1220 + $0x70] sm:$0xff]
      %v1236 = vld [vmem:[%s1220 + $0x78] sm:$0xff]
      %1237 = vrot.lane.b32.xlu0 %v1123, 112
      %v1238 = vpop.permute.xlu0 %1237
      %1239 = vrot.lane.b32.xlu0 %v1126, 112
      %v1240 = vpop.permute.xlu0 %1239
      %1241 = vrot.lane.b32.xlu0 %v1128, 112
      %v1242 = vpop.permute.xlu0 %1241
      %1243 = vrot.lane.b32.xlu0 %v1130, 112
      %v1244 = vpop.permute.xlu0 %1243
      %v1245 = vsel %vm566, %v1238, %v1240
      %v1246 = vsel %vm566, %v1242, %v1244
      %1249 = vmatprep.subr.mxu0 0.0
      %1250 = vmatpush1.msra.mxu0 %v1221
      %1251 = vmatprep.subr.mxu0 0.0
      %1252 = vmatpush1.msra.mxu0 %v1222
      %1253 = vmatprep.subr.mxu0 0.0
      %1254 = vmatpush1.msra.mxu0 %v1223
      %1255 = vmatprep.subr.mxu0 0.0
      %1256 = vmatpush1.msra.mxu0 %v1224
      %1257 = vmatprep.subr.mxu0 0.0
      %1258 = vmatpush1.msra.mxu0 %v1225
      %1259 = vmatprep.subr.mxu0 0.0
      %1260 = vmatpush1.msra.mxu0 %v1226
      %1261 = vmatprep.subr.mxu0 0.0
      %1262 = vmatpush1.msra.mxu0 %v1227
      %1263 = vmatprep.subr.mxu0 0.0
      %1264 = vmatpush1.msra.mxu0 %v1228
      %1265 = vmatprep.subr.mxu0 0.0
      %1266 = vmatpush1.msra.mxu0 %v1229
      %1267 = vmatprep.subr.mxu0 0.0
      %1268 = vmatpush1.msra.mxu0 %v1230
      %1269 = vmatprep.subr.mxu0 0.0
      %1270 = vmatpush1.msra.mxu0 %v1231
      %1271 = vmatprep.subr.mxu0 0.0
      %1272 = vmatpush1.msra.mxu0 %v1232
      %1273 = vmatprep.subr.mxu0 0.0
      %1274 = vmatpush1.msra.mxu0 %v1233
      %1275 = vmatprep.subr.mxu0 0.0
      %1276 = vmatpush1.msra.mxu0 %v1234
      %1277 = vmatprep.subr.mxu0 0.0
      %1278 = vmatpush1.msra.mxu0 %v1235
      %1279 = vmatprep.subr.mxu0 0.0
      %1280 = vmatpush1.msra.mxu0 %v1236
      %1281 = vmatprep.subr.mxu0 0.0
      %1282 = vmatpush1.msra.mxu0 0.0
      %1283 = vmatprep.subr.mxu0 0.0
      %1284 = vmatpush1.msra.mxu0 0.0
      %1285 = vmatprep.subr.mxu0 0.0
      %1286 = vmatpush1.msra.mxu0 0.0
      %1287 = vmatprep.subr.mxu0 0.0
      %1288 = vmatpush1.msra.mxu0 0.0
      %1289 = vmatprep.subr.mxu0 0.0
      %1290 = vmatpush1.msra.mxu0 0.0
      %1291 = vmatprep.subr.mxu0 0.0
      %1292 = vmatpush1.msra.mxu0 0.0
      %1293 = vmatprep.subr.mxu0 0.0
      %1294 = vmatpush1.msra.mxu0 0.0
      %1295 = vmatprep.subr.mxu0 0.0
      %1296 = vmatpush1.msra.mxu0 0.0
      %1297 = vmatprep.subr.mxu0 0.0
      %1298 = vmatpush1.msra.mxu0 0.0
      %1299 = vmatprep.subr.mxu0 0.0
      %1300 = vmatpush1.msra.mxu0 0.0
      %1301 = vmatprep.subr.mxu0 0.0
      %1302 = vmatpush1.msra.mxu0 0.0
      %1303 = vmatprep.subr.mxu0 0.0
      %1304 = vmatpush1.msra.mxu0 0.0
      %1305 = vmatprep.subr.mxu0 0.0
      %1306 = vmatpush1.msra.mxu0 0.0
      %1307 = vmatprep.subr.mxu0 0.0
      %1308 = vmatpush1.msra.mxu0 0.0
      %1309 = vmatprep.subr.mxu0 0.0
      %1310 = vmatpush1.msra.mxu0 0.0
      %1311 = vmatprep.subr.mxu0 0.0
      %1312 = vmatpush1.msra.mxu0 0.0
      %1313 = vmatprep.mubr.f32.mxu0 0.0
      %1314 = vmatmul.mubr.f32.gmra.mrb[0].mxu0 %v1245
      %v1315 = vpop.f32.mrb[0].mxu0
      %v1316 = vadd.f32 0.0, %v1315
      %v1317 = vpop.f32.mrb[0].mxu0
      %1318 = vmatprep.mubr.f32.mxu0 0.0
      %1319 = vmatmul.mubr.f32.gmra.mrb[0].mxu0 %v1246
      %v1320 = vpop.f32.mrb[0].mxu0
      %v1321 = vadd.f32 0.0, %v1320
      %v1322 = vpop.f32.mrb[0].mxu0
      %1323 = vdwg.mxu0
      %v1324 = vadd.f32 %v1218, %v1316
      %v1325 = vadd.f32 %v1219, %v1321
      %v1326 = vld [vmem:[%s2] sm:$0x1]
      %v1328 = vlaneseq
      %v1329 = vshrl.u32 %v1328, 7
      %v1330 = vsub.s32 0, %v1329
      %v1331 = vrot.slane %v1326, %v1330
      %v1333 = vadd.f32 %v1324, %v1331
      %v1334 = vadd.f32 %v1325, %v1331
      %1335 = vst [vmem:[%s258] sm:$0xff] %v1333
      %1336 = vst [vmem:[%s258 + $0x8] sm:$0xff] %v1334
      %v1337 = vadd.f32 %v1333, %v1334
      %v1338 = vrot.slane %v1337, 4
      %v1339 = vadd.f32 %v1337, %v1338
      %v1340 = vrot.slane %v1339, 2
      %v1341 = vadd.f32 %v1339, %v1340
      %v1342 = vrot.slane %v1341, 1
      %v1343 = vadd.f32 %v1341, %v1342
      %v1344 = vmul.f32 %v1333, %v1333
      %v1345 = vmul.f32 %v1334, %v1334
      %v1346 = vadd.f32 %v1344, %v1345
      %v1347 = vrot.slane %v1346, 4
      %v1348 = vadd.f32 %v1346, %v1347
      %v1349 = vrot.slane %v1348, 2
      %v1350 = vadd.f32 %v1348, %v1349
      %v1351 = vrot.slane %v1350, 1
      %v1352 = vadd.f32 %v1350, %v1351
      %v1353 = vsel %vm315, %v1343, %v1352
      %1354 = vst [vmem:[%s262] sm:$0x3] %v1353
      %p1355 = scmp.lt.s32.totalorder %s18, 1
      %s1356 = scalar_select %p1355, %s18, 1
      %s1357 = smul.addr %s1356, 2
      %s1358 = smul.addr %s1357, 8
      %s1359 = scalar_lea.vmem %s5, %s1358
      %p1360 = scmp.lt.s32.totalorder %s18, 1
      %s1361 = scalar_select %p1360, %s18, 1
      %s1362 = smul.addr %s1361, 2
      %s1363 = scalar_lea.vmem %s6, %s1362
      // Predicated region
      $region41: #{conv_block_forward.4} parent=39 // pred_check
        %p1364 = pneg %p146
      $region42: #{conv_block_forward.4} parent=39 // pred_check_branch
        %1366 = sbr.rel (%p1364) target = $region44
      $region43: #{conv_block_forward.4} parent=39 // pred_region
        _
      $region44: #{conv_block_forward.4} parent=39 // pred_fallthru
        _
      // Predicated region
      $region45: #{conv_block_forward.4} parent=39 // pred_check
        %p1367 = pneg %p172
      $region46: #{conv_block_forward.4} parent=39 // pred_check_branch
        %1369 = sbr.rel (%p1367) target = $region48
      $region47: #{conv_block_forward.4} parent=39 // pred_region
        _
      $region48: #{conv_block_forward.4} parent=39 // pred_fallthru
        _
    $region40: #{conv_block_forward.4} parent=5 // pred_fallthru
      _
    %p1370 = scmp.le.s32.totalorder 2, %s13
    // Predicated region
    $region49: #{conv_block_forward.4} parent=5 // pred_check
      %p1371 = pneg %p1370
    $region50: #{conv_block_forward.4} parent=5 // pred_check_branch
      %1373 = sbr.rel (%p1371) target = $region52
    $region51: #{conv_block_forward.4} parent=5 // pred_region
      %s1374 = ssub.s32 %s13, 2
      // Predicated region
      $region53: #{conv_block_forward.4} parent=51 // pred_check
        %p1375 = pneg %p152
      $region54: #{conv_block_forward.4} parent=51 // pred_check_branch
        %1377 = sbr.rel (%p1375) target = $region56
      $region55: #{conv_block_forward.4} parent=51 // pred_region
        %p1378 = scmp.lt.s32.totalorder %s19, 1
        %s1379 = scalar_select %p1378, %s19, 1
        %s1380 = smul.addr %s1379, 2
        %s1381 = smul.addr %s1380, 8
        %s1382 = scalar_lea.vmem %s5, %s1381
      $region56: #{conv_block_forward.4} parent=51 // pred_fallthru
        _
      // Predicated region
      $region57: #{conv_block_forward.4} parent=51 // pred_check
        %p1383 = pneg %p178
      $region58: #{conv_block_forward.4} parent=51 // pred_check_branch
        %1385 = sbr.rel (%p1383) target = $region60
      $region59: #{conv_block_forward.4} parent=51 // pred_region
        %p1386 = scmp.lt.s32.totalorder %s19, 1
        %s1387 = scalar_select %p1386, %s19, 1
        %s1388 = smul.addr %s1387, 2
        %s1389 = scalar_lea.vmem %s6, %s1388
      $region60: #{conv_block_forward.4} parent=51 // pred_fallthru
        _
    $region52: #{conv_block_forward.4} parent=5 // pred_fallthru
      _
  $region6: #{conv_block_forward.4} parent=0 // loop_footer
    %s17 = sadd.s32 1, %s13
  $region7: #{conv_block_forward.4} parent=0 // loop_footer_branch
    %12 = sbr.rel target = $region3
  $region8: #{conv_block_forward.4} parent=0 // loop_exit
    _

// kernel: conv_block_forward.5
$region0: #{conv_block_forward.5}
  #allocation0 [shape = 'u32[]', space=smem, size = 0x4, offset = 0x4, fixed_abs, tag = 'smem constant byte address 0x4 - core index']
  #allocation1 [shape = 'u32[144,128]{1,0:T(1,128)}', space=vmem, size = 0x12000, scoped, tag = 'internal scratch']
  %s0 = inlined_call_operand.vmem [shape: f32[2,16,128], index: 0, kind: input, shape index: {}]
  %s1 = inlined_call_operand.vmem [shape: f32[1,128], index: 1, kind: input, shape index: {}]
  %s2 = inlined_call_operand.vmem [shape: f32[1,128], index: 2, kind: input, shape index: {}]
  %s3 = inlined_call_operand.vmem [shape: f32[2,16,128], index: 3, kind: output, shape index: {}]
  %s4 = sld [smem:[#allocation0]]
  $region45: #{conv_block_forward.5} parent=0
    _
  %s6 = ssub.s32 1, %s4
  %s7 = scalar_select 0, %s6, %s4
  loop: start=0, step=1, limit=4
  $region2: #{conv_block_forward.5} parent=0 // loop_pre_header
    _
  $region3: #{conv_block_forward.5} parent=0 // loop_header
    %s9 = sphi 0, %s13
    %p10 = scmp.ge.s32.totalorder %s9, 4
    %s19 = sphi 0, %s21
    %s22 = sphi 0, %s19
    %s23 = sphi 0, %s22
    %s39 = sphi 0, %s23
    %s43 = sphi 0, %s43
    %s45 = sphi 0, %s43
    %s46 = sphi 0, %s45
    %s60 = sphi 0, %s46
    %s64 = sphi 0, %s64
    %s66 = sphi 0, %s64
    %s67 = sphi 0, %s66
    %s81 = sphi 0, %s67
    %s87 = sphi 0, %s89
    %s90 = sphi 0, %s87
    %s91 = sphi 0, %s90
    %s107 = sphi 0, %s91
  $region4: #{conv_block_forward.5} parent=0 // loop_header_branch
    %12 = sbr.rel (%p10) target = $region8
  $region5: #{conv_block_forward.5} parent=0 // loop_body
    %s14 = ssub.s32 %s9, 1
    %s15 = ssub.s32 %s9, 2
    %s16 = sadd.s32 %s9, 1
    %s17 = ssub.s32 %s9, %s16
    %p18 = scmp.eq.s32.totalorder %s17, 0
    %s20 = sadd.s32 %s19, 1
    %s21 = scalar_select %p18, %s19, %s20
    %p24 = pneg %p18
    %p25 = scmp.eq.s32.totalorder %s9, 1
    %p26 = por %p24, %p25
    %p27 = scmp.ne.s32.totalorder %s19, %s22
    %p28 = scmp.eq.s32.totalorder %s9, 0
    %p29 = por %p27, %p28
    %p30 = scmp.ne.s32.totalorder %s19, %s22
    %p31 = scmp.eq.s32.totalorder %s14, 1
    %p32 = por %p30, %p31
    %p33 = scmp.ne.s32.totalorder %s22, %s23
    %p34 = scmp.eq.s32.totalorder %s14, 0
    %p35 = por %p33, %p34
    %p36 = scmp.ne.s32.totalorder %s22, %s23
    %p37 = scmp.eq.s32.totalorder %s15, 1
    %p38 = por %p36, %p37
    %p40 = scmp.ne.s32.totalorder %s23, %s39
    %p41 = scmp.eq.s32.totalorder %s15, 0
    %p42 = por %p40, %p41
    %s44 = sadd.s32 %s43, 1
    %p47 = scmp.eq.s32.totalorder %s9, 1
    %p48 = scmp.ne.s32.totalorder %s43, %s45
    %p49 = scmp.eq.s32.totalorder %s9, 0
    %p50 = por %p48, %p49
    %p51 = scmp.ne.s32.totalorder %s43, %s45
    %p52 = scmp.eq.s32.totalorder %s14, 1
    %p53 = por %p51, %p52
    %p54 = scmp.ne.s32.totalorder %s45, %s46
    %p55 = scmp.eq.s32.totalorder %s14, 0
    %p56 = por %p54, %p55
    %p57 = scmp.ne.s32.totalorder %s45, %s46
    %p58 = scmp.eq.s32.totalorder %s15, 1
    %p59 = por %p57, %p58
    %p61 = scmp.ne.s32.totalorder %s46, %s60
    %p62 = scmp.eq.s32.totalorder %s15, 0
    %p63 = por %p61, %p62
    %s65 = sadd.s32 %s64, 1
    %p68 = scmp.eq.s32.totalorder %s9, 1
    %p69 = scmp.ne.s32.totalorder %s64, %s66
    %p70 = scmp.eq.s32.totalorder %s9, 0
    %p71 = por %p69, %p70
    %p72 = scmp.ne.s32.totalorder %s64, %s66
    %p73 = scmp.eq.s32.totalorder %s14, 1
    %p74 = por %p72, %p73
    %p75 = scmp.ne.s32.totalorder %s66, %s67
    %p76 = scmp.eq.s32.totalorder %s14, 0
    %p77 = por %p75, %p76
    %p78 = scmp.ne.s32.totalorder %s66, %s67
    %p79 = scmp.eq.s32.totalorder %s15, 1
    %p80 = por %p78, %p79
    %p82 = scmp.ne.s32.totalorder %s67, %s81
    %p83 = scmp.eq.s32.totalorder %s15, 0
    %p84 = por %p82, %p83
    %s85 = ssub.s32 %s9, %s16
    %p86 = scmp.eq.s32.totalorder %s85, 0
    %s88 = sadd.s32 %s87, 1
    %s89 = scalar_select %p86, %s87, %s88
    %p92 = pneg %p86
    %p93 = scmp.eq.s32.totalorder %s9, 1
    %p94 = por %p92, %p93
    %p95 = scmp.ne.s32.totalorder %s87, %s90
    %p96 = scmp.eq.s32.totalorder %s9, 0
    %p97 = por %p95, %p96
    %p98 = scmp.ne.s32.totalorder %s87, %s90
    %p99 = scmp.eq.s32.totalorder %s14, 1
    %p100 = por %p98, %p99
    %p101 = scmp.ne.s32.totalorder %s90, %s91
    %p102 = scmp.eq.s32.totalorder %s14, 0
    %p103 = por %p101, %p102
    %p104 = scmp.ne.s32.totalorder %s90, %s91
    %p105 = scmp.eq.s32.totalorder %s15, 1
    %p106 = por %p104, %p105
    %p108 = scmp.ne.s32.totalorder %s91, %s107
    %p109 = scmp.eq.s32.totalorder %s15, 0
    %p110 = por %p108, %p109
    %p111 = scmp.le.s32.totalorder 1, %s9
    %p112 = scmp.lt.s32.totalorder %s9, 3
    %p113 = pnand %p111, %p112
    %p114 = pneg %p113
    // Predicated region
    $region9: #{conv_block_forward.5} parent=5 // pred_check
      _
    $region10: #{conv_block_forward.5} parent=5 // pred_check_branch
      %116 = sbr.rel (%p113) target = $region12
    $region11: #{conv_block_forward.5} parent=5 // pred_region
      %s117 = ssub.s32 %s9, 1
      // Predicated region
      $region13: #{conv_block_forward.5} parent=11 // pred_check
        %p118 = pneg %p56
      $region14: #{conv_block_forward.5} parent=11 // pred_check_branch
        %120 = sbr.rel (%p118) target = $region16
      $region15: #{conv_block_forward.5} parent=11 // pred_region
        _
      $region16: #{conv_block_forward.5} parent=11 // pred_fallthru
        _
      // Predicated region
      $region17: #{conv_block_forward.5} parent=11 // pred_check
        %p121 = pneg %p77
      $region18: #{conv_block_forward.5} parent=11 // pred_check_branch
        %123 = sbr.rel (%p121) target = $region20
      $region19: #{conv_block_forward.5} parent=11 // pred_region
        _
      $region20: #{conv_block_forward.5} parent=11 // pred_fallthru
        _
    $region12: #{conv_block_forward.5} parent=5 // pred_fallthru
      _
    %p124 = scmp.lt.s32.totalorder %s9, 2
    // Predicated region
    $region21: #{conv_block_forward.5} parent=5 // pred_check
      %p125 = pneg %p124
    $region22: #{conv_block_forward.5} parent=5 // pred_check_branch
      %127 = sbr.rel (%p125) target = $region24
    $region23: #{conv_block_forward.5} parent=5 // pred_region
      // Predicated region
      $region25: #{conv_block_forward.5} parent=23 // pred_check
        %p128 = pneg %p29
      $region26: #{conv_block_forward.5} parent=23 // pred_check_branch
        %130 = sbr.rel (%p128) target = $region28
      $region27: #{conv_block_forward.5} parent=23 // pred_region
        %p131 = scmp.lt.s32.totalorder %s9, 1
        %s132 = scalar_select %p131, %s9, 1
        %s133 = smul.addr %s132, 2
        %s134 = smul.addr %s133, 8
        %s135 = scalar_lea.vmem %s0, %s134
      $region28: #{conv_block_forward.5} parent=23 // pred_fallthru
        _
    $region24: #{conv_block_forward.5} parent=5 // pred_fallthru
      _
    %p136 = scmp.le.s32.totalorder 1, %s9
    %p137 = scmp.lt.s32.totalorder %s9, 3
    %p138 = pnand %p136, %p137
    %p139 = pneg %p138
    // Predicated region
    $region29: #{conv_block_forward.5} parent=5 // pred_check
      _
    $region30: #{conv_block_forward.5} parent=5 // pred_check_branch
      %141 = sbr.rel (%p138) target = $region32
    $region31: #{conv_block_forward.5} parent=5 // pred_region
      %s142 = ssub.s32 %s9, 1
      %p143 = scmp.lt.s32.totalorder %s14, 1
      %s144 = scalar_select %p143, %s14, 1
      %s145 = smul.addr %s144, 2
      %s146 = smul.addr %s145, 8
      %s147 = scalar_lea.vmem %s0, %s146
      %p148 = pneg %p35
      %p149 = pneg %p32
      %p150 = pneg %p56
      %p151 = pneg %p53
      %p152 = pneg %p77
      %p153 = pneg %p74
      %p154 = pneg %p103
      %p155 = pneg %p100
      %p156 = scmp.lt.s32.totalorder %s14, 1
      %s157 = scalar_select %p156, %s14, 1
      %s158 = smul.addr %s157, 2
      %s159 = smul.addr %s158, 8
      %s160 = scalar_lea.vmem %s3, %s159
      %p161 = scmp.lt.s32.totalorder %s14, 1
      %s162 = scalar_select %p161, %s14, 1
      %s163 = smul.addr %s162, 2
      %s164 = smul.addr %s163, 8
      %s165 = scalar_lea.vmem %s0, %s164
      %p166 = scmp.lt.s32.totalorder %s14, 1
      %s167 = scalar_select %p166, %s14, 1
      %s168 = smul.addr %s167, 2
      %s169 = smul.addr %s168, 8
      %s170 = scalar_lea.vmem %s3, %s169
      %v171 = vld [vmem:[%s165] sm:$0xff]
      %v172 = vld [vmem:[%s165 + $0x8] sm:$0xff]
      %v173 = vld [vmem:[%s1] sm:$0x1]
      %v175 = vlaneseq
      %v176 = vshrl.u32 %v175, 7
      %v177 = vsub.s32 0, %v176
      %v178 = vrot.slane %v173, %v177
      %v180 = vmul.f32 %v171, %v178
      %v181 = vmul.f32 %v172, %v178
      %v182 = vld [vmem:[%s2] sm:$0x1]
      %v184 = vlaneseq
      %v185 = vshrl.u32 %v184, 7
      %v186 = vsub.s32 0, %v185
      %v187 = vrot.slane %v182, %v186
      %v189 = vadd.f32 %v180, %v187
      %v190 = vadd.f32 %v181, %v187
      %vm191 = vcmp.ge.f32.partialorder %v189, 0.0
      %vm192 = vcmp.ge.f32.partialorder %v190, 0.0
      %v193 = vmul.f32 %v189, 0.01
      %v194 = vmul.f32 %v190, 0.01
      %v195 = vsel %vm191, %v189, %v193
      %v196 = vsel %vm192, %v190, %v194
      %197 = vst [vmem:[%s170] sm:$0xff] %v195
      %198 = vst [vmem:[%s170 + $0x8] sm:$0xff] %v196
      %p199 = scmp.lt.s32.totalorder %s14, 1
      %s200 = scalar_select %p199, %s14, 1
      %s201 = smul.addr %s200, 2
      %s202 = smul.addr %s201, 8
      %s203 = scalar_lea.vmem %s3, %s202
      // Predicated region
      $region33: #{conv_block_forward.5} parent=31 // pred_check
        %p204 = pneg %p100
      $region34: #{conv_block_forward.5} parent=31 // pred_check_branch
        %206 = sbr.rel (%p204) target = $region36
      $region35: #{conv_block_forward.5} parent=31 // pred_region
        _
      $region36: #{conv_block_forward.5} parent=31 // pred_fallthru
        _
    $region32: #{conv_block_forward.5} parent=5 // pred_fallthru
      _
    %p207 = scmp.le.s32.totalorder 2, %s9
    // Predicated region
    $region37: #{conv_block_forward.5} parent=5 // pred_check
      %p208 = pneg %p207
    $region38: #{conv_block_forward.5} parent=5 // pred_check_branch
      %210 = sbr.rel (%p208) target = $region40
    $region39: #{conv_block_forward.5} parent=5 // pred_region
      %s211 = ssub.s32 %s9, 2
      // Predicated region
      $region41: #{conv_block_forward.5} parent=39 // pred_check
        %p212 = pneg %p106
      $region42: #{conv_block_forward.5} parent=39 // pred_check_branch
        %214 = sbr.rel (%p212) target = $region44
      $region43: #{conv_block_forward.5} parent=39 // pred_region
        %p215 = scmp.lt.s32.totalorder %s15, 1
        %s216 = scalar_select %p215, %s15, 1
        %s217 = smul.addr %s216, 2
        %s218 = smul.addr %s217, 8
        %s219 = scalar_lea.vmem %s3, %s218
      $region44: #{conv_block_forward.5} parent=39 // pred_fallthru
        _
    $region40: #{conv_block_forward.5} parent=5 // pred_fallthru
      _
  $region6: #{conv_block_forward.5} parent=0 // loop_footer
    %s13 = sadd.s32 1, %s9
  $region7: #{conv_block_forward.5} parent=0 // loop_footer_branch
    %8 = sbr.rel target = $region3
  $region8: #{conv_block_forward.5} parent=0 // loop_exit
    _

</llo_original>
